<compile_context>
chip_gen: v7x
topology: tpu7x:2x2x1
jax: 0.10.0
libtpu: 0.0.40
codegen_flags: <defaults>
</compile_context>

<pallas_src>
import functools

import jax
import jax.numpy as jnp
from jax.experimental import pallas as pl
from jax.experimental.pallas import tpu as pltpu

LANE = 128


# --------------------------- fused forward kernel ---------------------------

def _make_fused_kernel(*, layout, n_enc, n_dec, B, S, E, H, eps=1e-5):
    Dh = E // H
    scale = float(Dh) ** -0.5

    def kernel(x_ref, w_ref, out_ref):

        def P(name):
            off, nrows, ncols = layout[name]
            return w_ref[off:off + nrows, :ncols]

        def layer_norm(y, name):
            g = P(name + "_g")
            b = P(name + "_b")
            mean = jnp.mean(y, axis=-1, keepdims=True)
            c = y - mean
            var = jnp.mean(c * c, axis=-1, keepdims=True)
            return c * jax.lax.rsqrt(var + eps) * g + b

        seg = P("seg")      # (E, H) one-hot head selector
        segT = P("segT")    # (H, E)

        def mha(q_src, kv_src, pfx):
            """nn.MultiheadAttention over the length-B axis, per (s, head)."""
            q2 = jnp.dot(q_src, P(pfx + "wq"),
                         preferred_element_type=jnp.float32) + P(pfx + "bq")
            k2 = jnp.dot(kv_src, P(pfx + "wk"),
                         preferred_element_type=jnp.float32) + P(pfx + "bk")
            v2 = jnp.dot(kv_src, P(pfx + "wv"),
                         preferred_element_type=jnp.float32) + P(pfx + "bv")
            q2 = q2 * scale                      # fold 1/sqrt(Dh) in once

            qb = [q2[l * S:(l + 1) * S, :] for l in range(B)]
            kb = [k2[l * S:(l + 1) * S, :] for l in range(B)]
            vb = [v2[l * S:(l + 1) * S, :] for l in range(B)]

            # All (lq, lk) score blocks with ONE segment-sum matmul (lanes stay = E).
            qk = jnp.concatenate([qb[lq] * kb[lk]
                                  for lq in range(B) for lk in range(B)], axis=0)
            scores = jnp.dot(qk, seg, preferred_element_type=jnp.float32)  # (B*B*S, H)

            # Softmax over lk, per (s, head).
            prob_blocks = []
            for lq in range(B):
                sc = [scores[(lq * B + lk) * S:(lq * B + lk + 1) * S, :]
                      for lk in range(B)]
                m = sc[0]
                for s_ in sc[1:]:
                    m = jnp.maximum(m, s_)
                ex = [jnp.exp(s_ - m) for s_ in sc]
                den = ex[0]
                for e_ in ex[1:]:
                    den = den + e_
                inv = pl.reciprocal(den, approx=True)
                prob_blocks += [e_ * inv for e_ in ex]

            # Broadcast probs back to E lanes with ONE matmul, then weight V.
            probs = jnp.concatenate(prob_blocks, axis=0)                   # (B*B*S, H)
            p_lanes = jnp.dot(probs, segT,
                              preferred_element_type=jnp.float32)          # (B*B*S, E)

            out_blocks = []
            for lq in range(B):
                acc = p_lanes[(lq * B) * S:(lq * B + 1) * S, :] * vb[0]
                for lk in range(1, B):
                    acc = acc + p_lanes[(lq * B + lk) * S:
                                        (lq * B + lk + 1) * S, :] * vb[lk]
                out_blocks.append(acc)
            attn = jnp.concatenate(out_blocks, axis=0)                     # (B*S, E)
            return jnp.dot(attn, P(pfx + "wo"),
                           preferred_element_type=jnp.float32) + P(pfx + "bo")

        def ffn(h, pfx):
            f = jnp.dot(h, P(pfx + "w1"),
                        preferred_element_type=jnp.float32) + P(pfx + "b1")
            f = jnp.maximum(f, 0.0)
            return jnp.dot(f, P(pfx + "w2"),
                           preferred_element_type=jnp.float32) + P(pfx + "b2")

        # x = x + positional_encoding (broadcast over the B axis), all in registers.
        x = x_ref[...]                                    # (B*S, E), rows (b, s)
        pe = P("pos_enc")                                 # (S, E)
        x2 = x + jnp.concatenate([pe] * B, axis=0)

        # ------------------------------ encoder ------------------------------
        mem = x2
        for i in range(n_enc):
            pfx = f"enc{i}/"
            sa = mha(mem, mem, pfx + "sa_")
            h = layer_norm(mem + sa, pfx + "ln1")
            mem = layer_norm(h + ffn(h, pfx), pfx + "ln2")
        mem = layer_norm(mem, "enc_norm")                 # final encoder norm

        # ------------------------------ decoder ------------------------------
        outp = x2                                         # tgt = src = x
        for i in range(n_dec):
            pfx = f"dec{i}/"
            sa = mha(outp, outp, pfx + "sa_")
            h = layer_norm(outp + sa, pfx + "ln1")
            ca = mha(h, mem, pfx + "ca_")
            h2 = layer_norm(h + ca, pfx + "ln2")
            outp = layer_norm(h2 + ffn(h2, pfx), pfx + "ln3")
        outp = layer_norm(outp, "dec_norm")               # final decoder norm

        # --------------------------- fc + sigmoid ----------------------------
        # Gather the B rows of out[:, -1, :], run fc + sigmoid only on those,
        # write the output with one store.
        last = jnp.concatenate(
            [outp[b * S + S - 1: b * S + S, :] for b in range(B)], axis=0)  # (B, E)
        y = jnp.dot(last, P("fc_w"),
                    preferred_element_type=jnp.float32) + P("fc_b")
        out_ref[...] = 1.0 / (1.0 + jnp.exp(-y))          # exact sigmoid

    return kernel


def transformer_model_forward(x, w_slab, *, layout, num_heads, num_bins,
                              n_enc, n_dec):
    """x: (B, S, E), w_slab: packed (rows, 128) weights -> (B, num_bins)."""
    B, S, E = x.shape
    kernel = _make_fused_kernel(layout=layout, n_enc=n_enc, n_dec=n_dec,
                                B=B, S=S, E=E, H=num_heads)
    vmem = pltpu.MemorySpace.VMEM
    return pl.pallas_call(
        kernel,
        out_shape=jax.ShapeDtypeStruct((B, num_bins), jnp.float32),
        in_specs=[pl.BlockSpec(memory_space=vmem),
                  pl.BlockSpec(memory_space=vmem)],
        out_specs=pl.BlockSpec(memory_space=vmem),
    )(x.reshape(B * S, E), w_slab)


# --------------------------- host-side weight packing ---------------------------

def pack_params(params, S, E, num_heads):
    """Pack every parameter into one lane-dense (rows, 128) f32 slab.

    Each block starts at an 8-aligned row offset and at lane 0.  Returns
    (slab, layout) with layout[name] = (row_offset, nrows, ncols).
    """
    entries = []  # (name, 2d array)

    def add(name, arr):
        arr = jnp.asarray(arr, jnp.float32)
        if arr.ndim == 1:
            arr = arr[None, :]
        assert arr.ndim == 2 and arr.shape[1] <= LANE, (name, arr.shape)
        entries.append((name, arr))

    def add_attn(pfx, p, keypfx=""):
        wqkv, bqkv = p[keypfx + "wqkv"], p[keypfx + "bqkv"]
        add(pfx + "wq", wqkv[:, 0:E]);        add(pfx + "bq", bqkv[:, 0:E])
        add(pfx + "wk", wqkv[:, E:2 * E]);    add(pfx + "bk", bqkv[:, E:2 * E])
        add(pfx + "wv", wqkv[:, 2 * E:3 * E]); add(pfx + "bv", bqkv[:, 2 * E:3 * E])
        add(pfx + "wo", p[keypfx + "wo"]);    add(pfx + "bo", p[keypfx + "bo"])

    # Head-selector matrices (constants) ride along in the slab — no extra DMAs.
    Dh = E // num_heads
    seg = (jnp.arange(E)[:, None] // Dh
           == jnp.arange(num_heads)[None, :]).astype(jnp.float32)
    add("seg", seg)
    add("segT", seg.T)

    add("pos_enc", params["pos_enc"][:S, :])

    for i, p in enumerate(params["encoder_layers"]):
        pfx = f"enc{i}/"
        add_attn(pfx + "sa_", p)
        add(pfx + "ln1_g", p["ln1_g"]); add(pfx + "ln1_b", p["ln1_b"])
        add(pfx + "w1", p["w1"]); add(pfx + "b1", p["b1"])
        add(pfx + "w2", p["w2"]); add(pfx + "b2", p["b2"])
        add(pfx + "ln2_g", p["ln2_g"]); add(pfx + "ln2_b", p["ln2_b"])
    add("enc_norm_g", params["enc_norm_g"]); add("enc_norm_b", params["enc_norm_b"])

    for i, p in enumerate(params["decoder_layers"]):
        pfx = f"dec{i}/"
        add_attn(pfx + "sa_", p, "sa_")
        add_attn(pfx + "ca_", p, "ca_")
        add(pfx + "ln1_g", p["ln1_g"]); add(pfx + "ln1_b", p["ln1_b"])
        add(pfx + "ln2_g", p["ln2_g"]); add(pfx + "ln2_b", p["ln2_b"])
        add(pfx + "ln3_g", p["ln3_g"]); add(pfx + "ln3_b", p["ln3_b"])
        add(pfx + "w1", p["w1"]); add(pfx + "b1", p["b1"])
        add(pfx + "w2", p["w2"]); add(pfx + "b2", p["b2"])
    add("dec_norm_g", params["dec_norm_g"]); add("dec_norm_b", params["dec_norm_b"])

    add("fc_w", params["fc_w"]); add("fc_b", params["fc_b"])

    layout = {}
    padded = []
    row = 0
    for name, arr in entries:
        r, c = arr.shape
        rpad = (-r) % 8
        layout[name] = (row, r, c)
        padded.append(jnp.pad(arr, ((0, rpad), (0, LANE - c))))
        row += r + rpad
    slab = jnp.concatenate(padded, axis=0)
    return slab, layout


# ------------------------------- parameters --------------------------------

def positional_encoding(d_model, max_len):
    position = jnp.arange(max_len, dtype=jnp.float32)[:, None]
    div_term = jnp.exp(jnp.arange(0, d_model, 2, dtype=jnp.float32)
                       * (-(jnp.log(jnp.float32(10000.0)) / d_model)))
    pe = jnp.zeros((max_len, d_model), jnp.float32)
    pe = pe.at[:, 0::2].set(jnp.sin(position * div_term))
    pe = pe.at[:, 1::2].set(jnp.cos(position * div_term))
    return pe


def init_params(key, input_size, num_heads, hidden_size, num_bins,
                n_enc, n_dec, max_len):
    E, Hf = input_size, hidden_size
    kit = iter(jax.random.split(key, 256))

    def w(shape):
        return jax.random.normal(next(kit), shape, jnp.float32) * 0.05

    def attn(prefix=""):
        return {prefix + "wqkv": w((E, 3 * E)),
                prefix + "bqkv": jnp.zeros((1, 3 * E), jnp.float32),
                prefix + "wo": w((E, E)),
                prefix + "bo": jnp.zeros((1, E), jnp.float32)}

    def ln(name):
        return {name + "_g": jnp.ones((1, E), jnp.float32),
                name + "_b": jnp.zeros((1, E), jnp.float32)}

    def enc_layer():
        d = attn()
        d.update({"w1": w((E, Hf)), "b1": jnp.zeros((1, Hf), jnp.float32),
                  "w2": w((Hf, E)), "b2": jnp.zeros((1, E), jnp.float32)})
        d.update(ln("ln1")); d.update(ln("ln2"))
        return d

    def dec_layer():
        d = {}
        d.update(attn("sa_")); d.update(attn("ca_"))
        d.update({"w1": w((E, Hf)), "b1": jnp.zeros((1, Hf), jnp.float32),
                  "w2": w((Hf, E)), "b2": jnp.zeros((1, E), jnp.float32)})
        d.update(ln("ln1")); d.update(ln("ln2")); d.update(ln("ln3"))
        return d

    return {
        "pos_enc": positional_encoding(E, max_len),
        "encoder_layers": [enc_layer() for _ in range(n_enc)],
        "decoder_layers": [dec_layer() for _ in range(n_dec)],
        "enc_norm_g": jnp.ones((1, E), jnp.float32),
        "enc_norm_b": jnp.zeros((1, E), jnp.float32),
        "dec_norm_g": jnp.ones((1, E), jnp.float32),
        "dec_norm_b": jnp.zeros((1, E), jnp.float32),
        "fc_w": w((E, num_bins)), "fc_b": jnp.zeros((1, num_bins), jnp.float32),
    }


# ---------------------------------- main ------------------------------------

if __name__ == "__main__":
    input_size = 32        # d_model
    num_heads = 4
    hidden_size = 64       # dim_feedforward
    num_bins = 8
    num_layers_encoder = 2
    num_layers_decoder = 2
    max_sequence_length = 8
    batch = 2

    key = jax.random.PRNGKey(0)
    pkey, xkey = jax.random.split(key)
    params = init_params(pkey, input_size, num_heads, hidden_size, num_bins,
                         num_layers_encoder, num_layers_decoder,
                         max_sequence_length)

    # Pack all weights once, outside jit (one VMEM-resident slab -> one DMA).
    w_slab, layout = pack_params(params, S=max_sequence_length,
                                 E=input_size, num_heads=num_heads)

    x = jax.random.normal(xkey, (batch, max_sequence_length, input_size),
                          jnp.float32)

    fwd = jax.jit(functools.partial(
        transformer_model_forward, layout=layout, num_heads=num_heads,
        num_bins=num_bins, n_enc=num_layers_encoder, n_dec=num_layers_decoder))

    y = fwd(x, w_slab)
    y = jax.block_until_ready(y)

    assert y.shape == (batch, num_bins)
    assert bool(jnp.all(jnp.isfinite(y)))
    assert bool(jnp.all((y >= 0.0) & (y <= 1.0)))   # sigmoid output range
    print("KERNEL_OK")
</pallas_src>

<mosaic_0001>
module attributes {stable_mosaic.version = 11 : i64} {
  func.func @kernel(%arg0: memref<16x32xf32, #tpu.memory_space<vmem>>, %arg1: memref<1688x128xf32, #tpu.memory_space<vmem>>, %arg2: memref<2x8xf32, #tpu.memory_space<vmem>>) attributes {dimension_semantics = [], scalar_prefetch = 0 : i64, scratch_operands = 0 : i64, tpu.core_type = #tpu.core_type<tc>} {
    %c0 = arith.constant 0 : index
    %c0_0 = arith.constant 0 : index
    %0 = vector.load %arg1[%c0, %c0_0] : memref<1688x128xf32, #tpu.memory_space<vmem>>, vector<32x4xf32>
    %c32 = arith.constant 32 : index
    %c0_1 = arith.constant 0 : index
    %1 = vector.load %arg1[%c32, %c0_1] : memref<1688x128xf32, #tpu.memory_space<vmem>>, vector<4x32xf32>
    %c0_2 = arith.constant 0 : index
    %c0_3 = arith.constant 0 : index
    %2 = vector.load %arg0[%c0_2, %c0_3] : memref<16x32xf32, #tpu.memory_space<vmem>>, vector<16x32xf32>
    %c40 = arith.constant 40 : index
    %c0_4 = arith.constant 0 : index
    %3 = vector.load %arg1[%c40, %c0_4] : memref<1688x128xf32, #tpu.memory_space<vmem>>, vector<8x32xf32>
    %4 = tpu.concatenate %3, %3 in 0 : vector<8x32xf32>, vector<8x32xf32> -> vector<16x32xf32>
    %5 = arith.addf %2, %4 : vector<16x32xf32>
    %c48 = arith.constant 48 : index
    %c0_5 = arith.constant 0 : index
    %6 = vector.load %arg1[%c48, %c0_5] : memref<1688x128xf32, #tpu.memory_space<vmem>>, vector<32x32xf32>
    %cst = arith.constant dense<0.000000e+00> : vector<16x32xf32>
    %7 = tpu.matmul %5, %6, %cst {dimension_numbers = #tpu.dot_dimension_numbers<[1], [0], [0], [1], [0, 0, 1, 1], [], []>} : vector<16x32xf32>, vector<32x32xf32>, vector<16x32xf32> -> vector<16x32xf32>
    %c80 = arith.constant 80 : index
    %c0_6 = arith.constant 0 : index
    %8 = vector.load %arg1[%c80, %c0_6] : memref<1688x128xf32, #tpu.memory_space<vmem>>, vector<1x32xf32>
    %9 = vector.broadcast %8 : vector<1x32xf32> to vector<16x32xf32>
    %10 = arith.addf %7, %9 : vector<16x32xf32>
    %c88 = arith.constant 88 : index
    %c0_7 = arith.constant 0 : index
    %11 = vector.load %arg1[%c88, %c0_7] : memref<1688x128xf32, #tpu.memory_space<vmem>>, vector<32x32xf32>
    %cst_8 = arith.constant dense<0.000000e+00> : vector<16x32xf32>
    %12 = tpu.matmul %5, %11, %cst_8 {dimension_numbers = #tpu.dot_dimension_numbers<[1], [0], [0], [1], [0, 0, 1, 1], [], []>} : vector<16x32xf32>, vector<32x32xf32>, vector<16x32xf32> -> vector<16x32xf32>
    %c120 = arith.constant 120 : index
    %c0_9 = arith.constant 0 : index
    %13 = vector.load %arg1[%c120, %c0_9] : memref<1688x128xf32, #tpu.memory_space<vmem>>, vector<1x32xf32>
    %14 = vector.broadcast %13 : vector<1x32xf32> to vector<16x32xf32>
    %15 = arith.addf %12, %14 : vector<16x32xf32>
    %c128 = arith.constant 128 : index
    %c0_10 = arith.constant 0 : index
    %16 = vector.load %arg1[%c128, %c0_10] : memref<1688x128xf32, #tpu.memory_space<vmem>>, vector<32x32xf32>
    %cst_11 = arith.constant dense<0.000000e+00> : vector<16x32xf32>
    %17 = tpu.matmul %5, %16, %cst_11 {dimension_numbers = #tpu.dot_dimension_numbers<[1], [0], [0], [1], [0, 0, 1, 1], [], []>} : vector<16x32xf32>, vector<32x32xf32>, vector<16x32xf32> -> vector<16x32xf32>
    %c160 = arith.constant 160 : index
    %c0_12 = arith.constant 0 : index
    %18 = vector.load %arg1[%c160, %c0_12] : memref<1688x128xf32, #tpu.memory_space<vmem>>, vector<1x32xf32>
    %19 = vector.broadcast %18 : vector<1x32xf32> to vector<16x32xf32>
    %20 = arith.addf %17, %19 : vector<16x32xf32>
    %cst_13 = arith.constant 0.353553385 : f32
    %21 = vector.broadcast %cst_13 : f32 to vector<16x32xf32>
    %22 = arith.mulf %10, %21 : vector<16x32xf32>
    %23 = vector.extract_strided_slice %22 {offsets = [0, 0], sizes = [8, 32], strides = [1, 1]} : vector<16x32xf32> to vector<8x32xf32>
    %24 = vector.extract_strided_slice %22 {offsets = [8, 0], sizes = [8, 32], strides = [1, 1]} : vector<16x32xf32> to vector<8x32xf32>
    %25 = vector.extract_strided_slice %15 {offsets = [0, 0], sizes = [8, 32], strides = [1, 1]} : vector<16x32xf32> to vector<8x32xf32>
    %26 = vector.extract_strided_slice %15 {offsets = [8, 0], sizes = [8, 32], strides = [1, 1]} : vector<16x32xf32> to vector<8x32xf32>
    %27 = vector.extract_strided_slice %20 {offsets = [0, 0], sizes = [8, 32], strides = [1, 1]} : vector<16x32xf32> to vector<8x32xf32>
    %28 = vector.extract_strided_slice %20 {offsets = [8, 0], sizes = [8, 32], strides = [1, 1]} : vector<16x32xf32> to vector<8x32xf32>
    %29 = arith.mulf %23, %25 : vector<8x32xf32>
    %30 = arith.mulf %23, %26 : vector<8x32xf32>
    %31 = arith.mulf %24, %25 : vector<8x32xf32>
    %32 = arith.mulf %24, %26 : vector<8x32xf32>
    %33 = tpu.concatenate %29, %30, %31, %32 in 0 : vector<8x32xf32>, vector<8x32xf32>, vector<8x32xf32>, vector<8x32xf32> -> vector<32x32xf32>
    %cst_14 = arith.constant dense<0.000000e+00> : vector<32x4xf32>
    %34 = tpu.matmul %33, %0, %cst_14 {dimension_numbers = #tpu.dot_dimension_numbers<[1], [0], [0], [1], [0, 0, 1, 1], [], []>} : vector<32x32xf32>, vector<32x4xf32>, vector<32x4xf32> -> vector<32x4xf32>
    %35 = vector.extract_strided_slice %34 {offsets = [0, 0], sizes = [8, 4], strides = [1, 1]} : vector<32x4xf32> to vector<8x4xf32>
    %36 = vector.extract_strided_slice %34 {offsets = [8, 0], sizes = [8, 4], strides = [1, 1]} : vector<32x4xf32> to vector<8x4xf32>
    %37 = arith.maximumf %35, %36 : vector<8x4xf32>
    %38 = arith.subf %35, %37 : vector<8x4xf32>
    %39 = math.exp %38 : vector<8x4xf32>
    %40 = arith.subf %36, %37 : vector<8x4xf32>
    %41 = math.exp %40 : vector<8x4xf32>
    %42 = arith.addf %39, %41 : vector<8x4xf32>
    %43 = tpu.reciprocal %42 {approx = true} : vector<8x4xf32> -> vector<8x4xf32>
    %44 = arith.mulf %39, %43 : vector<8x4xf32>
    %45 = arith.mulf %41, %43 : vector<8x4xf32>
    %46 = vector.extract_strided_slice %34 {offsets = [16, 0], sizes = [8, 4], strides = [1, 1]} : vector<32x4xf32> to vector<8x4xf32>
    %47 = vector.extract_strided_slice %34 {offsets = [24, 0], sizes = [8, 4], strides = [1, 1]} : vector<32x4xf32> to vector<8x4xf32>
    %48 = arith.maximumf %46, %47 : vector<8x4xf32>
    %49 = arith.subf %46, %48 : vector<8x4xf32>
    %50 = math.exp %49 : vector<8x4xf32>
    %51 = arith.subf %47, %48 : vector<8x4xf32>
    %52 = math.exp %51 : vector<8x4xf32>
    %53 = arith.addf %50, %52 : vector<8x4xf32>
    %54 = tpu.reciprocal %53 {approx = true} : vector<8x4xf32> -> vector<8x4xf32>
    %55 = arith.mulf %50, %54 : vector<8x4xf32>
    %56 = arith.mulf %52, %54 : vector<8x4xf32>
    %57 = tpu.concatenate %44, %45, %55, %56 in 0 : vector<8x4xf32>, vector<8x4xf32>, vector<8x4xf32>, vector<8x4xf32> -> vector<32x4xf32>
    %cst_15 = arith.constant dense<0.000000e+00> : vector<32x32xf32>
    %58 = tpu.matmul %57, %1, %cst_15 {dimension_numbers = #tpu.dot_dimension_numbers<[1], [0], [0], [1], [0, 0, 1, 1], [], []>} : vector<32x4xf32>, vector<4x32xf32>, vector<32x32xf32> -> vector<32x32xf32>
    %59 = vector.extract_strided_slice %58 {offsets = [0, 0], sizes = [8, 32], strides = [1, 1]} : vector<32x32xf32> to vector<8x32xf32>
    %60 = arith.mulf %59, %27 : vector<8x32xf32>
    %61 = vector.extract_strided_slice %58 {offsets = [8, 0], sizes = [8, 32], strides = [1, 1]} : vector<32x32xf32> to vector<8x32xf32>
    %62 = arith.mulf %61, %28 : vector<8x32xf32>
    %63 = arith.addf %60, %62 : vector<8x32xf32>
    %64 = vector.extract_strided_slice %58 {offsets = [16, 0], sizes = [8, 32], strides = [1, 1]} : vector<32x32xf32> to vector<8x32xf32>
    %65 = arith.mulf %64, %27 : vector<8x32xf32>
    %66 = vector.extract_strided_slice %58 {offsets = [24, 0], sizes = [8, 32], strides = [1, 1]} : vector<32x32xf32> to vector<8x32xf32>
    %67 = arith.mulf %66, %28 : vector<8x32xf32>
    %68 = arith.addf %65, %67 : vector<8x32xf32>
    %69 = tpu.concatenate %63, %68 in 0 : vector<8x32xf32>, vector<8x32xf32> -> vector<16x32xf32>
    %c168 = arith.constant 168 : index
    %c0_16 = arith.constant 0 : index
    %70 = vector.load %arg1[%c168, %c0_16] : memref<1688x128xf32, #tpu.memory_space<vmem>>, vector<32x32xf32>
    %cst_17 = arith.constant dense<0.000000e+00> : vector<16x32xf32>
    %71 = tpu.matmul %69, %70, %cst_17 {dimension_numbers = #tpu.dot_dimension_numbers<[1], [0], [0], [1], [0, 0, 1, 1], [], []>} : vector<16x32xf32>, vector<32x32xf32>, vector<16x32xf32> -> vector<16x32xf32>
    %c200 = arith.constant 200 : index
    %c0_18 = arith.constant 0 : index
    %72 = vector.load %arg1[%c200, %c0_18] : memref<1688x128xf32, #tpu.memory_space<vmem>>, vector<1x32xf32>
    %73 = vector.broadcast %72 : vector<1x32xf32> to vector<16x32xf32>
    %74 = arith.addf %71, %73 : vector<16x32xf32>
    %75 = arith.addf %5, %74 : vector<16x32xf32>
    %c208 = arith.constant 208 : index
    %c0_19 = arith.constant 0 : index
    %76 = vector.load %arg1[%c208, %c0_19] : memref<1688x128xf32, #tpu.memory_space<vmem>>, vector<1x32xf32>
    %c216 = arith.constant 216 : index
    %c0_20 = arith.constant 0 : index
    %77 = vector.load %arg1[%c216, %c0_20] : memref<1688x128xf32, #tpu.memory_space<vmem>>, vector<1x32xf32>
    %cst_21 = arith.constant dense<0.000000e+00> : vector<16xf32>
    %78 = vector.multi_reduction <add>, %75, %cst_21 [1] : vector<16x32xf32> to vector<16xf32>
    %79 = vector.shape_cast %78 : vector<16xf32> to vector<16x1xf32>
    %cst_22 = arith.constant 3.200000e+01 : f32
    %80 = vector.broadcast %cst_22 : f32 to vector<16x1xf32>
    %81 = arith.divf %79, %80 : vector<16x1xf32>
    %82 = vector.broadcast %81 : vector<16x1xf32> to vector<16x32xf32>
    %83 = arith.subf %75, %82 : vector<16x32xf32>
    %84 = arith.mulf %83, %83 : vector<16x32xf32>
    %cst_23 = arith.constant dense<0.000000e+00> : vector<16xf32>
    %85 = vector.multi_reduction <add>, %84, %cst_23 [1] : vector<16x32xf32> to vector<16xf32>
    %86 = vector.shape_cast %85 : vector<16xf32> to vector<16x1xf32>
    %cst_24 = arith.constant 3.200000e+01 : f32
    %87 = vector.broadcast %cst_24 : f32 to vector<16x1xf32>
    %88 = arith.divf %86, %87 : vector<16x1xf32>
    %cst_25 = arith.constant 9.99999974E-6 : f32
    %89 = vector.broadcast %cst_25 : f32 to vector<16x1xf32>
    %90 = arith.addf %88, %89 : vector<16x1xf32>
    %91 = math.rsqrt %90 : vector<16x1xf32>
    %92 = vector.broadcast %91 : vector<16x1xf32> to vector<16x32xf32>
    %93 = arith.mulf %83, %92 : vector<16x32xf32>
    %94 = vector.broadcast %76 : vector<1x32xf32> to vector<16x32xf32>
    %95 = arith.mulf %93, %94 : vector<16x32xf32>
    %96 = vector.broadcast %77 : vector<1x32xf32> to vector<16x32xf32>
    %97 = arith.addf %95, %96 : vector<16x32xf32>
    %c224 = arith.constant 224 : index
    %c0_26 = arith.constant 0 : index
    %98 = vector.load %arg1[%c224, %c0_26] : memref<1688x128xf32, #tpu.memory_space<vmem>>, vector<32x64xf32>
    %cst_27 = arith.constant dense<0.000000e+00> : vector<16x64xf32>
    %99 = tpu.matmul %97, %98, %cst_27 {dimension_numbers = #tpu.dot_dimension_numbers<[1], [0], [0], [1], [0, 0, 1, 1], [], []>} : vector<16x32xf32>, vector<32x64xf32>, vector<16x64xf32> -> vector<16x64xf32>
    %c256 = arith.constant 256 : index
    %c0_28 = arith.constant 0 : index
    %100 = vector.load %arg1[%c256, %c0_28] : memref<1688x128xf32, #tpu.memory_space<vmem>>, vector<1x64xf32>
    %101 = vector.broadcast %100 : vector<1x64xf32> to vector<16x64xf32>
    %102 = arith.addf %99, %101 : vector<16x64xf32>
    %cst_29 = arith.constant 0.000000e+00 : f32
    %103 = vector.broadcast %cst_29 : f32 to vector<16x64xf32>
    %104 = arith.maximumf %102, %103 : vector<16x64xf32>
    %c264 = arith.constant 264 : index
    %c0_30 = arith.constant 0 : index
    %105 = vector.load %arg1[%c264, %c0_30] : memref<1688x128xf32, #tpu.memory_space<vmem>>, vector<64x32xf32>
    %cst_31 = arith.constant dense<0.000000e+00> : vector<16x32xf32>
    %106 = tpu.matmul %104, %105, %cst_31 {dimension_numbers = #tpu.dot_dimension_numbers<[1], [0], [0], [1], [0, 0, 1, 1], [], []>} : vector<16x64xf32>, vector<64x32xf32>, vector<16x32xf32> -> vector<16x32xf32>
    %c328 = arith.constant 328 : index
    %c0_32 = arith.constant 0 : index
    %107 = vector.load %arg1[%c328, %c0_32] : memref<1688x128xf32, #tpu.memory_space<vmem>>, vector<1x32xf32>
    %108 = vector.broadcast %107 : vector<1x32xf32> to vector<16x32xf32>
    %109 = arith.addf %106, %108 : vector<16x32xf32>
    %110 = arith.addf %97, %109 : vector<16x32xf32>
    %c336 = arith.constant 336 : index
    %c0_33 = arith.constant 0 : index
    %111 = vector.load %arg1[%c336, %c0_33] : memref<1688x128xf32, #tpu.memory_space<vmem>>, vector<1x32xf32>
    %c344 = arith.constant 344 : index
    %c0_34 = arith.constant 0 : index
    %112 = vector.load %arg1[%c344, %c0_34] : memref<1688x128xf32, #tpu.memory_space<vmem>>, vector<1x32xf32>
    %cst_35 = arith.constant dense<0.000000e+00> : vector<16xf32>
    %113 = vector.multi_reduction <add>, %110, %cst_35 [1] : vector<16x32xf32> to vector<16xf32>
    %114 = vector.shape_cast %113 : vector<16xf32> to vector<16x1xf32>
    %cst_36 = arith.constant 3.200000e+01 : f32
    %115 = vector.broadcast %cst_36 : f32 to vector<16x1xf32>
    %116 = arith.divf %114, %115 : vector<16x1xf32>
    %117 = vector.broadcast %116 : vector<16x1xf32> to vector<16x32xf32>
    %118 = arith.subf %110, %117 : vector<16x32xf32>
    %119 = arith.mulf %118, %118 : vector<16x32xf32>
    %cst_37 = arith.constant dense<0.000000e+00> : vector<16xf32>
    %120 = vector.multi_reduction <add>, %119, %cst_37 [1] : vector<16x32xf32> to vector<16xf32>
    %121 = vector.shape_cast %120 : vector<16xf32> to vector<16x1xf32>
    %cst_38 = arith.constant 3.200000e+01 : f32
    %122 = vector.broadcast %cst_38 : f32 to vector<16x1xf32>
    %123 = arith.divf %121, %122 : vector<16x1xf32>
    %cst_39 = arith.constant 9.99999974E-6 : f32
    %124 = vector.broadcast %cst_39 : f32 to vector<16x1xf32>
    %125 = arith.addf %123, %124 : vector<16x1xf32>
    %126 = math.rsqrt %125 : vector<16x1xf32>
    %127 = vector.broadcast %126 : vector<16x1xf32> to vector<16x32xf32>
    %128 = arith.mulf %118, %127 : vector<16x32xf32>
    %129 = vector.broadcast %111 : vector<1x32xf32> to vector<16x32xf32>
    %130 = arith.mulf %128, %129 : vector<16x32xf32>
    %131 = vector.broadcast %112 : vector<1x32xf32> to vector<16x32xf32>
    %132 = arith.addf %130, %131 : vector<16x32xf32>
    %c352 = arith.constant 352 : index
    %c0_40 = arith.constant 0 : index
    %133 = vector.load %arg1[%c352, %c0_40] : memref<1688x128xf32, #tpu.memory_space<vmem>>, vector<32x32xf32>
    %cst_41 = arith.constant dense<0.000000e+00> : vector<16x32xf32>
    %134 = tpu.matmul %132, %133, %cst_41 {dimension_numbers = #tpu.dot_dimension_numbers<[1], [0], [0], [1], [0, 0, 1, 1], [], []>} : vector<16x32xf32>, vector<32x32xf32>, vector<16x32xf32> -> vector<16x32xf32>
    %c384 = arith.constant 384 : index
    %c0_42 = arith.constant 0 : index
    %135 = vector.load %arg1[%c384, %c0_42] : memref<1688x128xf32, #tpu.memory_space<vmem>>, vector<1x32xf32>
    %136 = vector.broadcast %135 : vector<1x32xf32> to vector<16x32xf32>
    %137 = arith.addf %134, %136 : vector<16x32xf32>
    %c392 = arith.constant 392 : index
    %c0_43 = arith.constant 0 : index
    %138 = vector.load %arg1[%c392, %c0_43] : memref<1688x128xf32, #tpu.memory_space<vmem>>, vector<32x32xf32>
    %cst_44 = arith.constant dense<0.000000e+00> : vector<16x32xf32>
    %139 = tpu.matmul %132, %138, %cst_44 {dimension_numbers = #tpu.dot_dimension_numbers<[1], [0], [0], [1], [0, 0, 1, 1], [], []>} : vector<16x32xf32>, vector<32x32xf32>, vector<16x32xf32> -> vector<16x32xf32>
    %c424 = arith.constant 424 : index
    %c0_45 = arith.constant 0 : index
    %140 = vector.load %arg1[%c424, %c0_45] : memref<1688x128xf32, #tpu.memory_space<vmem>>, vector<1x32xf32>
    %141 = vector.broadcast %140 : vector<1x32xf32> to vector<16x32xf32>
    %142 = arith.addf %139, %141 : vector<16x32xf32>
    %c432 = arith.constant 432 : index
    %c0_46 = arith.constant 0 : index
    %143 = vector.load %arg1[%c432, %c0_46] : memref<1688x128xf32, #tpu.memory_space<vmem>>, vector<32x32xf32>
    %cst_47 = arith.constant dense<0.000000e+00> : vector<16x32xf32>
    %144 = tpu.matmul %132, %143, %cst_47 {dimension_numbers = #tpu.dot_dimension_numbers<[1], [0], [0], [1], [0, 0, 1, 1], [], []>} : vector<16x32xf32>, vector<32x32xf32>, vector<16x32xf32> -> vector<16x32xf32>
    %c464 = arith.constant 464 : index
    %c0_48 = arith.constant 0 : index
    %145 = vector.load %arg1[%c464, %c0_48] : memref<1688x128xf32, #tpu.memory_space<vmem>>, vector<1x32xf32>
    %146 = vector.broadcast %145 : vector<1x32xf32> to vector<16x32xf32>
    %147 = arith.addf %144, %146 : vector<16x32xf32>
    %cst_49 = arith.constant 0.353553385 : f32
    %148 = vector.broadcast %cst_49 : f32 to vector<16x32xf32>
    %149 = arith.mulf %137, %148 : vector<16x32xf32>
    %150 = vector.extract_strided_slice %149 {offsets = [0, 0], sizes = [8, 32], strides = [1, 1]} : vector<16x32xf32> to vector<8x32xf32>
    %151 = vector.extract_strided_slice %149 {offsets = [8, 0], sizes = [8, 32], strides = [1, 1]} : vector<16x32xf32> to vector<8x32xf32>
    %152 = vector.extract_strided_slice %142 {offsets = [0, 0], sizes = [8, 32], strides = [1, 1]} : vector<16x32xf32> to vector<8x32xf32>
    %153 = vector.extract_strided_slice %142 {offsets = [8, 0], sizes = [8, 32], strides = [1, 1]} : vector<16x32xf32> to vector<8x32xf32>
    %154 = vector.extract_strided_slice %147 {offsets = [0, 0], sizes = [8, 32], strides = [1, 1]} : vector<16x32xf32> to vector<8x32xf32>
    %155 = vector.extract_strided_slice %147 {offsets = [8, 0], sizes = [8, 32], strides = [1, 1]} : vector<16x32xf32> to vector<8x32xf32>
    %156 = arith.mulf %150, %152 : vector<8x32xf32>
    %157 = arith.mulf %150, %153 : vector<8x32xf32>
    %158 = arith.mulf %151, %152 : vector<8x32xf32>
    %159 = arith.mulf %151, %153 : vector<8x32xf32>
    %160 = tpu.concatenate %156, %157, %158, %159 in 0 : vector<8x32xf32>, vector<8x32xf32>, vector<8x32xf32>, vector<8x32xf32> -> vector<32x32xf32>
    %cst_50 = arith.constant dense<0.000000e+00> : vector<32x4xf32>
    %161 = tpu.matmul %160, %0, %cst_50 {dimension_numbers = #tpu.dot_dimension_numbers<[1], [0], [0], [1], [0, 0, 1, 1], [], []>} : vector<32x32xf32>, vector<32x4xf32>, vector<32x4xf32> -> vector<32x4xf32>
    %162 = vector.extract_strided_slice %161 {offsets = [0, 0], sizes = [8, 4], strides = [1, 1]} : vector<32x4xf32> to vector<8x4xf32>
    %163 = vector.extract_strided_slice %161 {offsets = [8, 0], sizes = [8, 4], strides = [1, 1]} : vector<32x4xf32> to vector<8x4xf32>
    %164 = arith.maximumf %162, %163 : vector<8x4xf32>
    %165 = arith.subf %162, %164 : vector<8x4xf32>
    %166 = math.exp %165 : vector<8x4xf32>
    %167 = arith.subf %163, %164 : vector<8x4xf32>
    %168 = math.exp %167 : vector<8x4xf32>
    %169 = arith.addf %166, %168 : vector<8x4xf32>
    %170 = tpu.reciprocal %169 {approx = true} : vector<8x4xf32> -> vector<8x4xf32>
    %171 = arith.mulf %166, %170 : vector<8x4xf32>
    %172 = arith.mulf %168, %170 : vector<8x4xf32>
    %173 = vector.extract_strided_slice %161 {offsets = [16, 0], sizes = [8, 4], strides = [1, 1]} : vector<32x4xf32> to vector<8x4xf32>
    %174 = vector.extract_strided_slice %161 {offsets = [24, 0], sizes = [8, 4], strides = [1, 1]} : vector<32x4xf32> to vector<8x4xf32>
    %175 = arith.maximumf %173, %174 : vector<8x4xf32>
    %176 = arith.subf %173, %175 : vector<8x4xf32>
    %177 = math.exp %176 : vector<8x4xf32>
    %178 = arith.subf %174, %175 : vector<8x4xf32>
    %179 = math.exp %178 : vector<8x4xf32>
    %180 = arith.addf %177, %179 : vector<8x4xf32>
    %181 = tpu.reciprocal %180 {approx = true} : vector<8x4xf32> -> vector<8x4xf32>
    %182 = arith.mulf %177, %181 : vector<8x4xf32>
    %183 = arith.mulf %179, %181 : vector<8x4xf32>
    %184 = tpu.concatenate %171, %172, %182, %183 in 0 : vector<8x4xf32>, vector<8x4xf32>, vector<8x4xf32>, vector<8x4xf32> -> vector<32x4xf32>
    %cst_51 = arith.constant dense<0.000000e+00> : vector<32x32xf32>
    %185 = tpu.matmul %184, %1, %cst_51 {dimension_numbers = #tpu.dot_dimension_numbers<[1], [0], [0], [1], [0, 0, 1, 1], [], []>} : vector<32x4xf32>, vector<4x32xf32>, vector<32x32xf32> -> vector<32x32xf32>
    %186 = vector.extract_strided_slice %185 {offsets = [0, 0], sizes = [8, 32], strides = [1, 1]} : vector<32x32xf32> to vector<8x32xf32>
    %187 = arith.mulf %186, %154 : vector<8x32xf32>
    %188 = vector.extract_strided_slice %185 {offsets = [8, 0], sizes = [8, 32], strides = [1, 1]} : vector<32x32xf32> to vector<8x32xf32>
    %189 = arith.mulf %188, %155 : vector<8x32xf32>
    %190 = arith.addf %187, %189 : vector<8x32xf32>
    %191 = vector.extract_strided_slice %185 {offsets = [16, 0], sizes = [8, 32], strides = [1, 1]} : vector<32x32xf32> to vector<8x32xf32>
    %192 = arith.mulf %191, %154 : vector<8x32xf32>
    %193 = vector.extract_strided_slice %185 {offsets = [24, 0], sizes = [8, 32], strides = [1, 1]} : vector<32x32xf32> to vector<8x32xf32>
    %194 = arith.mulf %193, %155 : vector<8x32xf32>
    %195 = arith.addf %192, %194 : vector<8x32xf32>
    %196 = tpu.concatenate %190, %195 in 0 : vector<8x32xf32>, vector<8x32xf32> -> vector<16x32xf32>
    %c472 = arith.constant 472 : index
    %c0_52 = arith.constant 0 : index
    %197 = vector.load %arg1[%c472, %c0_52] : memref<1688x128xf32, #tpu.memory_space<vmem>>, vector<32x32xf32>
    %cst_53 = arith.constant dense<0.000000e+00> : vector<16x32xf32>
    %198 = tpu.matmul %196, %197, %cst_53 {dimension_numbers = #tpu.dot_dimension_numbers<[1], [0], [0], [1], [0, 0, 1, 1], [], []>} : vector<16x32xf32>, vector<32x32xf32>, vector<16x32xf32> -> vector<16x32xf32>
    %c504 = arith.constant 504 : index
    %c0_54 = arith.constant 0 : index
    %199 = vector.load %arg1[%c504, %c0_54] : memref<1688x128xf32, #tpu.memory_space<vmem>>, vector<1x32xf32>
    %200 = vector.broadcast %199 : vector<1x32xf32> to vector<16x32xf32>
    %201 = arith.addf %198, %200 : vector<16x32xf32>
    %202 = arith.addf %132, %201 : vector<16x32xf32>
    %c512 = arith.constant 512 : index
    %c0_55 = arith.constant 0 : index
    %203 = vector.load %arg1[%c512, %c0_55] : memref<1688x128xf32, #tpu.memory_space<vmem>>, vector<1x32xf32>
    %c520 = arith.constant 520 : index
    %c0_56 = arith.constant 0 : index
    %204 = vector.load %arg1[%c520, %c0_56] : memref<1688x128xf32, #tpu.memory_space<vmem>>, vector<1x32xf32>
    %cst_57 = arith.constant dense<0.000000e+00> : vector<16xf32>
    %205 = vector.multi_reduction <add>, %202, %cst_57 [1] : vector<16x32xf32> to vector<16xf32>
    %206 = vector.shape_cast %205 : vector<16xf32> to vector<16x1xf32>
    %cst_58 = arith.constant 3.200000e+01 : f32
    %207 = vector.broadcast %cst_58 : f32 to vector<16x1xf32>
    %208 = arith.divf %206, %207 : vector<16x1xf32>
    %209 = vector.broadcast %208 : vector<16x1xf32> to vector<16x32xf32>
    %210 = arith.subf %202, %209 : vector<16x32xf32>
    %211 = arith.mulf %210, %210 : vector<16x32xf32>
    %cst_59 = arith.constant dense<0.000000e+00> : vector<16xf32>
    %212 = vector.multi_reduction <add>, %211, %cst_59 [1] : vector<16x32xf32> to vector<16xf32>
    %213 = vector.shape_cast %212 : vector<16xf32> to vector<16x1xf32>
    %cst_60 = arith.constant 3.200000e+01 : f32
    %214 = vector.broadcast %cst_60 : f32 to vector<16x1xf32>
    %215 = arith.divf %213, %214 : vector<16x1xf32>
    %cst_61 = arith.constant 9.99999974E-6 : f32
    %216 = vector.broadcast %cst_61 : f32 to vector<16x1xf32>
    %217 = arith.addf %215, %216 : vector<16x1xf32>
    %218 = math.rsqrt %217 : vector<16x1xf32>
    %219 = vector.broadcast %218 : vector<16x1xf32> to vector<16x32xf32>
    %220 = arith.mulf %210, %219 : vector<16x32xf32>
    %221 = vector.broadcast %203 : vector<1x32xf32> to vector<16x32xf32>
    %222 = arith.mulf %220, %221 : vector<16x32xf32>
    %223 = vector.broadcast %204 : vector<1x32xf32> to vector<16x32xf32>
    %224 = arith.addf %222, %223 : vector<16x32xf32>
    %c528 = arith.constant 528 : index
    %c0_62 = arith.constant 0 : index
    %225 = vector.load %arg1[%c528, %c0_62] : memref<1688x128xf32, #tpu.memory_space<vmem>>, vector<32x64xf32>
    %cst_63 = arith.constant dense<0.000000e+00> : vector<16x64xf32>
    %226 = tpu.matmul %224, %225, %cst_63 {dimension_numbers = #tpu.dot_dimension_numbers<[1], [0], [0], [1], [0, 0, 1, 1], [], []>} : vector<16x32xf32>, vector<32x64xf32>, vector<16x64xf32> -> vector<16x64xf32>
    %c560 = arith.constant 560 : index
    %c0_64 = arith.constant 0 : index
    %227 = vector.load %arg1[%c560, %c0_64] : memref<1688x128xf32, #tpu.memory_space<vmem>>, vector<1x64xf32>
    %228 = vector.broadcast %227 : vector<1x64xf32> to vector<16x64xf32>
    %229 = arith.addf %226, %228 : vector<16x64xf32>
    %cst_65 = arith.constant 0.000000e+00 : f32
    %230 = vector.broadcast %cst_65 : f32 to vector<16x64xf32>
    %231 = arith.maximumf %229, %230 : vector<16x64xf32>
    %c568 = arith.constant 568 : index
    %c0_66 = arith.constant 0 : index
    %232 = vector.load %arg1[%c568, %c0_66] : memref<1688x128xf32, #tpu.memory_space<vmem>>, vector<64x32xf32>
    %cst_67 = arith.constant dense<0.000000e+00> : vector<16x32xf32>
    %233 = tpu.matmul %231, %232, %cst_67 {dimension_numbers = #tpu.dot_dimension_numbers<[1], [0], [0], [1], [0, 0, 1, 1], [], []>} : vector<16x64xf32>, vector<64x32xf32>, vector<16x32xf32> -> vector<16x32xf32>
    %c632 = arith.constant 632 : index
    %c0_68 = arith.constant 0 : index
    %234 = vector.load %arg1[%c632, %c0_68] : memref<1688x128xf32, #tpu.memory_space<vmem>>, vector<1x32xf32>
    %235 = vector.broadcast %234 : vector<1x32xf32> to vector<16x32xf32>
    %236 = arith.addf %233, %235 : vector<16x32xf32>
    %237 = arith.addf %224, %236 : vector<16x32xf32>
    %c640 = arith.constant 640 : index
    %c0_69 = arith.constant 0 : index
    %238 = vector.load %arg1[%c640, %c0_69] : memref<1688x128xf32, #tpu.memory_space<vmem>>, vector<1x32xf32>
    %c648 = arith.constant 648 : index
    %c0_70 = arith.constant 0 : index
    %239 = vector.load %arg1[%c648, %c0_70] : memref<1688x128xf32, #tpu.memory_space<vmem>>, vector<1x32xf32>
    %cst_71 = arith.constant dense<0.000000e+00> : vector<16xf32>
    %240 = vector.multi_reduction <add>, %237, %cst_71 [1] : vector<16x32xf32> to vector<16xf32>
    %241 = vector.shape_cast %240 : vector<16xf32> to vector<16x1xf32>
    %cst_72 = arith.constant 3.200000e+01 : f32
    %242 = vector.broadcast %cst_72 : f32 to vector<16x1xf32>
    %243 = arith.divf %241, %242 : vector<16x1xf32>
    %244 = vector.broadcast %243 : vector<16x1xf32> to vector<16x32xf32>
    %245 = arith.subf %237, %244 : vector<16x32xf32>
    %246 = arith.mulf %245, %245 : vector<16x32xf32>
    %cst_73 = arith.constant dense<0.000000e+00> : vector<16xf32>
    %247 = vector.multi_reduction <add>, %246, %cst_73 [1] : vector<16x32xf32> to vector<16xf32>
    %248 = vector.shape_cast %247 : vector<16xf32> to vector<16x1xf32>
    %cst_74 = arith.constant 3.200000e+01 : f32
    %249 = vector.broadcast %cst_74 : f32 to vector<16x1xf32>
    %250 = arith.divf %248, %249 : vector<16x1xf32>
    %cst_75 = arith.constant 9.99999974E-6 : f32
    %251 = vector.broadcast %cst_75 : f32 to vector<16x1xf32>
    %252 = arith.addf %250, %251 : vector<16x1xf32>
    %253 = math.rsqrt %252 : vector<16x1xf32>
    %254 = vector.broadcast %253 : vector<16x1xf32> to vector<16x32xf32>
    %255 = arith.mulf %245, %254 : vector<16x32xf32>
    %256 = vector.broadcast %238 : vector<1x32xf32> to vector<16x32xf32>
    %257 = arith.mulf %255, %256 : vector<16x32xf32>
    %258 = vector.broadcast %239 : vector<1x32xf32> to vector<16x32xf32>
    %259 = arith.addf %257, %258 : vector<16x32xf32>
    %c656 = arith.constant 656 : index
    %c0_76 = arith.constant 0 : index
    %260 = vector.load %arg1[%c656, %c0_76] : memref<1688x128xf32, #tpu.memory_space<vmem>>, vector<1x32xf32>
    %c664 = arith.constant 664 : index
    %c0_77 = arith.constant 0 : index
    %261 = vector.load %arg1[%c664, %c0_77] : memref<1688x128xf32, #tpu.memory_space<vmem>>, vector<1x32xf32>
    %cst_78 = arith.constant dense<0.000000e+00> : vector<16xf32>
    %262 = vector.multi_reduction <add>, %259, %cst_78 [1] : vector<16x32xf32> to vector<16xf32>
    %263 = vector.shape_cast %262 : vector<16xf32> to vector<16x1xf32>
    %cst_79 = arith.constant 3.200000e+01 : f32
    %264 = vector.broadcast %cst_79 : f32 to vector<16x1xf32>
    %265 = arith.divf %263, %264 : vector<16x1xf32>
    %266 = vector.broadcast %265 : vector<16x1xf32> to vector<16x32xf32>
    %267 = arith.subf %259, %266 : vector<16x32xf32>
    %268 = arith.mulf %267, %267 : vector<16x32xf32>
    %cst_80 = arith.constant dense<0.000000e+00> : vector<16xf32>
    %269 = vector.multi_reduction <add>, %268, %cst_80 [1] : vector<16x32xf32> to vector<16xf32>
    %270 = vector.shape_cast %269 : vector<16xf32> to vector<16x1xf32>
    %cst_81 = arith.constant 3.200000e+01 : f32
    %271 = vector.broadcast %cst_81 : f32 to vector<16x1xf32>
    %272 = arith.divf %270, %271 : vector<16x1xf32>
    %cst_82 = arith.constant 9.99999974E-6 : f32
    %273 = vector.broadcast %cst_82 : f32 to vector<16x1xf32>
    %274 = arith.addf %272, %273 : vector<16x1xf32>
    %275 = math.rsqrt %274 : vector<16x1xf32>
    %276 = vector.broadcast %275 : vector<16x1xf32> to vector<16x32xf32>
    %277 = arith.mulf %267, %276 : vector<16x32xf32>
    %278 = vector.broadcast %260 : vector<1x32xf32> to vector<16x32xf32>
    %279 = arith.mulf %277, %278 : vector<16x32xf32>
    %280 = vector.broadcast %261 : vector<1x32xf32> to vector<16x32xf32>
    %281 = arith.addf %279, %280 : vector<16x32xf32>
    %c672 = arith.constant 672 : index
    %c0_83 = arith.constant 0 : index
    %282 = vector.load %arg1[%c672, %c0_83] : memref<1688x128xf32, #tpu.memory_space<vmem>>, vector<32x32xf32>
    %cst_84 = arith.constant dense<0.000000e+00> : vector<16x32xf32>
    %283 = tpu.matmul %5, %282, %cst_84 {dimension_numbers = #tpu.dot_dimension_numbers<[1], [0], [0], [1], [0, 0, 1, 1], [], []>} : vector<16x32xf32>, vector<32x32xf32>, vector<16x32xf32> -> vector<16x32xf32>
    %c704 = arith.constant 704 : index
    %c0_85 = arith.constant 0 : index
    %284 = vector.load %arg1[%c704, %c0_85] : memref<1688x128xf32, #tpu.memory_space<vmem>>, vector<1x32xf32>
    %285 = vector.broadcast %284 : vector<1x32xf32> to vector<16x32xf32>
    %286 = arith.addf %283, %285 : vector<16x32xf32>
    %c712 = arith.constant 712 : index
    %c0_86 = arith.constant 0 : index
    %287 = vector.load %arg1[%c712, %c0_86] : memref<1688x128xf32, #tpu.memory_space<vmem>>, vector<32x32xf32>
    %cst_87 = arith.constant dense<0.000000e+00> : vector<16x32xf32>
    %288 = tpu.matmul %5, %287, %cst_87 {dimension_numbers = #tpu.dot_dimension_numbers<[1], [0], [0], [1], [0, 0, 1, 1], [], []>} : vector<16x32xf32>, vector<32x32xf32>, vector<16x32xf32> -> vector<16x32xf32>
    %c744 = arith.constant 744 : index
    %c0_88 = arith.constant 0 : index
    %289 = vector.load %arg1[%c744, %c0_88] : memref<1688x128xf32, #tpu.memory_space<vmem>>, vector<1x32xf32>
    %290 = vector.broadcast %289 : vector<1x32xf32> to vector<16x32xf32>
    %291 = arith.addf %288, %290 : vector<16x32xf32>
    %c752 = arith.constant 752 : index
    %c0_89 = arith.constant 0 : index
    %292 = vector.load %arg1[%c752, %c0_89] : memref<1688x128xf32, #tpu.memory_space<vmem>>, vector<32x32xf32>
    %cst_90 = arith.constant dense<0.000000e+00> : vector<16x32xf32>
    %293 = tpu.matmul %5, %292, %cst_90 {dimension_numbers = #tpu.dot_dimension_numbers<[1], [0], [0], [1], [0, 0, 1, 1], [], []>} : vector<16x32xf32>, vector<32x32xf32>, vector<16x32xf32> -> vector<16x32xf32>
    %c784 = arith.constant 784 : index
    %c0_91 = arith.constant 0 : index
    %294 = vector.load %arg1[%c784, %c0_91] : memref<1688x128xf32, #tpu.memory_space<vmem>>, vector<1x32xf32>
    %295 = vector.broadcast %294 : vector<1x32xf32> to vector<16x32xf32>
    %296 = arith.addf %293, %295 : vector<16x32xf32>
    %cst_92 = arith.constant 0.353553385 : f32
    %297 = vector.broadcast %cst_92 : f32 to vector<16x32xf32>
    %298 = arith.mulf %286, %297 : vector<16x32xf32>
    %299 = vector.extract_strided_slice %298 {offsets = [0, 0], sizes = [8, 32], strides = [1, 1]} : vector<16x32xf32> to vector<8x32xf32>
    %300 = vector.extract_strided_slice %298 {offsets = [8, 0], sizes = [8, 32], strides = [1, 1]} : vector<16x32xf32> to vector<8x32xf32>
    %301 = vector.extract_strided_slice %291 {offsets = [0, 0], sizes = [8, 32], strides = [1, 1]} : vector<16x32xf32> to vector<8x32xf32>
    %302 = vector.extract_strided_slice %291 {offsets = [8, 0], sizes = [8, 32], strides = [1, 1]} : vector<16x32xf32> to vector<8x32xf32>
    %303 = vector.extract_strided_slice %296 {offsets = [0, 0], sizes = [8, 32], strides = [1, 1]} : vector<16x32xf32> to vector<8x32xf32>
    %304 = vector.extract_strided_slice %296 {offsets = [8, 0], sizes = [8, 32], strides = [1, 1]} : vector<16x32xf32> to vector<8x32xf32>
    %305 = arith.mulf %299, %301 : vector<8x32xf32>
    %306 = arith.mulf %299, %302 : vector<8x32xf32>
    %307 = arith.mulf %300, %301 : vector<8x32xf32>
    %308 = arith.mulf %300, %302 : vector<8x32xf32>
    %309 = tpu.concatenate %305, %306, %307, %308 in 0 : vector<8x32xf32>, vector<8x32xf32>, vector<8x32xf32>, vector<8x32xf32> -> vector<32x32xf32>
    %cst_93 = arith.constant dense<0.000000e+00> : vector<32x4xf32>
    %310 = tpu.matmul %309, %0, %cst_93 {dimension_numbers = #tpu.dot_dimension_numbers<[1], [0], [0], [1], [0, 0, 1, 1], [], []>} : vector<32x32xf32>, vector<32x4xf32>, vector<32x4xf32> -> vector<32x4xf32>
    %311 = vector.extract_strided_slice %310 {offsets = [0, 0], sizes = [8, 4], strides = [1, 1]} : vector<32x4xf32> to vector<8x4xf32>
    %312 = vector.extract_strided_slice %310 {offsets = [8, 0], sizes = [8, 4], strides = [1, 1]} : vector<32x4xf32> to vector<8x4xf32>
    %313 = arith.maximumf %311, %312 : vector<8x4xf32>
    %314 = arith.subf %311, %313 : vector<8x4xf32>
    %315 = math.exp %314 : vector<8x4xf32>
    %316 = arith.subf %312, %313 : vector<8x4xf32>
    %317 = math.exp %316 : vector<8x4xf32>
    %318 = arith.addf %315, %317 : vector<8x4xf32>
    %319 = tpu.reciprocal %318 {approx = true} : vector<8x4xf32> -> vector<8x4xf32>
    %320 = arith.mulf %315, %319 : vector<8x4xf32>
    %321 = arith.mulf %317, %319 : vector<8x4xf32>
    %322 = vector.extract_strided_slice %310 {offsets = [16, 0], sizes = [8, 4], strides = [1, 1]} : vector<32x4xf32> to vector<8x4xf32>
    %323 = vector.extract_strided_slice %310 {offsets = [24, 0], sizes = [8, 4], strides = [1, 1]} : vector<32x4xf32> to vector<8x4xf32>
    %324 = arith.maximumf %322, %323 : vector<8x4xf32>
    %325 = arith.subf %322, %324 : vector<8x4xf32>
    %326 = math.exp %325 : vector<8x4xf32>
    %327 = arith.subf %323, %324 : vector<8x4xf32>
    %328 = math.exp %327 : vector<8x4xf32>
    %329 = arith.addf %326, %328 : vector<8x4xf32>
    %330 = tpu.reciprocal %329 {approx = true} : vector<8x4xf32> -> vector<8x4xf32>
    %331 = arith.mulf %326, %330 : vector<8x4xf32>
    %332 = arith.mulf %328, %330 : vector<8x4xf32>
    %333 = tpu.concatenate %320, %321, %331, %332 in 0 : vector<8x4xf32>, vector<8x4xf32>, vector<8x4xf32>, vector<8x4xf32> -> vector<32x4xf32>
    %cst_94 = arith.constant dense<0.000000e+00> : vector<32x32xf32>
    %334 = tpu.matmul %333, %1, %cst_94 {dimension_numbers = #tpu.dot_dimension_numbers<[1], [0], [0], [1], [0, 0, 1, 1], [], []>} : vector<32x4xf32>, vector<4x32xf32>, vector<32x32xf32> -> vector<32x32xf32>
    %335 = vector.extract_strided_slice %334 {offsets = [0, 0], sizes = [8, 32], strides = [1, 1]} : vector<32x32xf32> to vector<8x32xf32>
    %336 = arith.mulf %335, %303 : vector<8x32xf32>
    %337 = vector.extract_strided_slice %334 {offsets = [8, 0], sizes = [8, 32], strides = [1, 1]} : vector<32x32xf32> to vector<8x32xf32>
    %338 = arith.mulf %337, %304 : vector<8x32xf32>
    %339 = arith.addf %336, %338 : vector<8x32xf32>
    %340 = vector.extract_strided_slice %334 {offsets = [16, 0], sizes = [8, 32], strides = [1, 1]} : vector<32x32xf32> to vector<8x32xf32>
    %341 = arith.mulf %340, %303 : vector<8x32xf32>
    %342 = vector.extract_strided_slice %334 {offsets = [24, 0], sizes = [8, 32], strides = [1, 1]} : vector<32x32xf32> to vector<8x32xf32>
    %343 = arith.mulf %342, %304 : vector<8x32xf32>
    %344 = arith.addf %341, %343 : vector<8x32xf32>
    %345 = tpu.concatenate %339, %344 in 0 : vector<8x32xf32>, vector<8x32xf32> -> vector<16x32xf32>
    %c792 = arith.constant 792 : index
    %c0_95 = arith.constant 0 : index
    %346 = vector.load %arg1[%c792, %c0_95] : memref<1688x128xf32, #tpu.memory_space<vmem>>, vector<32x32xf32>
    %cst_96 = arith.constant dense<0.000000e+00> : vector<16x32xf32>
    %347 = tpu.matmul %345, %346, %cst_96 {dimension_numbers = #tpu.dot_dimension_numbers<[1], [0], [0], [1], [0, 0, 1, 1], [], []>} : vector<16x32xf32>, vector<32x32xf32>, vector<16x32xf32> -> vector<16x32xf32>
    %c824 = arith.constant 824 : index
    %c0_97 = arith.constant 0 : index
    %348 = vector.load %arg1[%c824, %c0_97] : memref<1688x128xf32, #tpu.memory_space<vmem>>, vector<1x32xf32>
    %349 = vector.broadcast %348 : vector<1x32xf32> to vector<16x32xf32>
    %350 = arith.addf %347, %349 : vector<16x32xf32>
    %351 = arith.addf %5, %350 : vector<16x32xf32>
    %c992 = arith.constant 992 : index
    %c0_98 = arith.constant 0 : index
    %352 = vector.load %arg1[%c992, %c0_98] : memref<1688x128xf32, #tpu.memory_space<vmem>>, vector<1x32xf32>
    %c1000 = arith.constant 1000 : index
    %c0_99 = arith.constant 0 : index
    %353 = vector.load %arg1[%c1000, %c0_99] : memref<1688x128xf32, #tpu.memory_space<vmem>>, vector<1x32xf32>
    %cst_100 = arith.constant dense<0.000000e+00> : vector<16xf32>
    %354 = vector.multi_reduction <add>, %351, %cst_100 [1] : vector<16x32xf32> to vector<16xf32>
    %355 = vector.shape_cast %354 : vector<16xf32> to vector<16x1xf32>
    %cst_101 = arith.constant 3.200000e+01 : f32
    %356 = vector.broadcast %cst_101 : f32 to vector<16x1xf32>
    %357 = arith.divf %355, %356 : vector<16x1xf32>
    %358 = vector.broadcast %357 : vector<16x1xf32> to vector<16x32xf32>
    %359 = arith.subf %351, %358 : vector<16x32xf32>
    %360 = arith.mulf %359, %359 : vector<16x32xf32>
    %cst_102 = arith.constant dense<0.000000e+00> : vector<16xf32>
    %361 = vector.multi_reduction <add>, %360, %cst_102 [1] : vector<16x32xf32> to vector<16xf32>
    %362 = vector.shape_cast %361 : vector<16xf32> to vector<16x1xf32>
    %cst_103 = arith.constant 3.200000e+01 : f32
    %363 = vector.broadcast %cst_103 : f32 to vector<16x1xf32>
    %364 = arith.divf %362, %363 : vector<16x1xf32>
    %cst_104 = arith.constant 9.99999974E-6 : f32
    %365 = vector.broadcast %cst_104 : f32 to vector<16x1xf32>
    %366 = arith.addf %364, %365 : vector<16x1xf32>
    %367 = math.rsqrt %366 : vector<16x1xf32>
    %368 = vector.broadcast %367 : vector<16x1xf32> to vector<16x32xf32>
    %369 = arith.mulf %359, %368 : vector<16x32xf32>
    %370 = vector.broadcast %352 : vector<1x32xf32> to vector<16x32xf32>
    %371 = arith.mulf %369, %370 : vector<16x32xf32>
    %372 = vector.broadcast %353 : vector<1x32xf32> to vector<16x32xf32>
    %373 = arith.addf %371, %372 : vector<16x32xf32>
    %c832 = arith.constant 832 : index
    %c0_105 = arith.constant 0 : index
    %374 = vector.load %arg1[%c832, %c0_105] : memref<1688x128xf32, #tpu.memory_space<vmem>>, vector<32x32xf32>
    %cst_106 = arith.constant dense<0.000000e+00> : vector<16x32xf32>
    %375 = tpu.matmul %373, %374, %cst_106 {dimension_numbers = #tpu.dot_dimension_numbers<[1], [0], [0], [1], [0, 0, 1, 1], [], []>} : vector<16x32xf32>, vector<32x32xf32>, vector<16x32xf32> -> vector<16x32xf32>
    %c864 = arith.constant 864 : index
    %c0_107 = arith.constant 0 : index
    %376 = vector.load %arg1[%c864, %c0_107] : memref<1688x128xf32, #tpu.memory_space<vmem>>, vector<1x32xf32>
    %377 = vector.broadcast %376 : vector<1x32xf32> to vector<16x32xf32>
    %378 = arith.addf %375, %377 : vector<16x32xf32>
    %c872 = arith.constant 872 : index
    %c0_108 = arith.constant 0 : index
    %379 = vector.load %arg1[%c872, %c0_108] : memref<1688x128xf32, #tpu.memory_space<vmem>>, vector<32x32xf32>
    %cst_109 = arith.constant dense<0.000000e+00> : vector<16x32xf32>
    %380 = tpu.matmul %281, %379, %cst_109 {dimension_numbers = #tpu.dot_dimension_numbers<[1], [0], [0], [1], [0, 0, 1, 1], [], []>} : vector<16x32xf32>, vector<32x32xf32>, vector<16x32xf32> -> vector<16x32xf32>
    %c904 = arith.constant 904 : index
    %c0_110 = arith.constant 0 : index
    %381 = vector.load %arg1[%c904, %c0_110] : memref<1688x128xf32, #tpu.memory_space<vmem>>, vector<1x32xf32>
    %382 = vector.broadcast %381 : vector<1x32xf32> to vector<16x32xf32>
    %383 = arith.addf %380, %382 : vector<16x32xf32>
    %c912 = arith.constant 912 : index
    %c0_111 = arith.constant 0 : index
    %384 = vector.load %arg1[%c912, %c0_111] : memref<1688x128xf32, #tpu.memory_space<vmem>>, vector<32x32xf32>
    %cst_112 = arith.constant dense<0.000000e+00> : vector<16x32xf32>
    %385 = tpu.matmul %281, %384, %cst_112 {dimension_numbers = #tpu.dot_dimension_numbers<[1], [0], [0], [1], [0, 0, 1, 1], [], []>} : vector<16x32xf32>, vector<32x32xf32>, vector<16x32xf32> -> vector<16x32xf32>
    %c944 = arith.constant 944 : index
    %c0_113 = arith.constant 0 : index
    %386 = vector.load %arg1[%c944, %c0_113] : memref<1688x128xf32, #tpu.memory_space<vmem>>, vector<1x32xf32>
    %387 = vector.broadcast %386 : vector<1x32xf32> to vector<16x32xf32>
    %388 = arith.addf %385, %387 : vector<16x32xf32>
    %cst_114 = arith.constant 0.353553385 : f32
    %389 = vector.broadcast %cst_114 : f32 to vector<16x32xf32>
    %390 = arith.mulf %378, %389 : vector<16x32xf32>
    %391 = vector.extract_strided_slice %390 {offsets = [0, 0], sizes = [8, 32], strides = [1, 1]} : vector<16x32xf32> to vector<8x32xf32>
    %392 = vector.extract_strided_slice %390 {offsets = [8, 0], sizes = [8, 32], strides = [1, 1]} : vector<16x32xf32> to vector<8x32xf32>
    %393 = vector.extract_strided_slice %383 {offsets = [0, 0], sizes = [8, 32], strides = [1, 1]} : vector<16x32xf32> to vector<8x32xf32>
    %394 = vector.extract_strided_slice %383 {offsets = [8, 0], sizes = [8, 32], strides = [1, 1]} : vector<16x32xf32> to vector<8x32xf32>
    %395 = vector.extract_strided_slice %388 {offsets = [0, 0], sizes = [8, 32], strides = [1, 1]} : vector<16x32xf32> to vector<8x32xf32>
    %396 = vector.extract_strided_slice %388 {offsets = [8, 0], sizes = [8, 32], strides = [1, 1]} : vector<16x32xf32> to vector<8x32xf32>
    %397 = arith.mulf %391, %393 : vector<8x32xf32>
    %398 = arith.mulf %391, %394 : vector<8x32xf32>
    %399 = arith.mulf %392, %393 : vector<8x32xf32>
    %400 = arith.mulf %392, %394 : vector<8x32xf32>
    %401 = tpu.concatenate %397, %398, %399, %400 in 0 : vector<8x32xf32>, vector<8x32xf32>, vector<8x32xf32>, vector<8x32xf32> -> vector<32x32xf32>
    %cst_115 = arith.constant dense<0.000000e+00> : vector<32x4xf32>
    %402 = tpu.matmul %401, %0, %cst_115 {dimension_numbers = #tpu.dot_dimension_numbers<[1], [0], [0], [1], [0, 0, 1, 1], [], []>} : vector<32x32xf32>, vector<32x4xf32>, vector<32x4xf32> -> vector<32x4xf32>
    %403 = vector.extract_strided_slice %402 {offsets = [0, 0], sizes = [8, 4], strides = [1, 1]} : vector<32x4xf32> to vector<8x4xf32>
    %404 = vector.extract_strided_slice %402 {offsets = [8, 0], sizes = [8, 4], strides = [1, 1]} : vector<32x4xf32> to vector<8x4xf32>
    %405 = arith.maximumf %403, %404 : vector<8x4xf32>
    %406 = arith.subf %403, %405 : vector<8x4xf32>
    %407 = math.exp %406 : vector<8x4xf32>
    %408 = arith.subf %404, %405 : vector<8x4xf32>
    %409 = math.exp %408 : vector<8x4xf32>
    %410 = arith.addf %407, %409 : vector<8x4xf32>
    %411 = tpu.reciprocal %410 {approx = true} : vector<8x4xf32> -> vector<8x4xf32>
    %412 = arith.mulf %407, %411 : vector<8x4xf32>
    %413 = arith.mulf %409, %411 : vector<8x4xf32>
    %414 = vector.extract_strided_slice %402 {offsets = [16, 0], sizes = [8, 4], strides = [1, 1]} : vector<32x4xf32> to vector<8x4xf32>
    %415 = vector.extract_strided_slice %402 {offsets = [24, 0], sizes = [8, 4], strides = [1, 1]} : vector<32x4xf32> to vector<8x4xf32>
    %416 = arith.maximumf %414, %415 : vector<8x4xf32>
    %417 = arith.subf %414, %416 : vector<8x4xf32>
    %418 = math.exp %417 : vector<8x4xf32>
    %419 = arith.subf %415, %416 : vector<8x4xf32>
    %420 = math.exp %419 : vector<8x4xf32>
    %421 = arith.addf %418, %420 : vector<8x4xf32>
    %422 = tpu.reciprocal %421 {approx = true} : vector<8x4xf32> -> vector<8x4xf32>
    %423 = arith.mulf %418, %422 : vector<8x4xf32>
    %424 = arith.mulf %420, %422 : vector<8x4xf32>
    %425 = tpu.concatenate %412, %413, %423, %424 in 0 : vector<8x4xf32>, vector<8x4xf32>, vector<8x4xf32>, vector<8x4xf32> -> vector<32x4xf32>
    %cst_116 = arith.constant dense<0.000000e+00> : vector<32x32xf32>
    %426 = tpu.matmul %425, %1, %cst_116 {dimension_numbers = #tpu.dot_dimension_numbers<[1], [0], [0], [1], [0, 0, 1, 1], [], []>} : vector<32x4xf32>, vector<4x32xf32>, vector<32x32xf32> -> vector<32x32xf32>
    %427 = vector.extract_strided_slice %426 {offsets = [0, 0], sizes = [8, 32], strides = [1, 1]} : vector<32x32xf32> to vector<8x32xf32>
    %428 = arith.mulf %427, %395 : vector<8x32xf32>
    %429 = vector.extract_strided_slice %426 {offsets = [8, 0], sizes = [8, 32], strides = [1, 1]} : vector<32x32xf32> to vector<8x32xf32>
    %430 = arith.mulf %429, %396 : vector<8x32xf32>
    %431 = arith.addf %428, %430 : vector<8x32xf32>
    %432 = vector.extract_strided_slice %426 {offsets = [16, 0], sizes = [8, 32], strides = [1, 1]} : vector<32x32xf32> to vector<8x32xf32>
    %433 = arith.mulf %432, %395 : vector<8x32xf32>
    %434 = vector.extract_strided_slice %426 {offsets = [24, 0], sizes = [8, 32], strides = [1, 1]} : vector<32x32xf32> to vector<8x32xf32>
    %435 = arith.mulf %434, %396 : vector<8x32xf32>
    %436 = arith.addf %433, %435 : vector<8x32xf32>
    %437 = tpu.concatenate %431, %436 in 0 : vector<8x32xf32>, vector<8x32xf32> -> vector<16x32xf32>
    %c952 = arith.constant 952 : index
    %c0_117 = arith.constant 0 : index
    %438 = vector.load %arg1[%c952, %c0_117] : memref<1688x128xf32, #tpu.memory_space<vmem>>, vector<32x32xf32>
    %cst_118 = arith.constant dense<0.000000e+00> : vector<16x32xf32>
    %439 = tpu.matmul %437, %438, %cst_118 {dimension_numbers = #tpu.dot_dimension_numbers<[1], [0], [0], [1], [0, 0, 1, 1], [], []>} : vector<16x32xf32>, vector<32x32xf32>, vector<16x32xf32> -> vector<16x32xf32>
    %c984 = arith.constant 984 : index
    %c0_119 = arith.constant 0 : index
    %440 = vector.load %arg1[%c984, %c0_119] : memref<1688x128xf32, #tpu.memory_space<vmem>>, vector<1x32xf32>
    %441 = vector.broadcast %440 : vector<1x32xf32> to vector<16x32xf32>
    %442 = arith.addf %439, %441 : vector<16x32xf32>
    %443 = arith.addf %373, %442 : vector<16x32xf32>
    %c1008 = arith.constant 1008 : index
    %c0_120 = arith.constant 0 : index
    %444 = vector.load %arg1[%c1008, %c0_120] : memref<1688x128xf32, #tpu.memory_space<vmem>>, vector<1x32xf32>
    %c1016 = arith.constant 1016 : index
    %c0_121 = arith.constant 0 : index
    %445 = vector.load %arg1[%c1016, %c0_121] : memref<1688x128xf32, #tpu.memory_space<vmem>>, vector<1x32xf32>
    %cst_122 = arith.constant dense<0.000000e+00> : vector<16xf32>
    %446 = vector.multi_reduction <add>, %443, %cst_122 [1] : vector<16x32xf32> to vector<16xf32>
    %447 = vector.shape_cast %446 : vector<16xf32> to vector<16x1xf32>
    %cst_123 = arith.constant 3.200000e+01 : f32
    %448 = vector.broadcast %cst_123 : f32 to vector<16x1xf32>
    %449 = arith.divf %447, %448 : vector<16x1xf32>
    %450 = vector.broadcast %449 : vector<16x1xf32> to vector<16x32xf32>
    %451 = arith.subf %443, %450 : vector<16x32xf32>
    %452 = arith.mulf %451, %451 : vector<16x32xf32>
    %cst_124 = arith.constant dense<0.000000e+00> : vector<16xf32>
    %453 = vector.multi_reduction <add>, %452, %cst_124 [1] : vector<16x32xf32> to vector<16xf32>
    %454 = vector.shape_cast %453 : vector<16xf32> to vector<16x1xf32>
    %cst_125 = arith.constant 3.200000e+01 : f32
    %455 = vector.broadcast %cst_125 : f32 to vector<16x1xf32>
    %456 = arith.divf %454, %455 : vector<16x1xf32>
    %cst_126 = arith.constant 9.99999974E-6 : f32
    %457 = vector.broadcast %cst_126 : f32 to vector<16x1xf32>
    %458 = arith.addf %456, %457 : vector<16x1xf32>
    %459 = math.rsqrt %458 : vector<16x1xf32>
    %460 = vector.broadcast %459 : vector<16x1xf32> to vector<16x32xf32>
    %461 = arith.mulf %451, %460 : vector<16x32xf32>
    %462 = vector.broadcast %444 : vector<1x32xf32> to vector<16x32xf32>
    %463 = arith.mulf %461, %462 : vector<16x32xf32>
    %464 = vector.broadcast %445 : vector<1x32xf32> to vector<16x32xf32>
    %465 = arith.addf %463, %464 : vector<16x32xf32>
    %c1040 = arith.constant 1040 : index
    %c0_127 = arith.constant 0 : index
    %466 = vector.load %arg1[%c1040, %c0_127] : memref<1688x128xf32, #tpu.memory_space<vmem>>, vector<32x64xf32>
    %cst_128 = arith.constant dense<0.000000e+00> : vector<16x64xf32>
    %467 = tpu.matmul %465, %466, %cst_128 {dimension_numbers = #tpu.dot_dimension_numbers<[1], [0], [0], [1], [0, 0, 1, 1], [], []>} : vector<16x32xf32>, vector<32x64xf32>, vector<16x64xf32> -> vector<16x64xf32>
    %c1072 = arith.constant 1072 : index
    %c0_129 = arith.constant 0 : index
    %468 = vector.load %arg1[%c1072, %c0_129] : memref<1688x128xf32, #tpu.memory_space<vmem>>, vector<1x64xf32>
    %469 = vector.broadcast %468 : vector<1x64xf32> to vector<16x64xf32>
    %470 = arith.addf %467, %469 : vector<16x64xf32>
    %cst_130 = arith.constant 0.000000e+00 : f32
    %471 = vector.broadcast %cst_130 : f32 to vector<16x64xf32>
    %472 = arith.maximumf %470, %471 : vector<16x64xf32>
    %c1080 = arith.constant 1080 : index
    %c0_131 = arith.constant 0 : index
    %473 = vector.load %arg1[%c1080, %c0_131] : memref<1688x128xf32, #tpu.memory_space<vmem>>, vector<64x32xf32>
    %cst_132 = arith.constant dense<0.000000e+00> : vector<16x32xf32>
    %474 = tpu.matmul %472, %473, %cst_132 {dimension_numbers = #tpu.dot_dimension_numbers<[1], [0], [0], [1], [0, 0, 1, 1], [], []>} : vector<16x64xf32>, vector<64x32xf32>, vector<16x32xf32> -> vector<16x32xf32>
    %c1144 = arith.constant 1144 : index
    %c0_133 = arith.constant 0 : index
    %475 = vector.load %arg1[%c1144, %c0_133] : memref<1688x128xf32, #tpu.memory_space<vmem>>, vector<1x32xf32>
    %476 = vector.broadcast %475 : vector<1x32xf32> to vector<16x32xf32>
    %477 = arith.addf %474, %476 : vector<16x32xf32>
    %478 = arith.addf %465, %477 : vector<16x32xf32>
    %c1024 = arith.constant 1024 : index
    %c0_134 = arith.constant 0 : index
    %479 = vector.load %arg1[%c1024, %c0_134] : memref<1688x128xf32, #tpu.memory_space<vmem>>, vector<1x32xf32>
    %c1032 = arith.constant 1032 : index
    %c0_135 = arith.constant 0 : index
    %480 = vector.load %arg1[%c1032, %c0_135] : memref<1688x128xf32, #tpu.memory_space<vmem>>, vector<1x32xf32>
    %cst_136 = arith.constant dense<0.000000e+00> : vector<16xf32>
    %481 = vector.multi_reduction <add>, %478, %cst_136 [1] : vector<16x32xf32> to vector<16xf32>
    %482 = vector.shape_cast %481 : vector<16xf32> to vector<16x1xf32>
    %cst_137 = arith.constant 3.200000e+01 : f32
    %483 = vector.broadcast %cst_137 : f32 to vector<16x1xf32>
    %484 = arith.divf %482, %483 : vector<16x1xf32>
    %485 = vector.broadcast %484 : vector<16x1xf32> to vector<16x32xf32>
    %486 = arith.subf %478, %485 : vector<16x32xf32>
    %487 = arith.mulf %486, %486 : vector<16x32xf32>
    %cst_138 = arith.constant dense<0.000000e+00> : vector<16xf32>
    %488 = vector.multi_reduction <add>, %487, %cst_138 [1] : vector<16x32xf32> to vector<16xf32>
    %489 = vector.shape_cast %488 : vector<16xf32> to vector<16x1xf32>
    %cst_139 = arith.constant 3.200000e+01 : f32
    %490 = vector.broadcast %cst_139 : f32 to vector<16x1xf32>
    %491 = arith.divf %489, %490 : vector<16x1xf32>
    %cst_140 = arith.constant 9.99999974E-6 : f32
    %492 = vector.broadcast %cst_140 : f32 to vector<16x1xf32>
    %493 = arith.addf %491, %492 : vector<16x1xf32>
    %494 = math.rsqrt %493 : vector<16x1xf32>
    %495 = vector.broadcast %494 : vector<16x1xf32> to vector<16x32xf32>
    %496 = arith.mulf %486, %495 : vector<16x32xf32>
    %497 = vector.broadcast %479 : vector<1x32xf32> to vector<16x32xf32>
    %498 = arith.mulf %496, %497 : vector<16x32xf32>
    %499 = vector.broadcast %480 : vector<1x32xf32> to vector<16x32xf32>
    %500 = arith.addf %498, %499 : vector<16x32xf32>
    %c1152 = arith.constant 1152 : index
    %c0_141 = arith.constant 0 : index
    %501 = vector.load %arg1[%c1152, %c0_141] : memref<1688x128xf32, #tpu.memory_space<vmem>>, vector<32x32xf32>
    %cst_142 = arith.constant dense<0.000000e+00> : vector<16x32xf32>
    %502 = tpu.matmul %500, %501, %cst_142 {dimension_numbers = #tpu.dot_dimension_numbers<[1], [0], [0], [1], [0, 0, 1, 1], [], []>} : vector<16x32xf32>, vector<32x32xf32>, vector<16x32xf32> -> vector<16x32xf32>
    %c1184 = arith.constant 1184 : index
    %c0_143 = arith.constant 0 : index
    %503 = vector.load %arg1[%c1184, %c0_143] : memref<1688x128xf32, #tpu.memory_space<vmem>>, vector<1x32xf32>
    %504 = vector.broadcast %503 : vector<1x32xf32> to vector<16x32xf32>
    %505 = arith.addf %502, %504 : vector<16x32xf32>
    %c1192 = arith.constant 1192 : index
    %c0_144 = arith.constant 0 : index
    %506 = vector.load %arg1[%c1192, %c0_144] : memref<1688x128xf32, #tpu.memory_space<vmem>>, vector<32x32xf32>
    %cst_145 = arith.constant dense<0.000000e+00> : vector<16x32xf32>
    %507 = tpu.matmul %500, %506, %cst_145 {dimension_numbers = #tpu.dot_dimension_numbers<[1], [0], [0], [1], [0, 0, 1, 1], [], []>} : vector<16x32xf32>, vector<32x32xf32>, vector<16x32xf32> -> vector<16x32xf32>
    %c1224 = arith.constant 1224 : index
    %c0_146 = arith.constant 0 : index
    %508 = vector.load %arg1[%c1224, %c0_146] : memref<1688x128xf32, #tpu.memory_space<vmem>>, vector<1x32xf32>
    %509 = vector.broadcast %508 : vector<1x32xf32> to vector<16x32xf32>
    %510 = arith.addf %507, %509 : vector<16x32xf32>
    %c1232 = arith.constant 1232 : index
    %c0_147 = arith.constant 0 : index
    %511 = vector.load %arg1[%c1232, %c0_147] : memref<1688x128xf32, #tpu.memory_space<vmem>>, vector<32x32xf32>
    %cst_148 = arith.constant dense<0.000000e+00> : vector<16x32xf32>
    %512 = tpu.matmul %500, %511, %cst_148 {dimension_numbers = #tpu.dot_dimension_numbers<[1], [0], [0], [1], [0, 0, 1, 1], [], []>} : vector<16x32xf32>, vector<32x32xf32>, vector<16x32xf32> -> vector<16x32xf32>
    %c1264 = arith.constant 1264 : index
    %c0_149 = arith.constant 0 : index
    %513 = vector.load %arg1[%c1264, %c0_149] : memref<1688x128xf32, #tpu.memory_space<vmem>>, vector<1x32xf32>
    %514 = vector.broadcast %513 : vector<1x32xf32> to vector<16x32xf32>
    %515 = arith.addf %512, %514 : vector<16x32xf32>
    %cst_150 = arith.constant 0.353553385 : f32
    %516 = vector.broadcast %cst_150 : f32 to vector<16x32xf32>
    %517 = arith.mulf %505, %516 : vector<16x32xf32>
    %518 = vector.extract_strided_slice %517 {offsets = [0, 0], sizes = [8, 32], strides = [1, 1]} : vector<16x32xf32> to vector<8x32xf32>
    %519 = vector.extract_strided_slice %517 {offsets = [8, 0], sizes = [8, 32], strides = [1, 1]} : vector<16x32xf32> to vector<8x32xf32>
    %520 = vector.extract_strided_slice %510 {offsets = [0, 0], sizes = [8, 32], strides = [1, 1]} : vector<16x32xf32> to vector<8x32xf32>
    %521 = vector.extract_strided_slice %510 {offsets = [8, 0], sizes = [8, 32], strides = [1, 1]} : vector<16x32xf32> to vector<8x32xf32>
    %522 = vector.extract_strided_slice %515 {offsets = [0, 0], sizes = [8, 32], strides = [1, 1]} : vector<16x32xf32> to vector<8x32xf32>
    %523 = vector.extract_strided_slice %515 {offsets = [8, 0], sizes = [8, 32], strides = [1, 1]} : vector<16x32xf32> to vector<8x32xf32>
    %524 = arith.mulf %518, %520 : vector<8x32xf32>
    %525 = arith.mulf %518, %521 : vector<8x32xf32>
    %526 = arith.mulf %519, %520 : vector<8x32xf32>
    %527 = arith.mulf %519, %521 : vector<8x32xf32>
    %528 = tpu.concatenate %524, %525, %526, %527 in 0 : vector<8x32xf32>, vector<8x32xf32>, vector<8x32xf32>, vector<8x32xf32> -> vector<32x32xf32>
    %cst_151 = arith.constant dense<0.000000e+00> : vector<32x4xf32>
    %529 = tpu.matmul %528, %0, %cst_151 {dimension_numbers = #tpu.dot_dimension_numbers<[1], [0], [0], [1], [0, 0, 1, 1], [], []>} : vector<32x32xf32>, vector<32x4xf32>, vector<32x4xf32> -> vector<32x4xf32>
    %530 = vector.extract_strided_slice %529 {offsets = [0, 0], sizes = [8, 4], strides = [1, 1]} : vector<32x4xf32> to vector<8x4xf32>
    %531 = vector.extract_strided_slice %529 {offsets = [8, 0], sizes = [8, 4], strides = [1, 1]} : vector<32x4xf32> to vector<8x4xf32>
    %532 = arith.maximumf %530, %531 : vector<8x4xf32>
    %533 = arith.subf %530, %532 : vector<8x4xf32>
    %534 = math.exp %533 : vector<8x4xf32>
    %535 = arith.subf %531, %532 : vector<8x4xf32>
    %536 = math.exp %535 : vector<8x4xf32>
    %537 = arith.addf %534, %536 : vector<8x4xf32>
    %538 = tpu.reciprocal %537 {approx = true} : vector<8x4xf32> -> vector<8x4xf32>
    %539 = arith.mulf %534, %538 : vector<8x4xf32>
    %540 = arith.mulf %536, %538 : vector<8x4xf32>
    %541 = vector.extract_strided_slice %529 {offsets = [16, 0], sizes = [8, 4], strides = [1, 1]} : vector<32x4xf32> to vector<8x4xf32>
    %542 = vector.extract_strided_slice %529 {offsets = [24, 0], sizes = [8, 4], strides = [1, 1]} : vector<32x4xf32> to vector<8x4xf32>
    %543 = arith.maximumf %541, %542 : vector<8x4xf32>
    %544 = arith.subf %541, %543 : vector<8x4xf32>
    %545 = math.exp %544 : vector<8x4xf32>
    %546 = arith.subf %542, %543 : vector<8x4xf32>
    %547 = math.exp %546 : vector<8x4xf32>
    %548 = arith.addf %545, %547 : vector<8x4xf32>
    %549 = tpu.reciprocal %548 {approx = true} : vector<8x4xf32> -> vector<8x4xf32>
    %550 = arith.mulf %545, %549 : vector<8x4xf32>
    %551 = arith.mulf %547, %549 : vector<8x4xf32>
    %552 = tpu.concatenate %539, %540, %550, %551 in 0 : vector<8x4xf32>, vector<8x4xf32>, vector<8x4xf32>, vector<8x4xf32> -> vector<32x4xf32>
    %cst_152 = arith.constant dense<0.000000e+00> : vector<32x32xf32>
    %553 = tpu.matmul %552, %1, %cst_152 {dimension_numbers = #tpu.dot_dimension_numbers<[1], [0], [0], [1], [0, 0, 1, 1], [], []>} : vector<32x4xf32>, vector<4x32xf32>, vector<32x32xf32> -> vector<32x32xf32>
    %554 = vector.extract_strided_slice %553 {offsets = [0, 0], sizes = [8, 32], strides = [1, 1]} : vector<32x32xf32> to vector<8x32xf32>
    %555 = arith.mulf %554, %522 : vector<8x32xf32>
    %556 = vector.extract_strided_slice %553 {offsets = [8, 0], sizes = [8, 32], strides = [1, 1]} : vector<32x32xf32> to vector<8x32xf32>
    %557 = arith.mulf %556, %523 : vector<8x32xf32>
    %558 = arith.addf %555, %557 : vector<8x32xf32>
    %559 = vector.extract_strided_slice %553 {offsets = [16, 0], sizes = [8, 32], strides = [1, 1]} : vector<32x32xf32> to vector<8x32xf32>
    %560 = arith.mulf %559, %522 : vector<8x32xf32>
    %561 = vector.extract_strided_slice %553 {offsets = [24, 0], sizes = [8, 32], strides = [1, 1]} : vector<32x32xf32> to vector<8x32xf32>
    %562 = arith.mulf %561, %523 : vector<8x32xf32>
    %563 = arith.addf %560, %562 : vector<8x32xf32>
    %564 = tpu.concatenate %558, %563 in 0 : vector<8x32xf32>, vector<8x32xf32> -> vector<16x32xf32>
    %c1272 = arith.constant 1272 : index
    %c0_153 = arith.constant 0 : index
    %565 = vector.load %arg1[%c1272, %c0_153] : memref<1688x128xf32, #tpu.memory_space<vmem>>, vector<32x32xf32>
    %cst_154 = arith.constant dense<0.000000e+00> : vector<16x32xf32>
    %566 = tpu.matmul %564, %565, %cst_154 {dimension_numbers = #tpu.dot_dimension_numbers<[1], [0], [0], [1], [0, 0, 1, 1], [], []>} : vector<16x32xf32>, vector<32x32xf32>, vector<16x32xf32> -> vector<16x32xf32>
    %c1304 = arith.constant 1304 : index
    %c0_155 = arith.constant 0 : index
    %567 = vector.load %arg1[%c1304, %c0_155] : memref<1688x128xf32, #tpu.memory_space<vmem>>, vector<1x32xf32>
    %568 = vector.broadcast %567 : vector<1x32xf32> to vector<16x32xf32>
    %569 = arith.addf %566, %568 : vector<16x32xf32>
    %570 = arith.addf %500, %569 : vector<16x32xf32>
    %c1472 = arith.constant 1472 : index
    %c0_156 = arith.constant 0 : index
    %571 = vector.load %arg1[%c1472, %c0_156] : memref<1688x128xf32, #tpu.memory_space<vmem>>, vector<1x32xf32>
    %c1480 = arith.constant 1480 : index
    %c0_157 = arith.constant 0 : index
    %572 = vector.load %arg1[%c1480, %c0_157] : memref<1688x128xf32, #tpu.memory_space<vmem>>, vector<1x32xf32>
    %cst_158 = arith.constant dense<0.000000e+00> : vector<16xf32>
    %573 = vector.multi_reduction <add>, %570, %cst_158 [1] : vector<16x32xf32> to vector<16xf32>
    %574 = vector.shape_cast %573 : vector<16xf32> to vector<16x1xf32>
    %cst_159 = arith.constant 3.200000e+01 : f32
    %575 = vector.broadcast %cst_159 : f32 to vector<16x1xf32>
    %576 = arith.divf %574, %575 : vector<16x1xf32>
    %577 = vector.broadcast %576 : vector<16x1xf32> to vector<16x32xf32>
    %578 = arith.subf %570, %577 : vector<16x32xf32>
    %579 = arith.mulf %578, %578 : vector<16x32xf32>
    %cst_160 = arith.constant dense<0.000000e+00> : vector<16xf32>
    %580 = vector.multi_reduction <add>, %579, %cst_160 [1] : vector<16x32xf32> to vector<16xf32>
    %581 = vector.shape_cast %580 : vector<16xf32> to vector<16x1xf32>
    %cst_161 = arith.constant 3.200000e+01 : f32
    %582 = vector.broadcast %cst_161 : f32 to vector<16x1xf32>
    %583 = arith.divf %581, %582 : vector<16x1xf32>
    %cst_162 = arith.constant 9.99999974E-6 : f32
    %584 = vector.broadcast %cst_162 : f32 to vector<16x1xf32>
    %585 = arith.addf %583, %584 : vector<16x1xf32>
    %586 = math.rsqrt %585 : vector<16x1xf32>
    %587 = vector.broadcast %586 : vector<16x1xf32> to vector<16x32xf32>
    %588 = arith.mulf %578, %587 : vector<16x32xf32>
    %589 = vector.broadcast %571 : vector<1x32xf32> to vector<16x32xf32>
    %590 = arith.mulf %588, %589 : vector<16x32xf32>
    %591 = vector.broadcast %572 : vector<1x32xf32> to vector<16x32xf32>
    %592 = arith.addf %590, %591 : vector<16x32xf32>
    %c1312 = arith.constant 1312 : index
    %c0_163 = arith.constant 0 : index
    %593 = vector.load %arg1[%c1312, %c0_163] : memref<1688x128xf32, #tpu.memory_space<vmem>>, vector<32x32xf32>
    %cst_164 = arith.constant dense<0.000000e+00> : vector<16x32xf32>
    %594 = tpu.matmul %592, %593, %cst_164 {dimension_numbers = #tpu.dot_dimension_numbers<[1], [0], [0], [1], [0, 0, 1, 1], [], []>} : vector<16x32xf32>, vector<32x32xf32>, vector<16x32xf32> -> vector<16x32xf32>
    %c1344 = arith.constant 1344 : index
    %c0_165 = arith.constant 0 : index
    %595 = vector.load %arg1[%c1344, %c0_165] : memref<1688x128xf32, #tpu.memory_space<vmem>>, vector<1x32xf32>
    %596 = vector.broadcast %595 : vector<1x32xf32> to vector<16x32xf32>
    %597 = arith.addf %594, %596 : vector<16x32xf32>
    %c1352 = arith.constant 1352 : index
    %c0_166 = arith.constant 0 : index
    %598 = vector.load %arg1[%c1352, %c0_166] : memref<1688x128xf32, #tpu.memory_space<vmem>>, vector<32x32xf32>
    %cst_167 = arith.constant dense<0.000000e+00> : vector<16x32xf32>
    %599 = tpu.matmul %281, %598, %cst_167 {dimension_numbers = #tpu.dot_dimension_numbers<[1], [0], [0], [1], [0, 0, 1, 1], [], []>} : vector<16x32xf32>, vector<32x32xf32>, vector<16x32xf32> -> vector<16x32xf32>
    %c1384 = arith.constant 1384 : index
    %c0_168 = arith.constant 0 : index
    %600 = vector.load %arg1[%c1384, %c0_168] : memref<1688x128xf32, #tpu.memory_space<vmem>>, vector<1x32xf32>
    %601 = vector.broadcast %600 : vector<1x32xf32> to vector<16x32xf32>
    %602 = arith.addf %599, %601 : vector<16x32xf32>
    %c1392 = arith.constant 1392 : index
    %c0_169 = arith.constant 0 : index
    %603 = vector.load %arg1[%c1392, %c0_169] : memref<1688x128xf32, #tpu.memory_space<vmem>>, vector<32x32xf32>
    %cst_170 = arith.constant dense<0.000000e+00> : vector<16x32xf32>
    %604 = tpu.matmul %281, %603, %cst_170 {dimension_numbers = #tpu.dot_dimension_numbers<[1], [0], [0], [1], [0, 0, 1, 1], [], []>} : vector<16x32xf32>, vector<32x32xf32>, vector<16x32xf32> -> vector<16x32xf32>
    %c1424 = arith.constant 1424 : index
    %c0_171 = arith.constant 0 : index
    %605 = vector.load %arg1[%c1424, %c0_171] : memref<1688x128xf32, #tpu.memory_space<vmem>>, vector<1x32xf32>
    %606 = vector.broadcast %605 : vector<1x32xf32> to vector<16x32xf32>
    %607 = arith.addf %604, %606 : vector<16x32xf32>
    %cst_172 = arith.constant 0.353553385 : f32
    %608 = vector.broadcast %cst_172 : f32 to vector<16x32xf32>
    %609 = arith.mulf %597, %608 : vector<16x32xf32>
    %610 = vector.extract_strided_slice %609 {offsets = [0, 0], sizes = [8, 32], strides = [1, 1]} : vector<16x32xf32> to vector<8x32xf32>
    %611 = vector.extract_strided_slice %609 {offsets = [8, 0], sizes = [8, 32], strides = [1, 1]} : vector<16x32xf32> to vector<8x32xf32>
    %612 = vector.extract_strided_slice %602 {offsets = [0, 0], sizes = [8, 32], strides = [1, 1]} : vector<16x32xf32> to vector<8x32xf32>
    %613 = vector.extract_strided_slice %602 {offsets = [8, 0], sizes = [8, 32], strides = [1, 1]} : vector<16x32xf32> to vector<8x32xf32>
    %614 = vector.extract_strided_slice %607 {offsets = [0, 0], sizes = [8, 32], strides = [1, 1]} : vector<16x32xf32> to vector<8x32xf32>
    %615 = vector.extract_strided_slice %607 {offsets = [8, 0], sizes = [8, 32], strides = [1, 1]} : vector<16x32xf32> to vector<8x32xf32>
    %616 = arith.mulf %610, %612 : vector<8x32xf32>
    %617 = arith.mulf %610, %613 : vector<8x32xf32>
    %618 = arith.mulf %611, %612 : vector<8x32xf32>
    %619 = arith.mulf %611, %613 : vector<8x32xf32>
    %620 = tpu.concatenate %616, %617, %618, %619 in 0 : vector<8x32xf32>, vector<8x32xf32>, vector<8x32xf32>, vector<8x32xf32> -> vector<32x32xf32>
    %cst_173 = arith.constant dense<0.000000e+00> : vector<32x4xf32>
    %621 = tpu.matmul %620, %0, %cst_173 {dimension_numbers = #tpu.dot_dimension_numbers<[1], [0], [0], [1], [0, 0, 1, 1], [], []>} : vector<32x32xf32>, vector<32x4xf32>, vector<32x4xf32> -> vector<32x4xf32>
    %622 = vector.extract_strided_slice %621 {offsets = [0, 0], sizes = [8, 4], strides = [1, 1]} : vector<32x4xf32> to vector<8x4xf32>
    %623 = vector.extract_strided_slice %621 {offsets = [8, 0], sizes = [8, 4], strides = [1, 1]} : vector<32x4xf32> to vector<8x4xf32>
    %624 = arith.maximumf %622, %623 : vector<8x4xf32>
    %625 = arith.subf %622, %624 : vector<8x4xf32>
    %626 = math.exp %625 : vector<8x4xf32>
    %627 = arith.subf %623, %624 : vector<8x4xf32>
    %628 = math.exp %627 : vector<8x4xf32>
    %629 = arith.addf %626, %628 : vector<8x4xf32>
    %630 = tpu.reciprocal %629 {approx = true} : vector<8x4xf32> -> vector<8x4xf32>
    %631 = arith.mulf %626, %630 : vector<8x4xf32>
    %632 = arith.mulf %628, %630 : vector<8x4xf32>
    %633 = vector.extract_strided_slice %621 {offsets = [16, 0], sizes = [8, 4], strides = [1, 1]} : vector<32x4xf32> to vector<8x4xf32>
    %634 = vector.extract_strided_slice %621 {offsets = [24, 0], sizes = [8, 4], strides = [1, 1]} : vector<32x4xf32> to vector<8x4xf32>
    %635 = arith.maximumf %633, %634 : vector<8x4xf32>
    %636 = arith.subf %633, %635 : vector<8x4xf32>
    %637 = math.exp %636 : vector<8x4xf32>
    %638 = arith.subf %634, %635 : vector<8x4xf32>
    %639 = math.exp %638 : vector<8x4xf32>
    %640 = arith.addf %637, %639 : vector<8x4xf32>
    %641 = tpu.reciprocal %640 {approx = true} : vector<8x4xf32> -> vector<8x4xf32>
    %642 = arith.mulf %637, %641 : vector<8x4xf32>
    %643 = arith.mulf %639, %641 : vector<8x4xf32>
    %644 = tpu.concatenate %631, %632, %642, %643 in 0 : vector<8x4xf32>, vector<8x4xf32>, vector<8x4xf32>, vector<8x4xf32> -> vector<32x4xf32>
    %cst_174 = arith.constant dense<0.000000e+00> : vector<32x32xf32>
    %645 = tpu.matmul %644, %1, %cst_174 {dimension_numbers = #tpu.dot_dimension_numbers<[1], [0], [0], [1], [0, 0, 1, 1], [], []>} : vector<32x4xf32>, vector<4x32xf32>, vector<32x32xf32> -> vector<32x32xf32>
    %646 = vector.extract_strided_slice %645 {offsets = [0, 0], sizes = [8, 32], strides = [1, 1]} : vector<32x32xf32> to vector<8x32xf32>
    %647 = arith.mulf %646, %614 : vector<8x32xf32>
    %648 = vector.extract_strided_slice %645 {offsets = [8, 0], sizes = [8, 32], strides = [1, 1]} : vector<32x32xf32> to vector<8x32xf32>
    %649 = arith.mulf %648, %615 : vector<8x32xf32>
    %650 = arith.addf %647, %649 : vector<8x32xf32>
    %651 = vector.extract_strided_slice %645 {offsets = [16, 0], sizes = [8, 32], strides = [1, 1]} : vector<32x32xf32> to vector<8x32xf32>
    %652 = arith.mulf %651, %614 : vector<8x32xf32>
    %653 = vector.extract_strided_slice %645 {offsets = [24, 0], sizes = [8, 32], strides = [1, 1]} : vector<32x32xf32> to vector<8x32xf32>
    %654 = arith.mulf %653, %615 : vector<8x32xf32>
    %655 = arith.addf %652, %654 : vector<8x32xf32>
    %656 = tpu.concatenate %650, %655 in 0 : vector<8x32xf32>, vector<8x32xf32> -> vector<16x32xf32>
    %c1432 = arith.constant 1432 : index
    %c0_175 = arith.constant 0 : index
    %657 = vector.load %arg1[%c1432, %c0_175] : memref<1688x128xf32, #tpu.memory_space<vmem>>, vector<32x32xf32>
    %cst_176 = arith.constant dense<0.000000e+00> : vector<16x32xf32>
    %658 = tpu.matmul %656, %657, %cst_176 {dimension_numbers = #tpu.dot_dimension_numbers<[1], [0], [0], [1], [0, 0, 1, 1], [], []>} : vector<16x32xf32>, vector<32x32xf32>, vector<16x32xf32> -> vector<16x32xf32>
    %c1464 = arith.constant 1464 : index
    %c0_177 = arith.constant 0 : index
    %659 = vector.load %arg1[%c1464, %c0_177] : memref<1688x128xf32, #tpu.memory_space<vmem>>, vector<1x32xf32>
    %660 = vector.broadcast %659 : vector<1x32xf32> to vector<16x32xf32>
    %661 = arith.addf %658, %660 : vector<16x32xf32>
    %662 = arith.addf %592, %661 : vector<16x32xf32>
    %c1488 = arith.constant 1488 : index
    %c0_178 = arith.constant 0 : index
    %663 = vector.load %arg1[%c1488, %c0_178] : memref<1688x128xf32, #tpu.memory_space<vmem>>, vector<1x32xf32>
    %c1496 = arith.constant 1496 : index
    %c0_179 = arith.constant 0 : index
    %664 = vector.load %arg1[%c1496, %c0_179] : memref<1688x128xf32, #tpu.memory_space<vmem>>, vector<1x32xf32>
    %cst_180 = arith.constant dense<0.000000e+00> : vector<16xf32>
    %665 = vector.multi_reduction <add>, %662, %cst_180 [1] : vector<16x32xf32> to vector<16xf32>
    %666 = vector.shape_cast %665 : vector<16xf32> to vector<16x1xf32>
    %cst_181 = arith.constant 3.200000e+01 : f32
    %667 = vector.broadcast %cst_181 : f32 to vector<16x1xf32>
    %668 = arith.divf %666, %667 : vector<16x1xf32>
    %669 = vector.broadcast %668 : vector<16x1xf32> to vector<16x32xf32>
    %670 = arith.subf %662, %669 : vector<16x32xf32>
    %671 = arith.mulf %670, %670 : vector<16x32xf32>
    %cst_182 = arith.constant dense<0.000000e+00> : vector<16xf32>
    %672 = vector.multi_reduction <add>, %671, %cst_182 [1] : vector<16x32xf32> to vector<16xf32>
    %673 = vector.shape_cast %672 : vector<16xf32> to vector<16x1xf32>
    %cst_183 = arith.constant 3.200000e+01 : f32
    %674 = vector.broadcast %cst_183 : f32 to vector<16x1xf32>
    %675 = arith.divf %673, %674 : vector<16x1xf32>
    %cst_184 = arith.constant 9.99999974E-6 : f32
    %676 = vector.broadcast %cst_184 : f32 to vector<16x1xf32>
    %677 = arith.addf %675, %676 : vector<16x1xf32>
    %678 = math.rsqrt %677 : vector<16x1xf32>
    %679 = vector.broadcast %678 : vector<16x1xf32> to vector<16x32xf32>
    %680 = arith.mulf %670, %679 : vector<16x32xf32>
    %681 = vector.broadcast %663 : vector<1x32xf32> to vector<16x32xf32>
    %682 = arith.mulf %680, %681 : vector<16x32xf32>
    %683 = vector.broadcast %664 : vector<1x32xf32> to vector<16x32xf32>
    %684 = arith.addf %682, %683 : vector<16x32xf32>
    %c1520 = arith.constant 1520 : index
    %c0_185 = arith.constant 0 : index
    %685 = vector.load %arg1[%c1520, %c0_185] : memref<1688x128xf32, #tpu.memory_space<vmem>>, vector<32x64xf32>
    %cst_186 = arith.constant dense<0.000000e+00> : vector<16x64xf32>
    %686 = tpu.matmul %684, %685, %cst_186 {dimension_numbers = #tpu.dot_dimension_numbers<[1], [0], [0], [1], [0, 0, 1, 1], [], []>} : vector<16x32xf32>, vector<32x64xf32>, vector<16x64xf32> -> vector<16x64xf32>
    %c1552 = arith.constant 1552 : index
    %c0_187 = arith.constant 0 : index
    %687 = vector.load %arg1[%c1552, %c0_187] : memref<1688x128xf32, #tpu.memory_space<vmem>>, vector<1x64xf32>
    %688 = vector.broadcast %687 : vector<1x64xf32> to vector<16x64xf32>
    %689 = arith.addf %686, %688 : vector<16x64xf32>
    %cst_188 = arith.constant 0.000000e+00 : f32
    %690 = vector.broadcast %cst_188 : f32 to vector<16x64xf32>
    %691 = arith.maximumf %689, %690 : vector<16x64xf32>
    %c1560 = arith.constant 1560 : index
    %c0_189 = arith.constant 0 : index
    %692 = vector.load %arg1[%c1560, %c0_189] : memref<1688x128xf32, #tpu.memory_space<vmem>>, vector<64x32xf32>
    %cst_190 = arith.constant dense<0.000000e+00> : vector<16x32xf32>
    %693 = tpu.matmul %691, %692, %cst_190 {dimension_numbers = #tpu.dot_dimension_numbers<[1], [0], [0], [1], [0, 0, 1, 1], [], []>} : vector<16x64xf32>, vector<64x32xf32>, vector<16x32xf32> -> vector<16x32xf32>
    %c1624 = arith.constant 1624 : index
    %c0_191 = arith.constant 0 : index
    %694 = vector.load %arg1[%c1624, %c0_191] : memref<1688x128xf32, #tpu.memory_space<vmem>>, vector<1x32xf32>
    %695 = vector.broadcast %694 : vector<1x32xf32> to vector<16x32xf32>
    %696 = arith.addf %693, %695 : vector<16x32xf32>
    %697 = arith.addf %684, %696 : vector<16x32xf32>
    %c1504 = arith.constant 1504 : index
    %c0_192 = arith.constant 0 : index
    %698 = vector.load %arg1[%c1504, %c0_192] : memref<1688x128xf32, #tpu.memory_space<vmem>>, vector<1x32xf32>
    %c1512 = arith.constant 1512 : index
    %c0_193 = arith.constant 0 : index
    %699 = vector.load %arg1[%c1512, %c0_193] : memref<1688x128xf32, #tpu.memory_space<vmem>>, vector<1x32xf32>
    %cst_194 = arith.constant dense<0.000000e+00> : vector<16xf32>
    %700 = vector.multi_reduction <add>, %697, %cst_194 [1] : vector<16x32xf32> to vector<16xf32>
    %701 = vector.shape_cast %700 : vector<16xf32> to vector<16x1xf32>
    %cst_195 = arith.constant 3.200000e+01 : f32
    %702 = vector.broadcast %cst_195 : f32 to vector<16x1xf32>
    %703 = arith.divf %701, %702 : vector<16x1xf32>
    %704 = vector.broadcast %703 : vector<16x1xf32> to vector<16x32xf32>
    %705 = arith.subf %697, %704 : vector<16x32xf32>
    %706 = arith.mulf %705, %705 : vector<16x32xf32>
    %cst_196 = arith.constant dense<0.000000e+00> : vector<16xf32>
    %707 = vector.multi_reduction <add>, %706, %cst_196 [1] : vector<16x32xf32> to vector<16xf32>
    %708 = vector.shape_cast %707 : vector<16xf32> to vector<16x1xf32>
    %cst_197 = arith.constant 3.200000e+01 : f32
    %709 = vector.broadcast %cst_197 : f32 to vector<16x1xf32>
    %710 = arith.divf %708, %709 : vector<16x1xf32>
    %cst_198 = arith.constant 9.99999974E-6 : f32
    %711 = vector.broadcast %cst_198 : f32 to vector<16x1xf32>
    %712 = arith.addf %710, %711 : vector<16x1xf32>
    %713 = math.rsqrt %712 : vector<16x1xf32>
    %714 = vector.broadcast %713 : vector<16x1xf32> to vector<16x32xf32>
    %715 = arith.mulf %705, %714 : vector<16x32xf32>
    %716 = vector.broadcast %698 : vector<1x32xf32> to vector<16x32xf32>
    %717 = arith.mulf %715, %716 : vector<16x32xf32>
    %718 = vector.broadcast %699 : vector<1x32xf32> to vector<16x32xf32>
    %719 = arith.addf %717, %718 : vector<16x32xf32>
    %c1632 = arith.constant 1632 : index
    %c0_199 = arith.constant 0 : index
    %720 = vector.load %arg1[%c1632, %c0_199] : memref<1688x128xf32, #tpu.memory_space<vmem>>, vector<1x32xf32>
    %c1640 = arith.constant 1640 : index
    %c0_200 = arith.constant 0 : index
    %721 = vector.load %arg1[%c1640, %c0_200] : memref<1688x128xf32, #tpu.memory_space<vmem>>, vector<1x32xf32>
    %cst_201 = arith.constant dense<0.000000e+00> : vector<16xf32>
    %722 = vector.multi_reduction <add>, %719, %cst_201 [1] : vector<16x32xf32> to vector<16xf32>
    %723 = vector.shape_cast %722 : vector<16xf32> to vector<16x1xf32>
    %cst_202 = arith.constant 3.200000e+01 : f32
    %724 = vector.broadcast %cst_202 : f32 to vector<16x1xf32>
    %725 = arith.divf %723, %724 : vector<16x1xf32>
    %726 = vector.broadcast %725 : vector<16x1xf32> to vector<16x32xf32>
    %727 = arith.subf %719, %726 : vector<16x32xf32>
    %728 = arith.mulf %727, %727 : vector<16x32xf32>
    %cst_203 = arith.constant dense<0.000000e+00> : vector<16xf32>
    %729 = vector.multi_reduction <add>, %728, %cst_203 [1] : vector<16x32xf32> to vector<16xf32>
    %730 = vector.shape_cast %729 : vector<16xf32> to vector<16x1xf32>
    %cst_204 = arith.constant 3.200000e+01 : f32
    %731 = vector.broadcast %cst_204 : f32 to vector<16x1xf32>
    %732 = arith.divf %730, %731 : vector<16x1xf32>
    %cst_205 = arith.constant 9.99999974E-6 : f32
    %733 = vector.broadcast %cst_205 : f32 to vector<16x1xf32>
    %734 = arith.addf %732, %733 : vector<16x1xf32>
    %735 = math.rsqrt %734 : vector<16x1xf32>
    %736 = vector.broadcast %735 : vector<16x1xf32> to vector<16x32xf32>
    %737 = arith.mulf %727, %736 : vector<16x32xf32>
    %738 = vector.broadcast %720 : vector<1x32xf32> to vector<16x32xf32>
    %739 = arith.mulf %737, %738 : vector<16x32xf32>
    %740 = vector.broadcast %721 : vector<1x32xf32> to vector<16x32xf32>
    %741 = arith.addf %739, %740 : vector<16x32xf32>
    %742 = vector.extract_strided_slice %741 {offsets = [7, 0], sizes = [1, 32], strides = [1, 1]} : vector<16x32xf32> to vector<1x32xf32>
    %743 = vector.extract_strided_slice %741 {offsets = [15, 0], sizes = [1, 32], strides = [1, 1]} : vector<16x32xf32> to vector<1x32xf32>
    %744 = tpu.concatenate %742, %743 in 0 : vector<1x32xf32>, vector<1x32xf32> -> vector<2x32xf32>
    %c1648 = arith.constant 1648 : index
    %c0_206 = arith.constant 0 : index
    %745 = vector.load %arg1[%c1648, %c0_206] : memref<1688x128xf32, #tpu.memory_space<vmem>>, vector<32x8xf32>
    %cst_207 = arith.constant dense<0.000000e+00> : vector<2x8xf32>
    %746 = tpu.matmul %744, %745, %cst_207 {dimension_numbers = #tpu.dot_dimension_numbers<[1], [0], [0], [1], [0, 0, 1, 1], [], []>} : vector<2x32xf32>, vector<32x8xf32>, vector<2x8xf32> -> vector<2x8xf32>
    %c1680 = arith.constant 1680 : index
    %c0_208 = arith.constant 0 : index
    %747 = vector.load %arg1[%c1680, %c0_208] : memref<1688x128xf32, #tpu.memory_space<vmem>>, vector<1x8xf32>
    %748 = vector.broadcast %747 : vector<1x8xf32> to vector<2x8xf32>
    %749 = arith.addf %746, %748 : vector<2x8xf32>
    %cst_209 = arith.constant 0.000000e+00 : f32
    %750 = vector.broadcast %cst_209 : f32 to vector<2x8xf32>
    %751 = arith.subf %750, %749 : vector<2x8xf32>
    %752 = math.exp %751 : vector<2x8xf32>
    %cst_210 = arith.constant 1.000000e+00 : f32
    %753 = vector.broadcast %cst_210 : f32 to vector<2x8xf32>
    %754 = arith.addf %753, %752 : vector<2x8xf32>
    %cst_211 = arith.constant 1.000000e+00 : f32
    %755 = vector.broadcast %cst_211 : f32 to vector<2x8xf32>
    %756 = arith.divf %755, %754 : vector<2x8xf32>
    %c0_212 = arith.constant 0 : index
    %c0_213 = arith.constant 0 : index
    %757 = vector.load %arg2[%c0_212, %c0_213] : memref<2x8xf32, #tpu.memory_space<vmem>>, vector<2x8xf32>
    tpu.vector_store %arg2[%c0_212, %c0_213], %756 {strides = array<i32>} : memref<2x8xf32, #tpu.memory_space<vmem>>, vector<2x8xf32>,
    return
  }
}

</mosaic_0001>

<llo_original>
// kernel: transformer_model_forward.1
$region0: #{transformer_model_forward.1}
  #allocation0 [shape = 'u32[]', space=smem, size = 0x4, offset = 0x4, fixed_abs, tag = 'smem constant byte address 0x4 - core index']
  #allocation1 [shape = 'u32[144,128]{1,0:T(1,128)}', space=vmem, size = 0x12000, scoped, tag = 'internal scratch']
  %s0 = inlined_call_operand.hbm [shape: f32[16,32], index: 0, kind: input, shape index: {}]
  %s1 = inlined_call_operand.hbm [shape: f32[1688,128], index: 1, kind: input, shape index: {}]
  %s2 = inlined_call_operand.hbm [shape: f32[2,8], index: 2, kind: output, shape index: {}]
  %s3 = sld [smem:[#allocation0]]
  $region26: #{transformer_model_forward.1} parent=0
    _
  %s5 = ssub.s32 1, %s3
  %s6 = scalar_select 0, %s5, %s3
  $region1: #{transformer_model_forward.1} parent=0
    #allocation2 [shape = 'u8[8192]{0}', space=vmem, size = 0x2000, scoped, tag = 'input window, operand 0, single buffered']
    #allocation3 [shape = 's32[1]{0}', space=sflag, size = 0x4, scoped, tag = 'scoped memory for transformer_model_forward.1']
    #allocation4 [shape = 's32[1]{0}', space=sflag, size = 0x4, scoped, tag = 'scoped memory for transformer_model_forward.1']
    #allocation5 [shape = 'u8[864256]{0}', space=vmem, size = 0xd3000, scoped, tag = 'input window, operand 1, single buffered']
    #allocation6 [shape = 's32[1]{0}', space=sflag, size = 0x4, scoped, tag = 'scoped memory for transformer_model_forward.1']
    #allocation7 [shape = 'u8[1024]{0}', space=vmem, size = 0x400, scoped, tag = 'output window, operand 0, single buffered']
    %7 = vsyncpa [#allocation3], 0
    %8 = vsyncpa [#allocation6], 0
    %9 = vsyncpa [#allocation4], 0
    // Predicated region
    $region2: #{transformer_model_forward.1} parent=1 // pred_check
      _
    $region3: #{transformer_model_forward.1} parent=1 // pred_check_branch
      %11 = sbr.rel (0) target = $region5
    $region4: #{transformer_model_forward.1} parent=1 // pred_region
      %s13 = ssub.s32 256, 256
      %14 = vsyncadd [#allocation3], %s13
      %s15 = sshll.u32 [#allocation2], 4
      %s16 = int_to_ptr.vmem [resolvable:$true] %s15
      %21 = dma.hbm_to_vmem [thread:$0]  %s0, 256, %s16, [#allocation3], 128, 128, 8
    $region5: #{transformer_model_forward.1} parent=1 // pred_fallthru
      _
    // Predicated region
    $region6: #{transformer_model_forward.1} parent=1 // pred_check
      _
    $region7: #{transformer_model_forward.1} parent=1 // pred_check_branch
      %23 = sbr.rel (0) target = $region9
    $region8: #{transformer_model_forward.1} parent=1 // pred_region
      %s25 = ssub.s32 27008, 27008
      %26 = vsyncadd [#allocation6], %s25
      %s27 = sshll.u32 [#allocation5], 4
      %s28 = int_to_ptr.vmem [resolvable:$true] %s27
      %33 = dma.hbm_to_vmem [thread:$0]  %s1, 27008, %s28, [#allocation6], 128, 128, 8
    $region9: #{transformer_model_forward.1} parent=1 // pred_fallthru
      _
    // Predicated region
    $region10: #{transformer_model_forward.1} parent=1 // pred_check
      _
    $region11: #{transformer_model_forward.1} parent=1 // pred_check_branch
      %35 = sbr.rel (0) target = $region13
    $region12: #{transformer_model_forward.1} parent=1 // pred_region
      %36 = dma.done [#allocation3], 256
    $region13: #{transformer_model_forward.1} parent=1 // pred_fallthru
      _
    // Predicated region
    $region14: #{transformer_model_forward.1} parent=1 // pred_check
      _
    $region15: #{transformer_model_forward.1} parent=1 // pred_check_branch
      %38 = sbr.rel (0) target = $region17
    $region16: #{transformer_model_forward.1} parent=1 // pred_region
      %39 = dma.done [#allocation6], 27008
    $region17: #{transformer_model_forward.1} parent=1 // pred_fallthru
      _
    %v40 = vld [vmem:[#allocation5] sm:$0xff]
    %v41 = vld [vmem:[#allocation5 + $0x8] sm:$0xff]
    %v42 = vld [vmem:[#allocation5 + $0x10] sm:$0xff]
    %v43 = vld [vmem:[#allocation5 + $0x18] sm:$0xff]
    %v44 = vld [vmem:[#allocation5 + $0x20] sm:$0xf]
    %v45 = vld [vmem:[#allocation2] sm:$0xff]
    %v46 = vld [vmem:[#allocation2 + $0x8] sm:$0xff]
    %v47 = vld [vmem:[#allocation5 + $0x28] sm:$0xff]
    %v48 = vadd.f32 %v45, %v47
    %v49 = vadd.f32 %v46, %v47
    %v50 = vld [vmem:[#allocation5 + $0x30] sm:$0xff]
    %v51 = vld [vmem:[#allocation5 + $0x38] sm:$0xff]
    %v52 = vld [vmem:[#allocation5 + $0x40] sm:$0xff]
    %v53 = vld [vmem:[#allocation5 + $0x48] sm:$0xff]
    %v54 = vld [vmem:[#allocation5 + $0x50] sm:$0x1]
    %v55 = vlaneseq
    %v56 = vshrl.u32 %v55, 7
    %v57 = vsub.s32 0, %v56
    %v58 = vrot.slane %v54, %v57
    %vm59 = vcmask 261120
    %v61 = vsel %vm59, %v48, 0
    %v64 = vsel %vm59, %v49, 0
    %66 = vmatprep.subr.mxu0 0.0
    %67 = vmatpush1.msra.mxu0 %v50
    %68 = vmatprep.subr.mxu0 0.0
    %69 = vmatpush1.msra.mxu0 %v51
    %70 = vmatprep.subr.mxu0 0.0
    %71 = vmatpush1.msra.mxu0 %v52
    %72 = vmatprep.subr.mxu0 0.0
    %73 = vmatpush1.msra.mxu0 %v53
    %74 = vmatprep.subr.mxu0 0.0
    %75 = vmatpush1.msra.mxu0 0.0
    %76 = vmatprep.subr.mxu0 0.0
    %77 = vmatpush1.msra.mxu0 0.0
    %78 = vmatprep.subr.mxu0 0.0
    %79 = vmatpush1.msra.mxu0 0.0
    %80 = vmatprep.subr.mxu0 0.0
    %81 = vmatpush1.msra.mxu0 0.0
    %82 = vmatprep.subr.mxu0 0.0
    %83 = vmatpush1.msra.mxu0 0.0
    %84 = vmatprep.subr.mxu0 0.0
    %85 = vmatpush1.msra.mxu0 0.0
    %86 = vmatprep.subr.mxu0 0.0
    %87 = vmatpush1.msra.mxu0 0.0
    %88 = vmatprep.subr.mxu0 0.0
    %89 = vmatpush1.msra.mxu0 0.0
    %90 = vmatprep.subr.mxu0 0.0
    %91 = vmatpush1.msra.mxu0 0.0
    %92 = vmatprep.subr.mxu0 0.0
    %93 = vmatpush1.msra.mxu0 0.0
    %94 = vmatprep.subr.mxu0 0.0
    %95 = vmatpush1.msra.mxu0 0.0
    %96 = vmatprep.subr.mxu0 0.0
    %97 = vmatpush1.msra.mxu0 0.0
    %98 = vmatprep.subr.mxu0 0.0
    %99 = vmatpush1.msra.mxu0 0.0
    %100 = vmatprep.subr.mxu0 0.0
    %101 = vmatpush1.msra.mxu0 0.0
    %102 = vmatprep.subr.mxu0 0.0
    %103 = vmatpush1.msra.mxu0 0.0
    %104 = vmatprep.subr.mxu0 0.0
    %105 = vmatpush1.msra.mxu0 0.0
    %106 = vmatprep.subr.mxu0 0.0
    %107 = vmatpush1.msra.mxu0 0.0
    %108 = vmatprep.subr.mxu0 0.0
    %109 = vmatpush1.msra.mxu0 0.0
    %110 = vmatprep.subr.mxu0 0.0
    %111 = vmatpush1.msra.mxu0 0.0
    %112 = vmatprep.subr.mxu0 0.0
    %113 = vmatpush1.msra.mxu0 0.0
    %114 = vmatprep.subr.mxu0 0.0
    %115 = vmatpush1.msra.mxu0 0.0
    %116 = vmatprep.subr.mxu0 0.0
    %117 = vmatpush1.msra.mxu0 0.0
    %118 = vmatprep.subr.mxu0 0.0
    %119 = vmatpush1.msra.mxu0 0.0
    %120 = vmatprep.subr.mxu0 0.0
    %121 = vmatpush1.msra.mxu0 0.0
    %122 = vmatprep.subr.mxu0 0.0
    %123 = vmatpush1.msra.mxu0 0.0
    %124 = vmatprep.subr.mxu0 0.0
    %125 = vmatpush1.msra.mxu0 0.0
    %126 = vmatprep.subr.mxu0 0.0
    %127 = vmatpush1.msra.mxu0 0.0
    %128 = vmatprep.subr.mxu0 0.0
    %129 = vmatpush1.msra.mxu0 0.0
    %130 = vmatprep.mubr.f32.mxu0 0.0
    %131 = vmatmul.mubr.f32.gmra.mrb[0].mxu0 %v61
    %v132 = vpop.f32.mrb[0].mxu0
    %v133 = vadd.f32 %v58, %v132
    %v134 = vpop.f32.mrb[0].mxu0
    %135 = vmatprep.mubr.f32.mxu0 0.0
    %136 = vmatmul.mubr.f32.gmra.mrb[0].mxu0 %v64
    %v137 = vpop.f32.mrb[0].mxu0
    %v138 = vadd.f32 %v58, %v137
    %v139 = vpop.f32.mrb[0].mxu0
    %140 = vdwg.mxu0
    %v141 = vld [vmem:[#allocation5 + $0x58] sm:$0xff]
    %v142 = vld [vmem:[#allocation5 + $0x60] sm:$0xff]
    %v143 = vld [vmem:[#allocation5 + $0x68] sm:$0xff]
    %v144 = vld [vmem:[#allocation5 + $0x70] sm:$0xff]
    %v145 = vld [vmem:[#allocation5 + $0x78] sm:$0x1]
    %v146 = vlaneseq
    %v147 = vshrl.u32 %v146, 7
    %v148 = vsub.s32 0, %v147
    %v149 = vrot.slane %v145, %v148
    %150 = vmatprep.subr.mxu0 0.0
    %151 = vmatpush1.msra.mxu0 %v141
    %152 = vmatprep.subr.mxu0 0.0
    %153 = vmatpush1.msra.mxu0 %v142
    %154 = vmatprep.subr.mxu0 0.0
    %155 = vmatpush1.msra.mxu0 %v143
    %156 = vmatprep.subr.mxu0 0.0
    %157 = vmatpush1.msra.mxu0 %v144
    %158 = vmatprep.subr.mxu0 0.0
    %159 = vmatpush1.msra.mxu0 0.0
    %160 = vmatprep.subr.mxu0 0.0
    %161 = vmatpush1.msra.mxu0 0.0
    %162 = vmatprep.subr.mxu0 0.0
    %163 = vmatpush1.msra.mxu0 0.0
    %164 = vmatprep.subr.mxu0 0.0
    %165 = vmatpush1.msra.mxu0 0.0
    %166 = vmatprep.subr.mxu0 0.0
    %167 = vmatpush1.msra.mxu0 0.0
    %168 = vmatprep.subr.mxu0 0.0
    %169 = vmatpush1.msra.mxu0 0.0
    %170 = vmatprep.subr.mxu0 0.0
    %171 = vmatpush1.msra.mxu0 0.0
    %172 = vmatprep.subr.mxu0 0.0
    %173 = vmatpush1.msra.mxu0 0.0
    %174 = vmatprep.subr.mxu0 0.0
    %175 = vmatpush1.msra.mxu0 0.0
    %176 = vmatprep.subr.mxu0 0.0
    %177 = vmatpush1.msra.mxu0 0.0
    %178 = vmatprep.subr.mxu0 0.0
    %179 = vmatpush1.msra.mxu0 0.0
    %180 = vmatprep.subr.mxu0 0.0
    %181 = vmatpush1.msra.mxu0 0.0
    %182 = vmatprep.subr.mxu0 0.0
    %183 = vmatpush1.msra.mxu0 0.0
    %184 = vmatprep.subr.mxu0 0.0
    %185 = vmatpush1.msra.mxu0 0.0
    %186 = vmatprep.subr.mxu0 0.0
    %187 = vmatpush1.msra.mxu0 0.0
    %188 = vmatprep.subr.mxu0 0.0
    %189 = vmatpush1.msra.mxu0 0.0
    %190 = vmatprep.subr.mxu0 0.0
    %191 = vmatpush1.msra.mxu0 0.0
    %192 = vmatprep.subr.mxu0 0.0
    %193 = vmatpush1.msra.mxu0 0.0
    %194 = vmatprep.subr.mxu0 0.0
    %195 = vmatpush1.msra.mxu0 0.0
    %196 = vmatprep.subr.mxu0 0.0
    %197 = vmatpush1.msra.mxu0 0.0
    %198 = vmatprep.subr.mxu0 0.0
    %199 = vmatpush1.msra.mxu0 0.0
    %200 = vmatprep.subr.mxu0 0.0
    %201 = vmatpush1.msra.mxu0 0.0
    %202 = vmatprep.subr.mxu0 0.0
    %203 = vmatpush1.msra.mxu0 0.0
    %204 = vmatprep.subr.mxu0 0.0
    %205 = vmatpush1.msra.mxu0 0.0
    %206 = vmatprep.subr.mxu0 0.0
    %207 = vmatpush1.msra.mxu0 0.0
    %208 = vmatprep.subr.mxu0 0.0
    %209 = vmatpush1.msra.mxu0 0.0
    %210 = vmatprep.subr.mxu0 0.0
    %211 = vmatpush1.msra.mxu0 0.0
    %212 = vmatprep.subr.mxu0 0.0
    %213 = vmatpush1.msra.mxu0 0.0
    %214 = vmatprep.mubr.f32.mxu0 0.0
    %215 = vmatmul.mubr.f32.gmra.mrb[0].mxu0 %v61
    %v216 = vpop.f32.mrb[0].mxu0
    %v217 = vadd.f32 %v149, %v216
    %v218 = vpop.f32.mrb[0].mxu0
    %219 = vmatprep.mubr.f32.mxu0 0.0
    %220 = vmatmul.mubr.f32.gmra.mrb[0].mxu0 %v64
    %v221 = vpop.f32.mrb[0].mxu0
    %v222 = vadd.f32 %v149, %v221
    %v223 = vpop.f32.mrb[0].mxu0
    %224 = vdwg.mxu0
    %v225 = vld [vmem:[#allocation5 + $0x80] sm:$0xff]
    %v226 = vld [vmem:[#allocation5 + $0x88] sm:$0xff]
    %v227 = vld [vmem:[#allocation5 + $0x90] sm:$0xff]
    %v228 = vld [vmem:[#allocation5 + $0x98] sm:$0xff]
    %v229 = vld [vmem:[#allocation5 + $0xa0] sm:$0x1]
    %v230 = vlaneseq
    %v231 = vshrl.u32 %v230, 7
    %v232 = vsub.s32 0, %v231
    %v233 = vrot.slane %v229, %v232
    %234 = vmatprep.subr.mxu0 0.0
    %235 = vmatpush1.msra.mxu0 %v225
    %236 = vmatprep.subr.mxu0 0.0
    %237 = vmatpush1.msra.mxu0 %v226
    %238 = vmatprep.subr.mxu0 0.0
    %239 = vmatpush1.msra.mxu0 %v227
    %240 = vmatprep.subr.mxu0 0.0
    %241 = vmatpush1.msra.mxu0 %v228
    %242 = vmatprep.subr.mxu0 0.0
    %243 = vmatpush1.msra.mxu0 0.0
    %244 = vmatprep.subr.mxu0 0.0
    %245 = vmatpush1.msra.mxu0 0.0
    %246 = vmatprep.subr.mxu0 0.0
    %247 = vmatpush1.msra.mxu0 0.0
    %248 = vmatprep.subr.mxu0 0.0
    %249 = vmatpush1.msra.mxu0 0.0
    %250 = vmatprep.subr.mxu0 0.0
    %251 = vmatpush1.msra.mxu0 0.0
    %252 = vmatprep.subr.mxu0 0.0
    %253 = vmatpush1.msra.mxu0 0.0
    %254 = vmatprep.subr.mxu0 0.0
    %255 = vmatpush1.msra.mxu0 0.0
    %256 = vmatprep.subr.mxu0 0.0
    %257 = vmatpush1.msra.mxu0 0.0
    %258 = vmatprep.subr.mxu0 0.0
    %259 = vmatpush1.msra.mxu0 0.0
    %260 = vmatprep.subr.mxu0 0.0
    %261 = vmatpush1.msra.mxu0 0.0
    %262 = vmatprep.subr.mxu0 0.0
    %263 = vmatpush1.msra.mxu0 0.0
    %264 = vmatprep.subr.mxu0 0.0
    %265 = vmatpush1.msra.mxu0 0.0
    %266 = vmatprep.subr.mxu0 0.0
    %267 = vmatpush1.msra.mxu0 0.0
    %268 = vmatprep.subr.mxu0 0.0
    %269 = vmatpush1.msra.mxu0 0.0
    %270 = vmatprep.subr.mxu0 0.0
    %271 = vmatpush1.msra.mxu0 0.0
    %272 = vmatprep.subr.mxu0 0.0
    %273 = vmatpush1.msra.mxu0 0.0
    %274 = vmatprep.subr.mxu0 0.0
    %275 = vmatpush1.msra.mxu0 0.0
    %276 = vmatprep.subr.mxu0 0.0
    %277 = vmatpush1.msra.mxu0 0.0
    %278 = vmatprep.subr.mxu0 0.0
    %279 = vmatpush1.msra.mxu0 0.0
    %280 = vmatprep.subr.mxu0 0.0
    %281 = vmatpush1.msra.mxu0 0.0
    %282 = vmatprep.subr.mxu0 0.0
    %283 = vmatpush1.msra.mxu0 0.0
    %284 = vmatprep.subr.mxu0 0.0
    %285 = vmatpush1.msra.mxu0 0.0
    %286 = vmatprep.subr.mxu0 0.0
    %287 = vmatpush1.msra.mxu0 0.0
    %288 = vmatprep.subr.mxu0 0.0
    %289 = vmatpush1.msra.mxu0 0.0
    %290 = vmatprep.subr.mxu0 0.0
    %291 = vmatpush1.msra.mxu0 0.0
    %292 = vmatprep.subr.mxu0 0.0
    %293 = vmatpush1.msra.mxu0 0.0
    %294 = vmatprep.subr.mxu0 0.0
    %295 = vmatpush1.msra.mxu0 0.0
    %296 = vmatprep.subr.mxu0 0.0
    %297 = vmatpush1.msra.mxu0 0.0
    %298 = vmatprep.mubr.f32.mxu0 0.0
    %299 = vmatmul.mubr.f32.gmra.mrb[0].mxu0 %v61
    %v300 = vpop.f32.mrb[0].mxu0
    %v301 = vadd.f32 %v233, %v300
    %v302 = vpop.f32.mrb[0].mxu0
    %303 = vmatprep.mubr.f32.mxu0 0.0
    %304 = vmatmul.mubr.f32.gmra.mrb[0].mxu0 %v64
    %v305 = vpop.f32.mrb[0].mxu0
    %v306 = vadd.f32 %v233, %v305
    %v307 = vpop.f32.mrb[0].mxu0
    %308 = vdwg.mxu0
    %v309 = vmul.f32 %v133, 0.35355338
    %v310 = vmul.f32 %v138, 0.35355338
    %v311 = vmul.f32 %v309, %v217
    %v312 = vmul.f32 %v309, %v222
    %v313 = vmul.f32 %v310, %v217
    %v314 = vmul.f32 %v310, %v222
    %v316 = vsel %vm59, %v311, 0
    %v319 = vsel %vm59, %v312, 0
    %v322 = vsel %vm59, %v313, 0
    %v325 = vsel %vm59, %v314, 0
    %327 = vmatprep.subr.mxu0 0.0
    %328 = vmatpush1.msra.mxu0 %v40
    %329 = vmatprep.subr.mxu0 0.0
    %330 = vmatpush1.msra.mxu0 %v41
    %331 = vmatprep.subr.mxu0 0.0
    %332 = vmatpush1.msra.mxu0 %v42
    %333 = vmatprep.subr.mxu0 0.0
    %334 = vmatpush1.msra.mxu0 %v43
    %335 = vmatprep.subr.mxu0 0.0
    %336 = vmatpush1.msra.mxu0 0.0
    %337 = vmatprep.subr.mxu0 0.0
    %338 = vmatpush1.msra.mxu0 0.0
    %339 = vmatprep.subr.mxu0 0.0
    %340 = vmatpush1.msra.mxu0 0.0
    %341 = vmatprep.subr.mxu0 0.0
    %342 = vmatpush1.msra.mxu0 0.0
    %343 = vmatprep.subr.mxu0 0.0
    %344 = vmatpush1.msra.mxu0 0.0
    %345 = vmatprep.subr.mxu0 0.0
    %346 = vmatpush1.msra.mxu0 0.0
    %347 = vmatprep.subr.mxu0 0.0
    %348 = vmatpush1.msra.mxu0 0.0
    %349 = vmatprep.subr.mxu0 0.0
    %350 = vmatpush1.msra.mxu0 0.0
    %351 = vmatprep.subr.mxu0 0.0
    %352 = vmatpush1.msra.mxu0 0.0
    %353 = vmatprep.subr.mxu0 0.0
    %354 = vmatpush1.msra.mxu0 0.0
    %355 = vmatprep.subr.mxu0 0.0
    %356 = vmatpush1.msra.mxu0 0.0
    %357 = vmatprep.subr.mxu0 0.0
    %358 = vmatpush1.msra.mxu0 0.0
    %359 = vmatprep.subr.mxu0 0.0
    %360 = vmatpush1.msra.mxu0 0.0
    %361 = vmatprep.subr.mxu0 0.0
    %362 = vmatpush1.msra.mxu0 0.0
    %363 = vmatprep.subr.mxu0 0.0
    %364 = vmatpush1.msra.mxu0 0.0
    %365 = vmatprep.subr.mxu0 0.0
    %366 = vmatpush1.msra.mxu0 0.0
    %367 = vmatprep.subr.mxu0 0.0
    %368 = vmatpush1.msra.mxu0 0.0
    %369 = vmatprep.subr.mxu0 0.0
    %370 = vmatpush1.msra.mxu0 0.0
    %371 = vmatprep.subr.mxu0 0.0
    %372 = vmatpush1.msra.mxu0 0.0
    %373 = vmatprep.subr.mxu0 0.0
    %374 = vmatpush1.msra.mxu0 0.0
    %375 = vmatprep.subr.mxu0 0.0
    %376 = vmatpush1.msra.mxu0 0.0
    %377 = vmatprep.subr.mxu0 0.0
    %378 = vmatpush1.msra.mxu0 0.0
    %379 = vmatprep.subr.mxu0 0.0
    %380 = vmatpush1.msra.mxu0 0.0
    %381 = vmatprep.subr.mxu0 0.0
    %382 = vmatpush1.msra.mxu0 0.0
    %383 = vmatprep.subr.mxu0 0.0
    %384 = vmatpush1.msra.mxu0 0.0
    %385 = vmatprep.subr.mxu0 0.0
    %386 = vmatpush1.msra.mxu0 0.0
    %387 = vmatprep.subr.mxu0 0.0
    %388 = vmatpush1.msra.mxu0 0.0
    %389 = vmatprep.subr.mxu0 0.0
    %390 = vmatpush1.msra.mxu0 0.0
    %391 = vmatprep.mubr.f32.mxu0 0.0
    %392 = vmatmul.mubr.f32.gmra.mrb[0].mxu0 %v316
    %v393 = vpop.f32.mrb[0].mxu0
    %v394 = vadd.f32 0.0, %v393
    %v395 = vpop.f32.mrb[0].mxu0
    %396 = vmatprep.mubr.f32.mxu0 0.0
    %397 = vmatmul.mubr.f32.gmra.mrb[0].mxu0 %v319
    %v398 = vpop.f32.mrb[0].mxu0
    %v399 = vadd.f32 0.0, %v398
    %v400 = vpop.f32.mrb[0].mxu0
    %401 = vmatprep.mubr.f32.mxu0 0.0
    %402 = vmatmul.mubr.f32.gmra.mrb[0].mxu0 %v322
    %v403 = vpop.f32.mrb[0].mxu0
    %v404 = vadd.f32 0.0, %v403
    %v405 = vpop.f32.mrb[0].mxu0
    %406 = vmatprep.mubr.f32.mxu0 0.0
    %407 = vmatmul.mubr.f32.gmra.mrb[0].mxu0 %v325
    %v408 = vpop.f32.mrb[0].mxu0
    %v409 = vadd.f32 0.0, %v408
    %v410 = vpop.f32.mrb[0].mxu0
    %411 = vdwg.mxu0
    %v412 = vmax.f32 %v394, %v399
    %v413 = vsub.f32 %v394, %v412
    %v414 = vmul.f32 %v413, 1.442695
    %v415 = vpow.pop %v414
    %v416 = vsub.f32 %v399, %v412
    %v417 = vmul.f32 %v416, 1.442695
    %v418 = vpow.pop %v417
    %v419 = vadd.f32 %v415, %v418
    %v420 = vrcp.pop %v419
    %v421 = vmul.f32 %v415, %v420
    %v422 = vmul.f32 %v418, %v420
    %v423 = vmax.f32 %v404, %v409
    %v424 = vsub.f32 %v404, %v423
    %v425 = vmul.f32 %v424, 1.442695
    %v426 = vpow.pop %v425
    %v427 = vsub.f32 %v409, %v423
    %v428 = vmul.f32 %v427, 1.442695
    %v429 = vpow.pop %v428
    %v430 = vadd.f32 %v426, %v429
    %v431 = vrcp.pop %v430
    %v432 = vmul.f32 %v426, %v431
    %v433 = vmul.f32 %v429, %v431
    %vm434 = vcmask 31744
    %v436 = vsel %vm434, %v421, 0
    %v439 = vsel %vm434, %v422, 0
    %v442 = vsel %vm434, %v432, 0
    %v445 = vsel %vm434, %v433, 0
    %vm447 = vcmask 1043456
    %v449 = vsel %vm447, %v44, 0
    %451 = vmatprep.subr.mxu0 0.0
    %452 = vmatpush1.msra.mxu0 %v449
    %453 = vmatprep.subr.mxu0 0.0
    %454 = vmatpush1.msra.mxu0 0.0
    %455 = vmatprep.subr.mxu0 0.0
    %456 = vmatpush1.msra.mxu0 0.0
    %457 = vmatprep.subr.mxu0 0.0
    %458 = vmatpush1.msra.mxu0 0.0
    %459 = vmatprep.subr.mxu0 0.0
    %460 = vmatpush1.msra.mxu0 0.0
    %461 = vmatprep.subr.mxu0 0.0
    %462 = vmatpush1.msra.mxu0 0.0
    %463 = vmatprep.subr.mxu0 0.0
    %464 = vmatpush1.msra.mxu0 0.0
    %465 = vmatprep.subr.mxu0 0.0
    %466 = vmatpush1.msra.mxu0 0.0
    %467 = vmatprep.subr.mxu0 0.0
    %468 = vmatpush1.msra.mxu0 0.0
    %469 = vmatprep.subr.mxu0 0.0
    %470 = vmatpush1.msra.mxu0 0.0
    %471 = vmatprep.subr.mxu0 0.0
    %472 = vmatpush1.msra.mxu0 0.0
    %473 = vmatprep.subr.mxu0 0.0
    %474 = vmatpush1.msra.mxu0 0.0
    %475 = vmatprep.subr.mxu0 0.0
    %476 = vmatpush1.msra.mxu0 0.0
    %477 = vmatprep.subr.mxu0 0.0
    %478 = vmatpush1.msra.mxu0 0.0
    %479 = vmatprep.subr.mxu0 0.0
    %480 = vmatpush1.msra.mxu0 0.0
    %481 = vmatprep.subr.mxu0 0.0
    %482 = vmatpush1.msra.mxu0 0.0
    %483 = vmatprep.subr.mxu0 0.0
    %484 = vmatpush1.msra.mxu0 0.0
    %485 = vmatprep.subr.mxu0 0.0
    %486 = vmatpush1.msra.mxu0 0.0
    %487 = vmatprep.subr.mxu0 0.0
    %488 = vmatpush1.msra.mxu0 0.0
    %489 = vmatprep.subr.mxu0 0.0
    %490 = vmatpush1.msra.mxu0 0.0
    %491 = vmatprep.subr.mxu0 0.0
    %492 = vmatpush1.msra.mxu0 0.0
    %493 = vmatprep.subr.mxu0 0.0
    %494 = vmatpush1.msra.mxu0 0.0
    %495 = vmatprep.subr.mxu0 0.0
    %496 = vmatpush1.msra.mxu0 0.0
    %497 = vmatprep.subr.mxu0 0.0
    %498 = vmatpush1.msra.mxu0 0.0
    %499 = vmatprep.subr.mxu0 0.0
    %500 = vmatpush1.msra.mxu0 0.0
    %501 = vmatprep.subr.mxu0 0.0
    %502 = vmatpush1.msra.mxu0 0.0
    %503 = vmatprep.subr.mxu0 0.0
    %504 = vmatpush1.msra.mxu0 0.0
    %505 = vmatprep.subr.mxu0 0.0
    %506 = vmatpush1.msra.mxu0 0.0
    %507 = vmatprep.subr.mxu0 0.0
    %508 = vmatpush1.msra.mxu0 0.0
    %509 = vmatprep.subr.mxu0 0.0
    %510 = vmatpush1.msra.mxu0 0.0
    %511 = vmatprep.subr.mxu0 0.0
    %512 = vmatpush1.msra.mxu0 0.0
    %513 = vmatprep.subr.mxu0 0.0
    %514 = vmatpush1.msra.mxu0 0.0
    %515 = vmatprep.mubr.f32.mxu0 0.0
    %516 = vmatmul.mubr.f32.gmra.mrb[0].mxu0 %v436
    %v517 = vpop.f32.mrb[0].mxu0
    %v518 = vadd.f32 0.0, %v517
    %v519 = vpop.f32.mrb[0].mxu0
    %520 = vmatprep.mubr.f32.mxu0 0.0
    %521 = vmatmul.mubr.f32.gmra.mrb[0].mxu0 %v439
    %v522 = vpop.f32.mrb[0].mxu0
    %v523 = vadd.f32 0.0, %v522
    %v524 = vpop.f32.mrb[0].mxu0
    %525 = vmatprep.mubr.f32.mxu0 0.0
    %526 = vmatmul.mubr.f32.gmra.mrb[0].mxu0 %v442
    %v527 = vpop.f32.mrb[0].mxu0
    %v528 = vadd.f32 0.0, %v527
    %v529 = vpop.f32.mrb[0].mxu0
    %530 = vmatprep.mubr.f32.mxu0 0.0
    %531 = vmatmul.mubr.f32.gmra.mrb[0].mxu0 %v445
    %v532 = vpop.f32.mrb[0].mxu0
    %v533 = vadd.f32 0.0, %v532
    %v534 = vpop.f32.mrb[0].mxu0
    %535 = vdwg.mxu0
    %v536 = vmul.f32 %v518, %v301
    %v537 = vmul.f32 %v523, %v306
    %v538 = vadd.f32 %v536, %v537
    %v539 = vmul.f32 %v528, %v301
    %v540 = vmul.f32 %v533, %v306
    %v541 = vadd.f32 %v539, %v540
    %v542 = vld [vmem:[#allocation5 + $0xa8] sm:$0xff]
    %v543 = vld [vmem:[#allocation5 + $0xb0] sm:$0xff]
    %v544 = vld [vmem:[#allocation5 + $0xb8] sm:$0xff]
    %v545 = vld [vmem:[#allocation5 + $0xc0] sm:$0xff]
    %v546 = vld [vmem:[#allocation5 + $0xc8] sm:$0x1]
    %v547 = vlaneseq
    %v548 = vshrl.u32 %v547, 7
    %v549 = vsub.s32 0, %v548
    %v550 = vrot.slane %v546, %v549
    %v552 = vsel %vm59, %v538, 0
    %v555 = vsel %vm59, %v541, 0
    %557 = vmatprep.subr.mxu0 0.0
    %558 = vmatpush1.msra.mxu0 %v542
    %559 = vmatprep.subr.mxu0 0.0
    %560 = vmatpush1.msra.mxu0 %v543
    %561 = vmatprep.subr.mxu0 0.0
    %562 = vmatpush1.msra.mxu0 %v544
    %563 = vmatprep.subr.mxu0 0.0
    %564 = vmatpush1.msra.mxu0 %v545
    %565 = vmatprep.subr.mxu0 0.0
    %566 = vmatpush1.msra.mxu0 0.0
    %567 = vmatprep.subr.mxu0 0.0
    %568 = vmatpush1.msra.mxu0 0.0
    %569 = vmatprep.subr.mxu0 0.0
    %570 = vmatpush1.msra.mxu0 0.0
    %571 = vmatprep.subr.mxu0 0.0
    %572 = vmatpush1.msra.mxu0 0.0
    %573 = vmatprep.subr.mxu0 0.0
    %574 = vmatpush1.msra.mxu0 0.0
    %575 = vmatprep.subr.mxu0 0.0
    %576 = vmatpush1.msra.mxu0 0.0
    %577 = vmatprep.subr.mxu0 0.0
    %578 = vmatpush1.msra.mxu0 0.0
    %579 = vmatprep.subr.mxu0 0.0
    %580 = vmatpush1.msra.mxu0 0.0
    %581 = vmatprep.subr.mxu0 0.0
    %582 = vmatpush1.msra.mxu0 0.0
    %583 = vmatprep.subr.mxu0 0.0
    %584 = vmatpush1.msra.mxu0 0.0
    %585 = vmatprep.subr.mxu0 0.0
    %586 = vmatpush1.msra.mxu0 0.0
    %587 = vmatprep.subr.mxu0 0.0
    %588 = vmatpush1.msra.mxu0 0.0
    %589 = vmatprep.subr.mxu0 0.0
    %590 = vmatpush1.msra.mxu0 0.0
    %591 = vmatprep.subr.mxu0 0.0
    %592 = vmatpush1.msra.mxu0 0.0
    %593 = vmatprep.subr.mxu0 0.0
    %594 = vmatpush1.msra.mxu0 0.0
    %595 = vmatprep.subr.mxu0 0.0
    %596 = vmatpush1.msra.mxu0 0.0
    %597 = vmatprep.subr.mxu0 0.0
    %598 = vmatpush1.msra.mxu0 0.0
    %599 = vmatprep.subr.mxu0 0.0
    %600 = vmatpush1.msra.mxu0 0.0
    %601 = vmatprep.subr.mxu0 0.0
    %602 = vmatpush1.msra.mxu0 0.0
    %603 = vmatprep.subr.mxu0 0.0
    %604 = vmatpush1.msra.mxu0 0.0
    %605 = vmatprep.subr.mxu0 0.0
    %606 = vmatpush1.msra.mxu0 0.0
    %607 = vmatprep.subr.mxu0 0.0
    %608 = vmatpush1.msra.mxu0 0.0
    %609 = vmatprep.subr.mxu0 0.0
    %610 = vmatpush1.msra.mxu0 0.0
    %611 = vmatprep.subr.mxu0 0.0
    %612 = vmatpush1.msra.mxu0 0.0
    %613 = vmatprep.subr.mxu0 0.0
    %614 = vmatpush1.msra.mxu0 0.0
    %615 = vmatprep.subr.mxu0 0.0
    %616 = vmatpush1.msra.mxu0 0.0
    %617 = vmatprep.subr.mxu0 0.0
    %618 = vmatpush1.msra.mxu0 0.0
    %619 = vmatprep.subr.mxu0 0.0
    %620 = vmatpush1.msra.mxu0 0.0
    %621 = vmatprep.mubr.f32.mxu0 0.0
    %622 = vmatmul.mubr.f32.gmra.mrb[0].mxu0 %v552
    %v623 = vpop.f32.mrb[0].mxu0
    %v624 = vadd.f32 %v550, %v623
    %v625 = vpop.f32.mrb[0].mxu0
    %626 = vmatprep.mubr.f32.mxu0 0.0
    %627 = vmatmul.mubr.f32.gmra.mrb[0].mxu0 %v555
    %v628 = vpop.f32.mrb[0].mxu0
    %v629 = vadd.f32 %v550, %v628
    %v630 = vpop.f32.mrb[0].mxu0
    %631 = vdwg.mxu0
    %v632 = vadd.f32 %v48, %v624
    %v633 = vadd.f32 %v49, %v629
    %v634 = vld [vmem:[#allocation5 + $0xd0] sm:$0x1]
    %v635 = vld [vmem:[#allocation5 + $0xd8] sm:$0x1]
    %v636 = vsel %vm59, %v632, 0.0
    %637 = vadd.xlane.f32.xlu0 %v636
    %v638 = vpop.xlane.xlu0 %637
    %v639 = vsel %vm59, %v633, 0.0
    %640 = vadd.xlane.f32.xlu0 %v639
    %v641 = vpop.xlane.xlu0 %640
    %v642 = vrcp.pop 32.0
    %v643 = vmul.f32 %v638, %v642
    %v644 = vmul.f32 %v641, %v642
    %v645 = vsub.f32 %v632, %v643
    %v646 = vsub.f32 %v633, %v644
    %v647 = vmul.f32 %v645, %v645
    %v648 = vmul.f32 %v646, %v646
    %v649 = vsel %vm59, %v647, 0.0
    %650 = vadd.xlane.f32.xlu0 %v649
    %v651 = vpop.xlane.xlu0 %650
    %v652 = vsel %vm59, %v648, 0.0
    %653 = vadd.xlane.f32.xlu0 %v652
    %v654 = vpop.xlane.xlu0 %653
    %v655 = vmul.f32 %v651, %v642
    %v656 = vmul.f32 %v654, %v642
    %v657 = vadd.f32 %v655, 1e-05
    %v658 = vadd.f32 %v656, 1e-05
    %v659 = vrsqrt.pop %v657
    %v660 = vrsqrt.pop %v658
    %v661 = vmul.f32 %v645, %v659
    %v662 = vmul.f32 %v646, %v660
    %v663 = vlaneseq
    %v664 = vshrl.u32 %v663, 7
    %v665 = vsub.s32 0, %v664
    %v666 = vrot.slane %v634, %v665
    %v667 = vmul.f32 %v661, %v666
    %v668 = vmul.f32 %v662, %v666
    %v669 = vlaneseq
    %v670 = vshrl.u32 %v669, 7
    %v671 = vsub.s32 0, %v670
    %v672 = vrot.slane %v635, %v671
    %v673 = vadd.f32 %v667, %v672
    %v674 = vadd.f32 %v668, %v672
    %v675 = vld [vmem:[#allocation5 + $0xe0] sm:$0xff]
    %v676 = vld [vmem:[#allocation5 + $0xe8] sm:$0xff]
    %v677 = vld [vmem:[#allocation5 + $0xf0] sm:$0xff]
    %v678 = vld [vmem:[#allocation5 + $0xf8] sm:$0xff]
    %v679 = vld [vmem:[#allocation5 + $0x100] sm:$0x1]
    %v680 = vlaneseq
    %v681 = vshrl.u32 %v680, 7
    %v682 = vsub.s32 0, %v681
    %v683 = vrot.slane %v679, %v682
    %v685 = vsel %vm59, %v673, 0
    %v688 = vsel %vm59, %v674, 0
    %690 = vmatprep.subr.mxu0 0.0
    %691 = vmatpush1.msra.mxu0 %v675
    %692 = vmatprep.subr.mxu0 0.0
    %693 = vmatpush1.msra.mxu0 %v676
    %694 = vmatprep.subr.mxu0 0.0
    %695 = vmatpush1.msra.mxu0 %v677
    %696 = vmatprep.subr.mxu0 0.0
    %697 = vmatpush1.msra.mxu0 %v678
    %698 = vmatprep.subr.mxu0 0.0
    %699 = vmatpush1.msra.mxu0 0.0
    %700 = vmatprep.subr.mxu0 0.0
    %701 = vmatpush1.msra.mxu0 0.0
    %702 = vmatprep.subr.mxu0 0.0
    %703 = vmatpush1.msra.mxu0 0.0
    %704 = vmatprep.subr.mxu0 0.0
    %705 = vmatpush1.msra.mxu0 0.0
    %706 = vmatprep.subr.mxu0 0.0
    %707 = vmatpush1.msra.mxu0 0.0
    %708 = vmatprep.subr.mxu0 0.0
    %709 = vmatpush1.msra.mxu0 0.0
    %710 = vmatprep.subr.mxu0 0.0
    %711 = vmatpush1.msra.mxu0 0.0
    %712 = vmatprep.subr.mxu0 0.0
    %713 = vmatpush1.msra.mxu0 0.0
    %714 = vmatprep.subr.mxu0 0.0
    %715 = vmatpush1.msra.mxu0 0.0
    %716 = vmatprep.subr.mxu0 0.0
    %717 = vmatpush1.msra.mxu0 0.0
    %718 = vmatprep.subr.mxu0 0.0
    %719 = vmatpush1.msra.mxu0 0.0
    %720 = vmatprep.subr.mxu0 0.0
    %721 = vmatpush1.msra.mxu0 0.0
    %722 = vmatprep.subr.mxu0 0.0
    %723 = vmatpush1.msra.mxu0 0.0
    %724 = vmatprep.subr.mxu0 0.0
    %725 = vmatpush1.msra.mxu0 0.0
    %726 = vmatprep.subr.mxu0 0.0
    %727 = vmatpush1.msra.mxu0 0.0
    %728 = vmatprep.subr.mxu0 0.0
    %729 = vmatpush1.msra.mxu0 0.0
    %730 = vmatprep.subr.mxu0 0.0
    %731 = vmatpush1.msra.mxu0 0.0
    %732 = vmatprep.subr.mxu0 0.0
    %733 = vmatpush1.msra.mxu0 0.0
    %734 = vmatprep.subr.mxu0 0.0
    %735 = vmatpush1.msra.mxu0 0.0
    %736 = vmatprep.subr.mxu0 0.0
    %737 = vmatpush1.msra.mxu0 0.0
    %738 = vmatprep.subr.mxu0 0.0
    %739 = vmatpush1.msra.mxu0 0.0
    %740 = vmatprep.subr.mxu0 0.0
    %741 = vmatpush1.msra.mxu0 0.0
    %742 = vmatprep.subr.mxu0 0.0
    %743 = vmatpush1.msra.mxu0 0.0
    %744 = vmatprep.subr.mxu0 0.0
    %745 = vmatpush1.msra.mxu0 0.0
    %746 = vmatprep.subr.mxu0 0.0
    %747 = vmatpush1.msra.mxu0 0.0
    %748 = vmatprep.subr.mxu0 0.0
    %749 = vmatpush1.msra.mxu0 0.0
    %750 = vmatprep.subr.mxu0 0.0
    %751 = vmatpush1.msra.mxu0 0.0
    %752 = vmatprep.subr.mxu0 0.0
    %753 = vmatpush1.msra.mxu0 0.0
    %754 = vmatprep.mubr.f32.mxu0 0.0
    %755 = vmatmul.mubr.f32.gmra.mrb[0].mxu0 %v685
    %v756 = vpop.f32.mrb[0].mxu0
    %v757 = vadd.f32 %v683, %v756
    %v758 = vpop.f32.mrb[0].mxu0
    %759 = vmatprep.mubr.f32.mxu0 0.0
    %760 = vmatmul.mubr.f32.gmra.mrb[0].mxu0 %v688
    %v761 = vpop.f32.mrb[0].mxu0
    %v762 = vadd.f32 %v683, %v761
    %v763 = vpop.f32.mrb[0].mxu0
    %764 = vdwg.mxu0
    %v765 = vmax.f32 %v757, 0.0
    %v766 = vmax.f32 %v762, 0.0
    %v767 = vld [vmem:[#allocation5 + $0x108] sm:$0xff]
    %v768 = vld [vmem:[#allocation5 + $0x110] sm:$0xff]
    %v769 = vld [vmem:[#allocation5 + $0x118] sm:$0xff]
    %v770 = vld [vmem:[#allocation5 + $0x120] sm:$0xff]
    %v771 = vld [vmem:[#allocation5 + $0x128] sm:$0xff]
    %v772 = vld [vmem:[#allocation5 + $0x130] sm:$0xff]
    %v773 = vld [vmem:[#allocation5 + $0x138] sm:$0xff]
    %v774 = vld [vmem:[#allocation5 + $0x140] sm:$0xff]
    %v775 = vld [vmem:[#allocation5 + $0x148] sm:$0x1]
    %v776 = vlaneseq
    %v777 = vshrl.u32 %v776, 7
    %v778 = vsub.s32 0, %v777
    %v779 = vrot.slane %v775, %v778
    %vm780 = vcmask 523264
    %v782 = vsel %vm780, %v765, 0
    %v785 = vsel %vm780, %v766, 0
    %787 = vmatprep.subr.mxu0 0.0
    %788 = vmatpush1.msra.mxu0 %v767
    %789 = vmatprep.subr.mxu0 0.0
    %790 = vmatpush1.msra.mxu0 %v768
    %791 = vmatprep.subr.mxu0 0.0
    %792 = vmatpush1.msra.mxu0 %v769
    %793 = vmatprep.subr.mxu0 0.0
    %794 = vmatpush1.msra.mxu0 %v770
    %795 = vmatprep.subr.mxu0 0.0
    %796 = vmatpush1.msra.mxu0 %v771
    %797 = vmatprep.subr.mxu0 0.0
    %798 = vmatpush1.msra.mxu0 %v772
    %799 = vmatprep.subr.mxu0 0.0
    %800 = vmatpush1.msra.mxu0 %v773
    %801 = vmatprep.subr.mxu0 0.0
    %802 = vmatpush1.msra.mxu0 %v774
    %803 = vmatprep.subr.mxu0 0.0
    %804 = vmatpush1.msra.mxu0 0.0
    %805 = vmatprep.subr.mxu0 0.0
    %806 = vmatpush1.msra.mxu0 0.0
    %807 = vmatprep.subr.mxu0 0.0
    %808 = vmatpush1.msra.mxu0 0.0
    %809 = vmatprep.subr.mxu0 0.0
    %810 = vmatpush1.msra.mxu0 0.0
    %811 = vmatprep.subr.mxu0 0.0
    %812 = vmatpush1.msra.mxu0 0.0
    %813 = vmatprep.subr.mxu0 0.0
    %814 = vmatpush1.msra.mxu0 0.0
    %815 = vmatprep.subr.mxu0 0.0
    %816 = vmatpush1.msra.mxu0 0.0
    %817 = vmatprep.subr.mxu0 0.0
    %818 = vmatpush1.msra.mxu0 0.0
    %819 = vmatprep.subr.mxu0 0.0
    %820 = vmatpush1.msra.mxu0 0.0
    %821 = vmatprep.subr.mxu0 0.0
    %822 = vmatpush1.msra.mxu0 0.0
    %823 = vmatprep.subr.mxu0 0.0
    %824 = vmatpush1.msra.mxu0 0.0
    %825 = vmatprep.subr.mxu0 0.0
    %826 = vmatpush1.msra.mxu0 0.0
    %827 = vmatprep.subr.mxu0 0.0
    %828 = vmatpush1.msra.mxu0 0.0
    %829 = vmatprep.subr.mxu0 0.0
    %830 = vmatpush1.msra.mxu0 0.0
    %831 = vmatprep.subr.mxu0 0.0
    %832 = vmatpush1.msra.mxu0 0.0
    %833 = vmatprep.subr.mxu0 0.0
    %834 = vmatpush1.msra.mxu0 0.0
    %835 = vmatprep.subr.mxu0 0.0
    %836 = vmatpush1.msra.mxu0 0.0
    %837 = vmatprep.subr.mxu0 0.0
    %838 = vmatpush1.msra.mxu0 0.0
    %839 = vmatprep.subr.mxu0 0.0
    %840 = vmatpush1.msra.mxu0 0.0
    %841 = vmatprep.subr.mxu0 0.0
    %842 = vmatpush1.msra.mxu0 0.0
    %843 = vmatprep.subr.mxu0 0.0
    %844 = vmatpush1.msra.mxu0 0.0
    %845 = vmatprep.subr.mxu0 0.0
    %846 = vmatpush1.msra.mxu0 0.0
    %847 = vmatprep.subr.mxu0 0.0
    %848 = vmatpush1.msra.mxu0 0.0
    %849 = vmatprep.subr.mxu0 0.0
    %850 = vmatpush1.msra.mxu0 0.0
    %851 = vmatprep.mubr.f32.mxu0 0.0
    %852 = vmatmul.mubr.f32.gmra.mrb[0].mxu0 %v782
    %v853 = vpop.f32.mrb[0].mxu0
    %v854 = vadd.f32 %v779, %v853
    %v855 = vpop.f32.mrb[0].mxu0
    %856 = vmatprep.mubr.f32.mxu0 0.0
    %857 = vmatmul.mubr.f32.gmra.mrb[0].mxu0 %v785
    %v858 = vpop.f32.mrb[0].mxu0
    %v859 = vadd.f32 %v779, %v858
    %v860 = vpop.f32.mrb[0].mxu0
    %861 = vdwg.mxu0
    %v862 = vadd.f32 %v673, %v854
    %v863 = vadd.f32 %v674, %v859
    %v864 = vld [vmem:[#allocation5 + $0x150] sm:$0x1]
    %v865 = vld [vmem:[#allocation5 + $0x158] sm:$0x1]
    %v866 = vsel %vm59, %v862, 0.0
    %867 = vadd.xlane.f32.xlu0 %v866
    %v868 = vpop.xlane.xlu0 %867
    %v869 = vsel %vm59, %v863, 0.0
    %870 = vadd.xlane.f32.xlu0 %v869
    %v871 = vpop.xlane.xlu0 %870
    %v872 = vmul.f32 %v868, %v642
    %v873 = vmul.f32 %v871, %v642
    %v874 = vsub.f32 %v862, %v872
    %v875 = vsub.f32 %v863, %v873
    %v876 = vmul.f32 %v874, %v874
    %v877 = vmul.f32 %v875, %v875
    %v878 = vsel %vm59, %v876, 0.0
    %879 = vadd.xlane.f32.xlu0 %v878
    %v880 = vpop.xlane.xlu0 %879
    %v881 = vsel %vm59, %v877, 0.0
    %882 = vadd.xlane.f32.xlu0 %v881
    %v883 = vpop.xlane.xlu0 %882
    %v884 = vmul.f32 %v880, %v642
    %v885 = vmul.f32 %v883, %v642
    %v886 = vadd.f32 %v884, 1e-05
    %v887 = vadd.f32 %v885, 1e-05
    %v888 = vrsqrt.pop %v886
    %v889 = vrsqrt.pop %v887
    %v890 = vmul.f32 %v874, %v888
    %v891 = vmul.f32 %v875, %v889
    %v892 = vlaneseq
    %v893 = vshrl.u32 %v892, 7
    %v894 = vsub.s32 0, %v893
    %v895 = vrot.slane %v864, %v894
    %v896 = vmul.f32 %v890, %v895
    %v897 = vmul.f32 %v891, %v895
    %v898 = vlaneseq
    %v899 = vshrl.u32 %v898, 7
    %v900 = vsub.s32 0, %v899
    %v901 = vrot.slane %v865, %v900
    %v902 = vadd.f32 %v896, %v901
    %v903 = vadd.f32 %v897, %v901
    %v904 = vld [vmem:[#allocation5 + $0x160] sm:$0xff]
    %v905 = vld [vmem:[#allocation5 + $0x168] sm:$0xff]
    %v906 = vld [vmem:[#allocation5 + $0x170] sm:$0xff]
    %v907 = vld [vmem:[#allocation5 + $0x178] sm:$0xff]
    %v908 = vld [vmem:[#allocation5 + $0x180] sm:$0x1]
    %v909 = vlaneseq
    %v910 = vshrl.u32 %v909, 7
    %v911 = vsub.s32 0, %v910
    %v912 = vrot.slane %v908, %v911
    %v914 = vsel %vm59, %v902, 0
    %v917 = vsel %vm59, %v903, 0
    %919 = vmatprep.subr.mxu0 0.0
    %920 = vmatpush1.msra.mxu0 %v904
    %921 = vmatprep.subr.mxu0 0.0
    %922 = vmatpush1.msra.mxu0 %v905
    %923 = vmatprep.subr.mxu0 0.0
    %924 = vmatpush1.msra.mxu0 %v906
    %925 = vmatprep.subr.mxu0 0.0
    %926 = vmatpush1.msra.mxu0 %v907
    %927 = vmatprep.subr.mxu0 0.0
    %928 = vmatpush1.msra.mxu0 0.0
    %929 = vmatprep.subr.mxu0 0.0
    %930 = vmatpush1.msra.mxu0 0.0
    %931 = vmatprep.subr.mxu0 0.0
    %932 = vmatpush1.msra.mxu0 0.0
    %933 = vmatprep.subr.mxu0 0.0
    %934 = vmatpush1.msra.mxu0 0.0
    %935 = vmatprep.subr.mxu0 0.0
    %936 = vmatpush1.msra.mxu0 0.0
    %937 = vmatprep.subr.mxu0 0.0
    %938 = vmatpush1.msra.mxu0 0.0
    %939 = vmatprep.subr.mxu0 0.0
    %940 = vmatpush1.msra.mxu0 0.0
    %941 = vmatprep.subr.mxu0 0.0
    %942 = vmatpush1.msra.mxu0 0.0
    %943 = vmatprep.subr.mxu0 0.0
    %944 = vmatpush1.msra.mxu0 0.0
    %945 = vmatprep.subr.mxu0 0.0
    %946 = vmatpush1.msra.mxu0 0.0
    %947 = vmatprep.subr.mxu0 0.0
    %948 = vmatpush1.msra.mxu0 0.0
    %949 = vmatprep.subr.mxu0 0.0
    %950 = vmatpush1.msra.mxu0 0.0
    %951 = vmatprep.subr.mxu0 0.0
    %952 = vmatpush1.msra.mxu0 0.0
    %953 = vmatprep.subr.mxu0 0.0
    %954 = vmatpush1.msra.mxu0 0.0
    %955 = vmatprep.subr.mxu0 0.0
    %956 = vmatpush1.msra.mxu0 0.0
    %957 = vmatprep.subr.mxu0 0.0
    %958 = vmatpush1.msra.mxu0 0.0
    %959 = vmatprep.subr.mxu0 0.0
    %960 = vmatpush1.msra.mxu0 0.0
    %961 = vmatprep.subr.mxu0 0.0
    %962 = vmatpush1.msra.mxu0 0.0
    %963 = vmatprep.subr.mxu0 0.0
    %964 = vmatpush1.msra.mxu0 0.0
    %965 = vmatprep.subr.mxu0 0.0
    %966 = vmatpush1.msra.mxu0 0.0
    %967 = vmatprep.subr.mxu0 0.0
    %968 = vmatpush1.msra.mxu0 0.0
    %969 = vmatprep.subr.mxu0 0.0
    %970 = vmatpush1.msra.mxu0 0.0
    %971 = vmatprep.subr.mxu0 0.0
    %972 = vmatpush1.msra.mxu0 0.0
    %973 = vmatprep.subr.mxu0 0.0
    %974 = vmatpush1.msra.mxu0 0.0
    %975 = vmatprep.subr.mxu0 0.0
    %976 = vmatpush1.msra.mxu0 0.0
    %977 = vmatprep.subr.mxu0 0.0
    %978 = vmatpush1.msra.mxu0 0.0
    %979 = vmatprep.subr.mxu0 0.0
    %980 = vmatpush1.msra.mxu0 0.0
    %981 = vmatprep.subr.mxu0 0.0
    %982 = vmatpush1.msra.mxu0 0.0
    %983 = vmatprep.mubr.f32.mxu0 0.0
    %984 = vmatmul.mubr.f32.gmra.mrb[0].mxu0 %v914
    %v985 = vpop.f32.mrb[0].mxu0
    %v986 = vadd.f32 %v912, %v985
    %v987 = vpop.f32.mrb[0].mxu0
    %988 = vmatprep.mubr.f32.mxu0 0.0
    %989 = vmatmul.mubr.f32.gmra.mrb[0].mxu0 %v917
    %v990 = vpop.f32.mrb[0].mxu0
    %v991 = vadd.f32 %v912, %v990
    %v992 = vpop.f32.mrb[0].mxu0
    %993 = vdwg.mxu0
    %v994 = vld [vmem:[#allocation5 + $0x188] sm:$0xff]
    %v995 = vld [vmem:[#allocation5 + $0x190] sm:$0xff]
    %v996 = vld [vmem:[#allocation5 + $0x198] sm:$0xff]
    %v997 = vld [vmem:[#allocation5 + $0x1a0] sm:$0xff]
    %v998 = vld [vmem:[#allocation5 + $0x1a8] sm:$0x1]
    %v999 = vlaneseq
    %v1000 = vshrl.u32 %v999, 7
    %v1001 = vsub.s32 0, %v1000
    %v1002 = vrot.slane %v998, %v1001
    %1003 = vmatprep.subr.mxu0 0.0
    %1004 = vmatpush1.msra.mxu0 %v994
    %1005 = vmatprep.subr.mxu0 0.0
    %1006 = vmatpush1.msra.mxu0 %v995
    %1007 = vmatprep.subr.mxu0 0.0
    %1008 = vmatpush1.msra.mxu0 %v996
    %1009 = vmatprep.subr.mxu0 0.0
    %1010 = vmatpush1.msra.mxu0 %v997
    %1011 = vmatprep.subr.mxu0 0.0
    %1012 = vmatpush1.msra.mxu0 0.0
    %1013 = vmatprep.subr.mxu0 0.0
    %1014 = vmatpush1.msra.mxu0 0.0
    %1015 = vmatprep.subr.mxu0 0.0
    %1016 = vmatpush1.msra.mxu0 0.0
    %1017 = vmatprep.subr.mxu0 0.0
    %1018 = vmatpush1.msra.mxu0 0.0
    %1019 = vmatprep.subr.mxu0 0.0
    %1020 = vmatpush1.msra.mxu0 0.0
    %1021 = vmatprep.subr.mxu0 0.0
    %1022 = vmatpush1.msra.mxu0 0.0
    %1023 = vmatprep.subr.mxu0 0.0
    %1024 = vmatpush1.msra.mxu0 0.0
    %1025 = vmatprep.subr.mxu0 0.0
    %1026 = vmatpush1.msra.mxu0 0.0
    %1027 = vmatprep.subr.mxu0 0.0
    %1028 = vmatpush1.msra.mxu0 0.0
    %1029 = vmatprep.subr.mxu0 0.0
    %1030 = vmatpush1.msra.mxu0 0.0
    %1031 = vmatprep.subr.mxu0 0.0
    %1032 = vmatpush1.msra.mxu0 0.0
    %1033 = vmatprep.subr.mxu0 0.0
    %1034 = vmatpush1.msra.mxu0 0.0
    %1035 = vmatprep.subr.mxu0 0.0
    %1036 = vmatpush1.msra.mxu0 0.0
    %1037 = vmatprep.subr.mxu0 0.0
    %1038 = vmatpush1.msra.mxu0 0.0
    %1039 = vmatprep.subr.mxu0 0.0
    %1040 = vmatpush1.msra.mxu0 0.0
    %1041 = vmatprep.subr.mxu0 0.0
    %1042 = vmatpush1.msra.mxu0 0.0
    %1043 = vmatprep.subr.mxu0 0.0
    %1044 = vmatpush1.msra.mxu0 0.0
    %1045 = vmatprep.subr.mxu0 0.0
    %1046 = vmatpush1.msra.mxu0 0.0
    %1047 = vmatprep.subr.mxu0 0.0
    %1048 = vmatpush1.msra.mxu0 0.0
    %1049 = vmatprep.subr.mxu0 0.0
    %1050 = vmatpush1.msra.mxu0 0.0
    %1051 = vmatprep.subr.mxu0 0.0
    %1052 = vmatpush1.msra.mxu0 0.0
    %1053 = vmatprep.subr.mxu0 0.0
    %1054 = vmatpush1.msra.mxu0 0.0
    %1055 = vmatprep.subr.mxu0 0.0
    %1056 = vmatpush1.msra.mxu0 0.0
    %1057 = vmatprep.subr.mxu0 0.0
    %1058 = vmatpush1.msra.mxu0 0.0
    %1059 = vmatprep.subr.mxu0 0.0
    %1060 = vmatpush1.msra.mxu0 0.0
    %1061 = vmatprep.subr.mxu0 0.0
    %1062 = vmatpush1.msra.mxu0 0.0
    %1063 = vmatprep.subr.mxu0 0.0
    %1064 = vmatpush1.msra.mxu0 0.0
    %1065 = vmatprep.subr.mxu0 0.0
    %1066 = vmatpush1.msra.mxu0 0.0
    %1067 = vmatprep.mubr.f32.mxu0 0.0
    %1068 = vmatmul.mubr.f32.gmra.mrb[0].mxu0 %v914
    %v1069 = vpop.f32.mrb[0].mxu0
    %v1070 = vadd.f32 %v1002, %v1069
    %v1071 = vpop.f32.mrb[0].mxu0
    %1072 = vmatprep.mubr.f32.mxu0 0.0
    %1073 = vmatmul.mubr.f32.gmra.mrb[0].mxu0 %v917
    %v1074 = vpop.f32.mrb[0].mxu0
    %v1075 = vadd.f32 %v1002, %v1074
    %v1076 = vpop.f32.mrb[0].mxu0
    %1077 = vdwg.mxu0
    %v1078 = vld [vmem:[#allocation5 + $0x1b0] sm:$0xff]
    %v1079 = vld [vmem:[#allocation5 + $0x1b8] sm:$0xff]
    %v1080 = vld [vmem:[#allocation5 + $0x1c0] sm:$0xff]
    %v1081 = vld [vmem:[#allocation5 + $0x1c8] sm:$0xff]
    %v1082 = vld [vmem:[#allocation5 + $0x1d0] sm:$0x1]
    %v1083 = vlaneseq
    %v1084 = vshrl.u32 %v1083, 7
    %v1085 = vsub.s32 0, %v1084
    %v1086 = vrot.slane %v1082, %v1085
    %1087 = vmatprep.subr.mxu0 0.0
    %1088 = vmatpush1.msra.mxu0 %v1078
    %1089 = vmatprep.subr.mxu0 0.0
    %1090 = vmatpush1.msra.mxu0 %v1079
    %1091 = vmatprep.subr.mxu0 0.0
    %1092 = vmatpush1.msra.mxu0 %v1080
    %1093 = vmatprep.subr.mxu0 0.0
    %1094 = vmatpush1.msra.mxu0 %v1081
    %1095 = vmatprep.subr.mxu0 0.0
    %1096 = vmatpush1.msra.mxu0 0.0
    %1097 = vmatprep.subr.mxu0 0.0
    %1098 = vmatpush1.msra.mxu0 0.0
    %1099 = vmatprep.subr.mxu0 0.0
    %1100 = vmatpush1.msra.mxu0 0.0
    %1101 = vmatprep.subr.mxu0 0.0
    %1102 = vmatpush1.msra.mxu0 0.0
    %1103 = vmatprep.subr.mxu0 0.0
    %1104 = vmatpush1.msra.mxu0 0.0
    %1105 = vmatprep.subr.mxu0 0.0
    %1106 = vmatpush1.msra.mxu0 0.0
    %1107 = vmatprep.subr.mxu0 0.0
    %1108 = vmatpush1.msra.mxu0 0.0
    %1109 = vmatprep.subr.mxu0 0.0
    %1110 = vmatpush1.msra.mxu0 0.0
    %1111 = vmatprep.subr.mxu0 0.0
    %1112 = vmatpush1.msra.mxu0 0.0
    %1113 = vmatprep.subr.mxu0 0.0
    %1114 = vmatpush1.msra.mxu0 0.0
    %1115 = vmatprep.subr.mxu0 0.0
    %1116 = vmatpush1.msra.mxu0 0.0
    %1117 = vmatprep.subr.mxu0 0.0
    %1118 = vmatpush1.msra.mxu0 0.0
    %1119 = vmatprep.subr.mxu0 0.0
    %1120 = vmatpush1.msra.mxu0 0.0
    %1121 = vmatprep.subr.mxu0 0.0
    %1122 = vmatpush1.msra.mxu0 0.0
    %1123 = vmatprep.subr.mxu0 0.0
    %1124 = vmatpush1.msra.mxu0 0.0
    %1125 = vmatprep.subr.mxu0 0.0
    %1126 = vmatpush1.msra.mxu0 0.0
    %1127 = vmatprep.subr.mxu0 0.0
    %1128 = vmatpush1.msra.mxu0 0.0
    %1129 = vmatprep.subr.mxu0 0.0
    %1130 = vmatpush1.msra.mxu0 0.0
    %1131 = vmatprep.subr.mxu0 0.0
    %1132 = vmatpush1.msra.mxu0 0.0
    %1133 = vmatprep.subr.mxu0 0.0
    %1134 = vmatpush1.msra.mxu0 0.0
    %1135 = vmatprep.subr.mxu0 0.0
    %1136 = vmatpush1.msra.mxu0 0.0
    %1137 = vmatprep.subr.mxu0 0.0
    %1138 = vmatpush1.msra.mxu0 0.0
    %1139 = vmatprep.subr.mxu0 0.0
    %1140 = vmatpush1.msra.mxu0 0.0
    %1141 = vmatprep.subr.mxu0 0.0
    %1142 = vmatpush1.msra.mxu0 0.0
    %1143 = vmatprep.subr.mxu0 0.0
    %1144 = vmatpush1.msra.mxu0 0.0
    %1145 = vmatprep.subr.mxu0 0.0
    %1146 = vmatpush1.msra.mxu0 0.0
    %1147 = vmatprep.subr.mxu0 0.0
    %1148 = vmatpush1.msra.mxu0 0.0
    %1149 = vmatprep.subr.mxu0 0.0
    %1150 = vmatpush1.msra.mxu0 0.0
    %1151 = vmatprep.mubr.f32.mxu0 0.0
    %1152 = vmatmul.mubr.f32.gmra.mrb[0].mxu0 %v914
    %v1153 = vpop.f32.mrb[0].mxu0
    %v1154 = vadd.f32 %v1086, %v1153
    %v1155 = vpop.f32.mrb[0].mxu0
    %1156 = vmatprep.mubr.f32.mxu0 0.0
    %1157 = vmatmul.mubr.f32.gmra.mrb[0].mxu0 %v917
    %v1158 = vpop.f32.mrb[0].mxu0
    %v1159 = vadd.f32 %v1086, %v1158
    %v1160 = vpop.f32.mrb[0].mxu0
    %1161 = vdwg.mxu0
    %v1162 = vmul.f32 %v986, 0.35355338
    %v1163 = vmul.f32 %v991, 0.35355338
    %v1164 = vmul.f32 %v1162, %v1070
    %v1165 = vmul.f32 %v1162, %v1075
    %v1166 = vmul.f32 %v1163, %v1070
    %v1167 = vmul.f32 %v1163, %v1075
    %v1169 = vsel %vm59, %v1164, 0
    %v1172 = vsel %vm59, %v1165, 0
    %v1175 = vsel %vm59, %v1166, 0
    %v1178 = vsel %vm59, %v1167, 0
    %1180 = vmatprep.subr.mxu0 0.0
    %1181 = vmatpush1.msra.mxu0 %v40
    %1182 = vmatprep.subr.mxu0 0.0
    %1183 = vmatpush1.msra.mxu0 %v41
    %1184 = vmatprep.subr.mxu0 0.0
    %1185 = vmatpush1.msra.mxu0 %v42
    %1186 = vmatprep.subr.mxu0 0.0
    %1187 = vmatpush1.msra.mxu0 %v43
    %1188 = vmatprep.subr.mxu0 0.0
    %1189 = vmatpush1.msra.mxu0 0.0
    %1190 = vmatprep.subr.mxu0 0.0
    %1191 = vmatpush1.msra.mxu0 0.0
    %1192 = vmatprep.subr.mxu0 0.0
    %1193 = vmatpush1.msra.mxu0 0.0
    %1194 = vmatprep.subr.mxu0 0.0
    %1195 = vmatpush1.msra.mxu0 0.0
    %1196 = vmatprep.subr.mxu0 0.0
    %1197 = vmatpush1.msra.mxu0 0.0
    %1198 = vmatprep.subr.mxu0 0.0
    %1199 = vmatpush1.msra.mxu0 0.0
    %1200 = vmatprep.subr.mxu0 0.0
    %1201 = vmatpush1.msra.mxu0 0.0
    %1202 = vmatprep.subr.mxu0 0.0
    %1203 = vmatpush1.msra.mxu0 0.0
    %1204 = vmatprep.subr.mxu0 0.0
    %1205 = vmatpush1.msra.mxu0 0.0
    %1206 = vmatprep.subr.mxu0 0.0
    %1207 = vmatpush1.msra.mxu0 0.0
    %1208 = vmatprep.subr.mxu0 0.0
    %1209 = vmatpush1.msra.mxu0 0.0
    %1210 = vmatprep.subr.mxu0 0.0
    %1211 = vmatpush1.msra.mxu0 0.0
    %1212 = vmatprep.subr.mxu0 0.0
    %1213 = vmatpush1.msra.mxu0 0.0
    %1214 = vmatprep.subr.mxu0 0.0
    %1215 = vmatpush1.msra.mxu0 0.0
    %1216 = vmatprep.subr.mxu0 0.0
    %1217 = vmatpush1.msra.mxu0 0.0
    %1218 = vmatprep.subr.mxu0 0.0
    %1219 = vmatpush1.msra.mxu0 0.0
    %1220 = vmatprep.subr.mxu0 0.0
    %1221 = vmatpush1.msra.mxu0 0.0
    %1222 = vmatprep.subr.mxu0 0.0
    %1223 = vmatpush1.msra.mxu0 0.0
    %1224 = vmatprep.subr.mxu0 0.0
    %1225 = vmatpush1.msra.mxu0 0.0
    %1226 = vmatprep.subr.mxu0 0.0
    %1227 = vmatpush1.msra.mxu0 0.0
    %1228 = vmatprep.subr.mxu0 0.0
    %1229 = vmatpush1.msra.mxu0 0.0
    %1230 = vmatprep.subr.mxu0 0.0
    %1231 = vmatpush1.msra.mxu0 0.0
    %1232 = vmatprep.subr.mxu0 0.0
    %1233 = vmatpush1.msra.mxu0 0.0
    %1234 = vmatprep.subr.mxu0 0.0
    %1235 = vmatpush1.msra.mxu0 0.0
    %1236 = vmatprep.subr.mxu0 0.0
    %1237 = vmatpush1.msra.mxu0 0.0
    %1238 = vmatprep.subr.mxu0 0.0
    %1239 = vmatpush1.msra.mxu0 0.0
    %1240 = vmatprep.subr.mxu0 0.0
    %1241 = vmatpush1.msra.mxu0 0.0
    %1242 = vmatprep.subr.mxu0 0.0
    %1243 = vmatpush1.msra.mxu0 0.0
    %1244 = vmatprep.mubr.f32.mxu0 0.0
    %1245 = vmatmul.mubr.f32.gmra.mrb[0].mxu0 %v1169
    %v1246 = vpop.f32.mrb[0].mxu0
    %v1247 = vadd.f32 0.0, %v1246
    %v1248 = vpop.f32.mrb[0].mxu0
    %1249 = vmatprep.mubr.f32.mxu0 0.0
    %1250 = vmatmul.mubr.f32.gmra.mrb[0].mxu0 %v1172
    %v1251 = vpop.f32.mrb[0].mxu0
    %v1252 = vadd.f32 0.0, %v1251
    %v1253 = vpop.f32.mrb[0].mxu0
    %1254 = vmatprep.mubr.f32.mxu0 0.0
    %1255 = vmatmul.mubr.f32.gmra.mrb[0].mxu0 %v1175
    %v1256 = vpop.f32.mrb[0].mxu0
    %v1257 = vadd.f32 0.0, %v1256
    %v1258 = vpop.f32.mrb[0].mxu0
    %1259 = vmatprep.mubr.f32.mxu0 0.0
    %1260 = vmatmul.mubr.f32.gmra.mrb[0].mxu0 %v1178
    %v1261 = vpop.f32.mrb[0].mxu0
    %v1262 = vadd.f32 0.0, %v1261
    %v1263 = vpop.f32.mrb[0].mxu0
    %1264 = vdwg.mxu0
    %v1265 = vmax.f32 %v1247, %v1252
    %v1266 = vsub.f32 %v1247, %v1265
    %v1267 = vmul.f32 %v1266, 1.442695
    %v1268 = vpow.pop %v1267
    %v1269 = vsub.f32 %v1252, %v1265
    %v1270 = vmul.f32 %v1269, 1.442695
    %v1271 = vpow.pop %v1270
    %v1272 = vadd.f32 %v1268, %v1271
    %v1273 = vrcp.pop %v1272
    %v1274 = vmul.f32 %v1268, %v1273
    %v1275 = vmul.f32 %v1271, %v1273
    %v1276 = vmax.f32 %v1257, %v1262
    %v1277 = vsub.f32 %v1257, %v1276
    %v1278 = vmul.f32 %v1277, 1.442695
    %v1279 = vpow.pop %v1278
    %v1280 = vsub.f32 %v1262, %v1276
    %v1281 = vmul.f32 %v1280, 1.442695
    %v1282 = vpow.pop %v1281
    %v1283 = vadd.f32 %v1279, %v1282
    %v1284 = vrcp.pop %v1283
    %v1285 = vmul.f32 %v1279, %v1284
    %v1286 = vmul.f32 %v1282, %v1284
    %v1288 = vsel %vm434, %v1274, 0
    %v1291 = vsel %vm434, %v1275, 0
    %v1294 = vsel %vm434, %v1285, 0
    %v1297 = vsel %vm434, %v1286, 0
    %1299 = vmatprep.subr.mxu0 0.0
    %1300 = vmatpush1.msra.mxu0 %v449
    %1301 = vmatprep.subr.mxu0 0.0
    %1302 = vmatpush1.msra.mxu0 0.0
    %1303 = vmatprep.subr.mxu0 0.0
    %1304 = vmatpush1.msra.mxu0 0.0
    %1305 = vmatprep.subr.mxu0 0.0
    %1306 = vmatpush1.msra.mxu0 0.0
    %1307 = vmatprep.subr.mxu0 0.0
    %1308 = vmatpush1.msra.mxu0 0.0
    %1309 = vmatprep.subr.mxu0 0.0
    %1310 = vmatpush1.msra.mxu0 0.0
    %1311 = vmatprep.subr.mxu0 0.0
    %1312 = vmatpush1.msra.mxu0 0.0
    %1313 = vmatprep.subr.mxu0 0.0
    %1314 = vmatpush1.msra.mxu0 0.0
    %1315 = vmatprep.subr.mxu0 0.0
    %1316 = vmatpush1.msra.mxu0 0.0
    %1317 = vmatprep.subr.mxu0 0.0
    %1318 = vmatpush1.msra.mxu0 0.0
    %1319 = vmatprep.subr.mxu0 0.0
    %1320 = vmatpush1.msra.mxu0 0.0
    %1321 = vmatprep.subr.mxu0 0.0
    %1322 = vmatpush1.msra.mxu0 0.0
    %1323 = vmatprep.subr.mxu0 0.0
    %1324 = vmatpush1.msra.mxu0 0.0
    %1325 = vmatprep.subr.mxu0 0.0
    %1326 = vmatpush1.msra.mxu0 0.0
    %1327 = vmatprep.subr.mxu0 0.0
    %1328 = vmatpush1.msra.mxu0 0.0
    %1329 = vmatprep.subr.mxu0 0.0
    %1330 = vmatpush1.msra.mxu0 0.0
    %1331 = vmatprep.subr.mxu0 0.0
    %1332 = vmatpush1.msra.mxu0 0.0
    %1333 = vmatprep.subr.mxu0 0.0
    %1334 = vmatpush1.msra.mxu0 0.0
    %1335 = vmatprep.subr.mxu0 0.0
    %1336 = vmatpush1.msra.mxu0 0.0
    %1337 = vmatprep.subr.mxu0 0.0
    %1338 = vmatpush1.msra.mxu0 0.0
    %1339 = vmatprep.subr.mxu0 0.0
    %1340 = vmatpush1.msra.mxu0 0.0
    %1341 = vmatprep.subr.mxu0 0.0
    %1342 = vmatpush1.msra.mxu0 0.0
    %1343 = vmatprep.subr.mxu0 0.0
    %1344 = vmatpush1.msra.mxu0 0.0
    %1345 = vmatprep.subr.mxu0 0.0
    %1346 = vmatpush1.msra.mxu0 0.0
    %1347 = vmatprep.subr.mxu0 0.0
    %1348 = vmatpush1.msra.mxu0 0.0
    %1349 = vmatprep.subr.mxu0 0.0
    %1350 = vmatpush1.msra.mxu0 0.0
    %1351 = vmatprep.subr.mxu0 0.0
    %1352 = vmatpush1.msra.mxu0 0.0
    %1353 = vmatprep.subr.mxu0 0.0
    %1354 = vmatpush1.msra.mxu0 0.0
    %1355 = vmatprep.subr.mxu0 0.0
    %1356 = vmatpush1.msra.mxu0 0.0
    %1357 = vmatprep.subr.mxu0 0.0
    %1358 = vmatpush1.msra.mxu0 0.0
    %1359 = vmatprep.subr.mxu0 0.0
    %1360 = vmatpush1.msra.mxu0 0.0
    %1361 = vmatprep.subr.mxu0 0.0
    %1362 = vmatpush1.msra.mxu0 0.0
    %1363 = vmatprep.mubr.f32.mxu0 0.0
    %1364 = vmatmul.mubr.f32.gmra.mrb[0].mxu0 %v1288
    %v1365 = vpop.f32.mrb[0].mxu0
    %v1366 = vadd.f32 0.0, %v1365
    %v1367 = vpop.f32.mrb[0].mxu0
    %1368 = vmatprep.mubr.f32.mxu0 0.0
    %1369 = vmatmul.mubr.f32.gmra.mrb[0].mxu0 %v1291
    %v1370 = vpop.f32.mrb[0].mxu0
    %v1371 = vadd.f32 0.0, %v1370
    %v1372 = vpop.f32.mrb[0].mxu0
    %1373 = vmatprep.mubr.f32.mxu0 0.0
    %1374 = vmatmul.mubr.f32.gmra.mrb[0].mxu0 %v1294
    %v1375 = vpop.f32.mrb[0].mxu0
    %v1376 = vadd.f32 0.0, %v1375
    %v1377 = vpop.f32.mrb[0].mxu0
    %1378 = vmatprep.mubr.f32.mxu0 0.0
    %1379 = vmatmul.mubr.f32.gmra.mrb[0].mxu0 %v1297
    %v1380 = vpop.f32.mrb[0].mxu0
    %v1381 = vadd.f32 0.0, %v1380
    %v1382 = vpop.f32.mrb[0].mxu0
    %1383 = vdwg.mxu0
    %v1384 = vmul.f32 %v1366, %v1154
    %v1385 = vmul.f32 %v1371, %v1159
    %v1386 = vadd.f32 %v1384, %v1385
    %v1387 = vmul.f32 %v1376, %v1154
    %v1388 = vmul.f32 %v1381, %v1159
    %v1389 = vadd.f32 %v1387, %v1388
    %v1390 = vld [vmem:[#allocation5 + $0x1d8] sm:$0xff]
    %v1391 = vld [vmem:[#allocation5 + $0x1e0] sm:$0xff]
    %v1392 = vld [vmem:[#allocation5 + $0x1e8] sm:$0xff]
    %v1393 = vld [vmem:[#allocation5 + $0x1f0] sm:$0xff]
    %v1394 = vld [vmem:[#allocation5 + $0x1f8] sm:$0x1]
    %v1395 = vlaneseq
    %v1396 = vshrl.u32 %v1395, 7
    %v1397 = vsub.s32 0, %v1396
    %v1398 = vrot.slane %v1394, %v1397
    %v1400 = vsel %vm59, %v1386, 0
    %v1403 = vsel %vm59, %v1389, 0
    %1405 = vmatprep.subr.mxu0 0.0
    %1406 = vmatpush1.msra.mxu0 %v1390
    %1407 = vmatprep.subr.mxu0 0.0
    %1408 = vmatpush1.msra.mxu0 %v1391
    %1409 = vmatprep.subr.mxu0 0.0
    %1410 = vmatpush1.msra.mxu0 %v1392
    %1411 = vmatprep.subr.mxu0 0.0
    %1412 = vmatpush1.msra.mxu0 %v1393
    %1413 = vmatprep.subr.mxu0 0.0
    %1414 = vmatpush1.msra.mxu0 0.0
    %1415 = vmatprep.subr.mxu0 0.0
    %1416 = vmatpush1.msra.mxu0 0.0
    %1417 = vmatprep.subr.mxu0 0.0
    %1418 = vmatpush1.msra.mxu0 0.0
    %1419 = vmatprep.subr.mxu0 0.0
    %1420 = vmatpush1.msra.mxu0 0.0
    %1421 = vmatprep.subr.mxu0 0.0
    %1422 = vmatpush1.msra.mxu0 0.0
    %1423 = vmatprep.subr.mxu0 0.0
    %1424 = vmatpush1.msra.mxu0 0.0
    %1425 = vmatprep.subr.mxu0 0.0
    %1426 = vmatpush1.msra.mxu0 0.0
    %1427 = vmatprep.subr.mxu0 0.0
    %1428 = vmatpush1.msra.mxu0 0.0
    %1429 = vmatprep.subr.mxu0 0.0
    %1430 = vmatpush1.msra.mxu0 0.0
    %1431 = vmatprep.subr.mxu0 0.0
    %1432 = vmatpush1.msra.mxu0 0.0
    %1433 = vmatprep.subr.mxu0 0.0
    %1434 = vmatpush1.msra.mxu0 0.0
    %1435 = vmatprep.subr.mxu0 0.0
    %1436 = vmatpush1.msra.mxu0 0.0
    %1437 = vmatprep.subr.mxu0 0.0
    %1438 = vmatpush1.msra.mxu0 0.0
    %1439 = vmatprep.subr.mxu0 0.0
    %1440 = vmatpush1.msra.mxu0 0.0
    %1441 = vmatprep.subr.mxu0 0.0
    %1442 = vmatpush1.msra.mxu0 0.0
    %1443 = vmatprep.subr.mxu0 0.0
    %1444 = vmatpush1.msra.mxu0 0.0
    %1445 = vmatprep.subr.mxu0 0.0
    %1446 = vmatpush1.msra.mxu0 0.0
    %1447 = vmatprep.subr.mxu0 0.0
    %1448 = vmatpush1.msra.mxu0 0.0
    %1449 = vmatprep.subr.mxu0 0.0
    %1450 = vmatpush1.msra.mxu0 0.0
    %1451 = vmatprep.subr.mxu0 0.0
    %1452 = vmatpush1.msra.mxu0 0.0
    %1453 = vmatprep.subr.mxu0 0.0
    %1454 = vmatpush1.msra.mxu0 0.0
    %1455 = vmatprep.subr.mxu0 0.0
    %1456 = vmatpush1.msra.mxu0 0.0
    %1457 = vmatprep.subr.mxu0 0.0
    %1458 = vmatpush1.msra.mxu0 0.0
    %1459 = vmatprep.subr.mxu0 0.0
    %1460 = vmatpush1.msra.mxu0 0.0
    %1461 = vmatprep.subr.mxu0 0.0
    %1462 = vmatpush1.msra.mxu0 0.0
    %1463 = vmatprep.subr.mxu0 0.0
    %1464 = vmatpush1.msra.mxu0 0.0
    %1465 = vmatprep.subr.mxu0 0.0
    %1466 = vmatpush1.msra.mxu0 0.0
    %1467 = vmatprep.subr.mxu0 0.0
    %1468 = vmatpush1.msra.mxu0 0.0
    %1469 = vmatprep.mubr.f32.mxu0 0.0
    %1470 = vmatmul.mubr.f32.gmra.mrb[0].mxu0 %v1400
    %v1471 = vpop.f32.mrb[0].mxu0
    %v1472 = vadd.f32 %v1398, %v1471
    %v1473 = vpop.f32.mrb[0].mxu0
    %1474 = vmatprep.mubr.f32.mxu0 0.0
    %1475 = vmatmul.mubr.f32.gmra.mrb[0].mxu0 %v1403
    %v1476 = vpop.f32.mrb[0].mxu0
    %v1477 = vadd.f32 %v1398, %v1476
    %v1478 = vpop.f32.mrb[0].mxu0
    %1479 = vdwg.mxu0
    %v1480 = vadd.f32 %v902, %v1472
    %v1481 = vadd.f32 %v903, %v1477
    %v1482 = vld [vmem:[#allocation5 + $0x200] sm:$0x1]
    %v1483 = vld [vmem:[#allocation5 + $0x208] sm:$0x1]
    %v1484 = vsel %vm59, %v1480, 0.0
    %1485 = vadd.xlane.f32.xlu0 %v1484
    %v1486 = vpop.xlane.xlu0 %1485
    %v1487 = vsel %vm59, %v1481, 0.0
    %1488 = vadd.xlane.f32.xlu0 %v1487
    %v1489 = vpop.xlane.xlu0 %1488
    %v1490 = vmul.f32 %v1486, %v642
    %v1491 = vmul.f32 %v1489, %v642
    %v1492 = vsub.f32 %v1480, %v1490
    %v1493 = vsub.f32 %v1481, %v1491
    %v1494 = vmul.f32 %v1492, %v1492
    %v1495 = vmul.f32 %v1493, %v1493
    %v1496 = vsel %vm59, %v1494, 0.0
    %1497 = vadd.xlane.f32.xlu0 %v1496
    %v1498 = vpop.xlane.xlu0 %1497
    %v1499 = vsel %vm59, %v1495, 0.0
    %1500 = vadd.xlane.f32.xlu0 %v1499
    %v1501 = vpop.xlane.xlu0 %1500
    %v1502 = vmul.f32 %v1498, %v642
    %v1503 = vmul.f32 %v1501, %v642
    %v1504 = vadd.f32 %v1502, 1e-05
    %v1505 = vadd.f32 %v1503, 1e-05
    %v1506 = vrsqrt.pop %v1504
    %v1507 = vrsqrt.pop %v1505
    %v1508 = vmul.f32 %v1492, %v1506
    %v1509 = vmul.f32 %v1493, %v1507
    %v1510 = vlaneseq
    %v1511 = vshrl.u32 %v1510, 7
    %v1512 = vsub.s32 0, %v1511
    %v1513 = vrot.slane %v1482, %v1512
    %v1514 = vmul.f32 %v1508, %v1513
    %v1515 = vmul.f32 %v1509, %v1513
    %v1516 = vlaneseq
    %v1517 = vshrl.u32 %v1516, 7
    %v1518 = vsub.s32 0, %v1517
    %v1519 = vrot.slane %v1483, %v1518
    %v1520 = vadd.f32 %v1514, %v1519
    %v1521 = vadd.f32 %v1515, %v1519
    %v1522 = vld [vmem:[#allocation5 + $0x210] sm:$0xff]
    %v1523 = vld [vmem:[#allocation5 + $0x218] sm:$0xff]
    %v1524 = vld [vmem:[#allocation5 + $0x220] sm:$0xff]
    %v1525 = vld [vmem:[#allocation5 + $0x228] sm:$0xff]
    %v1526 = vld [vmem:[#allocation5 + $0x230] sm:$0x1]
    %v1527 = vlaneseq
    %v1528 = vshrl.u32 %v1527, 7
    %v1529 = vsub.s32 0, %v1528
    %v1530 = vrot.slane %v1526, %v1529
    %v1532 = vsel %vm59, %v1520, 0
    %v1535 = vsel %vm59, %v1521, 0
    %1537 = vmatprep.subr.mxu0 0.0
    %1538 = vmatpush1.msra.mxu0 %v1522
    %1539 = vmatprep.subr.mxu0 0.0
    %1540 = vmatpush1.msra.mxu0 %v1523
    %1541 = vmatprep.subr.mxu0 0.0
    %1542 = vmatpush1.msra.mxu0 %v1524
    %1543 = vmatprep.subr.mxu0 0.0
    %1544 = vmatpush1.msra.mxu0 %v1525
    %1545 = vmatprep.subr.mxu0 0.0
    %1546 = vmatpush1.msra.mxu0 0.0
    %1547 = vmatprep.subr.mxu0 0.0
    %1548 = vmatpush1.msra.mxu0 0.0
    %1549 = vmatprep.subr.mxu0 0.0
    %1550 = vmatpush1.msra.mxu0 0.0
    %1551 = vmatprep.subr.mxu0 0.0
    %1552 = vmatpush1.msra.mxu0 0.0
    %1553 = vmatprep.subr.mxu0 0.0
    %1554 = vmatpush1.msra.mxu0 0.0
    %1555 = vmatprep.subr.mxu0 0.0
    %1556 = vmatpush1.msra.mxu0 0.0
    %1557 = vmatprep.subr.mxu0 0.0
    %1558 = vmatpush1.msra.mxu0 0.0
    %1559 = vmatprep.subr.mxu0 0.0
    %1560 = vmatpush1.msra.mxu0 0.0
    %1561 = vmatprep.subr.mxu0 0.0
    %1562 = vmatpush1.msra.mxu0 0.0
    %1563 = vmatprep.subr.mxu0 0.0
    %1564 = vmatpush1.msra.mxu0 0.0
    %1565 = vmatprep.subr.mxu0 0.0
    %1566 = vmatpush1.msra.mxu0 0.0
    %1567 = vmatprep.subr.mxu0 0.0
    %1568 = vmatpush1.msra.mxu0 0.0
    %1569 = vmatprep.subr.mxu0 0.0
    %1570 = vmatpush1.msra.mxu0 0.0
    %1571 = vmatprep.subr.mxu0 0.0
    %1572 = vmatpush1.msra.mxu0 0.0
    %1573 = vmatprep.subr.mxu0 0.0
    %1574 = vmatpush1.msra.mxu0 0.0
    %1575 = vmatprep.subr.mxu0 0.0
    %1576 = vmatpush1.msra.mxu0 0.0
    %1577 = vmatprep.subr.mxu0 0.0
    %1578 = vmatpush1.msra.mxu0 0.0
    %1579 = vmatprep.subr.mxu0 0.0
    %1580 = vmatpush1.msra.mxu0 0.0
    %1581 = vmatprep.subr.mxu0 0.0
    %1582 = vmatpush1.msra.mxu0 0.0
    %1583 = vmatprep.subr.mxu0 0.0
    %1584 = vmatpush1.msra.mxu0 0.0
    %1585 = vmatprep.subr.mxu0 0.0
    %1586 = vmatpush1.msra.mxu0 0.0
    %1587 = vmatprep.subr.mxu0 0.0
    %1588 = vmatpush1.msra.mxu0 0.0
    %1589 = vmatprep.subr.mxu0 0.0
    %1590 = vmatpush1.msra.mxu0 0.0
    %1591 = vmatprep.subr.mxu0 0.0
    %1592 = vmatpush1.msra.mxu0 0.0
    %1593 = vmatprep.subr.mxu0 0.0
    %1594 = vmatpush1.msra.mxu0 0.0
    %1595 = vmatprep.subr.mxu0 0.0
    %1596 = vmatpush1.msra.mxu0 0.0
    %1597 = vmatprep.subr.mxu0 0.0
    %1598 = vmatpush1.msra.mxu0 0.0
    %1599 = vmatprep.subr.mxu0 0.0
    %1600 = vmatpush1.msra.mxu0 0.0
    %1601 = vmatprep.mubr.f32.mxu0 0.0
    %1602 = vmatmul.mubr.f32.gmra.mrb[0].mxu0 %v1532
    %v1603 = vpop.f32.mrb[0].mxu0
    %v1604 = vadd.f32 %v1530, %v1603
    %v1605 = vpop.f32.mrb[0].mxu0
    %1606 = vmatprep.mubr.f32.mxu0 0.0
    %1607 = vmatmul.mubr.f32.gmra.mrb[0].mxu0 %v1535
    %v1608 = vpop.f32.mrb[0].mxu0
    %v1609 = vadd.f32 %v1530, %v1608
    %v1610 = vpop.f32.mrb[0].mxu0
    %1611 = vdwg.mxu0
    %v1612 = vmax.f32 %v1604, 0.0
    %v1613 = vmax.f32 %v1609, 0.0
    %v1614 = vld [vmem:[#allocation5 + $0x238] sm:$0xff]
    %v1615 = vld [vmem:[#allocation5 + $0x240] sm:$0xff]
    %v1616 = vld [vmem:[#allocation5 + $0x248] sm:$0xff]
    %v1617 = vld [vmem:[#allocation5 + $0x250] sm:$0xff]
    %v1618 = vld [vmem:[#allocation5 + $0x258] sm:$0xff]
    %v1619 = vld [vmem:[#allocation5 + $0x260] sm:$0xff]
    %v1620 = vld [vmem:[#allocation5 + $0x268] sm:$0xff]
    %v1621 = vld [vmem:[#allocation5 + $0x270] sm:$0xff]
    %v1622 = vld [vmem:[#allocation5 + $0x278] sm:$0x1]
    %v1623 = vlaneseq
    %v1624 = vshrl.u32 %v1623, 7
    %v1625 = vsub.s32 0, %v1624
    %v1626 = vrot.slane %v1622, %v1625
    %v1628 = vsel %vm780, %v1612, 0
    %v1631 = vsel %vm780, %v1613, 0
    %1633 = vmatprep.subr.mxu0 0.0
    %1634 = vmatpush1.msra.mxu0 %v1614
    %1635 = vmatprep.subr.mxu0 0.0
    %1636 = vmatpush1.msra.mxu0 %v1615
    %1637 = vmatprep.subr.mxu0 0.0
    %1638 = vmatpush1.msra.mxu0 %v1616
    %1639 = vmatprep.subr.mxu0 0.0
    %1640 = vmatpush1.msra.mxu0 %v1617
    %1641 = vmatprep.subr.mxu0 0.0
    %1642 = vmatpush1.msra.mxu0 %v1618
    %1643 = vmatprep.subr.mxu0 0.0
    %1644 = vmatpush1.msra.mxu0 %v1619
    %1645 = vmatprep.subr.mxu0 0.0
    %1646 = vmatpush1.msra.mxu0 %v1620
    %1647 = vmatprep.subr.mxu0 0.0
    %1648 = vmatpush1.msra.mxu0 %v1621
    %1649 = vmatprep.subr.mxu0 0.0
    %1650 = vmatpush1.msra.mxu0 0.0
    %1651 = vmatprep.subr.mxu0 0.0
    %1652 = vmatpush1.msra.mxu0 0.0
    %1653 = vmatprep.subr.mxu0 0.0
    %1654 = vmatpush1.msra.mxu0 0.0
    %1655 = vmatprep.subr.mxu0 0.0
    %1656 = vmatpush1.msra.mxu0 0.0
    %1657 = vmatprep.subr.mxu0 0.0
    %1658 = vmatpush1.msra.mxu0 0.0
    %1659 = vmatprep.subr.mxu0 0.0
    %1660 = vmatpush1.msra.mxu0 0.0
    %1661 = vmatprep.subr.mxu0 0.0
    %1662 = vmatpush1.msra.mxu0 0.0
    %1663 = vmatprep.subr.mxu0 0.0
    %1664 = vmatpush1.msra.mxu0 0.0
    %1665 = vmatprep.subr.mxu0 0.0
    %1666 = vmatpush1.msra.mxu0 0.0
    %1667 = vmatprep.subr.mxu0 0.0
    %1668 = vmatpush1.msra.mxu0 0.0
    %1669 = vmatprep.subr.mxu0 0.0
    %1670 = vmatpush1.msra.mxu0 0.0
    %1671 = vmatprep.subr.mxu0 0.0
    %1672 = vmatpush1.msra.mxu0 0.0
    %1673 = vmatprep.subr.mxu0 0.0
    %1674 = vmatpush1.msra.mxu0 0.0
    %1675 = vmatprep.subr.mxu0 0.0
    %1676 = vmatpush1.msra.mxu0 0.0
    %1677 = vmatprep.subr.mxu0 0.0
    %1678 = vmatpush1.msra.mxu0 0.0
    %1679 = vmatprep.subr.mxu0 0.0
    %1680 = vmatpush1.msra.mxu0 0.0
    %1681 = vmatprep.subr.mxu0 0.0
    %1682 = vmatpush1.msra.mxu0 0.0
    %1683 = vmatprep.subr.mxu0 0.0
    %1684 = vmatpush1.msra.mxu0 0.0
    %1685 = vmatprep.subr.mxu0 0.0
    %1686 = vmatpush1.msra.mxu0 0.0
    %1687 = vmatprep.subr.mxu0 0.0
    %1688 = vmatpush1.msra.mxu0 0.0
    %1689 = vmatprep.subr.mxu0 0.0
    %1690 = vmatpush1.msra.mxu0 0.0
    %1691 = vmatprep.subr.mxu0 0.0
    %1692 = vmatpush1.msra.mxu0 0.0
    %1693 = vmatprep.subr.mxu0 0.0
    %1694 = vmatpush1.msra.mxu0 0.0
    %1695 = vmatprep.subr.mxu0 0.0
    %1696 = vmatpush1.msra.mxu0 0.0
    %1697 = vmatprep.mubr.f32.mxu0 0.0
    %1698 = vmatmul.mubr.f32.gmra.mrb[0].mxu0 %v1628
    %v1699 = vpop.f32.mrb[0].mxu0
    %v1700 = vadd.f32 %v1626, %v1699
    %v1701 = vpop.f32.mrb[0].mxu0
    %1702 = vmatprep.mubr.f32.mxu0 0.0
    %1703 = vmatmul.mubr.f32.gmra.mrb[0].mxu0 %v1631
    %v1704 = vpop.f32.mrb[0].mxu0
    %v1705 = vadd.f32 %v1626, %v1704
    %v1706 = vpop.f32.mrb[0].mxu0
    %1707 = vdwg.mxu0
    %v1708 = vadd.f32 %v1520, %v1700
    %v1709 = vadd.f32 %v1521, %v1705
    %v1710 = vld [vmem:[#allocation5 + $0x280] sm:$0x1]
    %v1711 = vld [vmem:[#allocation5 + $0x288] sm:$0x1]
    %v1712 = vsel %vm59, %v1708, 0.0
    %1713 = vadd.xlane.f32.xlu0 %v1712
    %v1714 = vpop.xlane.xlu0 %1713
    %v1715 = vsel %vm59, %v1709, 0.0
    %1716 = vadd.xlane.f32.xlu0 %v1715
    %v1717 = vpop.xlane.xlu0 %1716
    %v1718 = vmul.f32 %v1714, %v642
    %v1719 = vmul.f32 %v1717, %v642
    %v1720 = vsub.f32 %v1708, %v1718
    %v1721 = vsub.f32 %v1709, %v1719
    %v1722 = vmul.f32 %v1720, %v1720
    %v1723 = vmul.f32 %v1721, %v1721
    %v1724 = vsel %vm59, %v1722, 0.0
    %1725 = vadd.xlane.f32.xlu0 %v1724
    %v1726 = vpop.xlane.xlu0 %1725
    %v1727 = vsel %vm59, %v1723, 0.0
    %1728 = vadd.xlane.f32.xlu0 %v1727
    %v1729 = vpop.xlane.xlu0 %1728
    %v1730 = vmul.f32 %v1726, %v642
    %v1731 = vmul.f32 %v1729, %v642
    %v1732 = vadd.f32 %v1730, 1e-05
    %v1733 = vadd.f32 %v1731, 1e-05
    %v1734 = vrsqrt.pop %v1732
    %v1735 = vrsqrt.pop %v1733
    %v1736 = vmul.f32 %v1720, %v1734
    %v1737 = vmul.f32 %v1721, %v1735
    %v1738 = vlaneseq
    %v1739 = vshrl.u32 %v1738, 7
    %v1740 = vsub.s32 0, %v1739
    %v1741 = vrot.slane %v1710, %v1740
    %v1742 = vmul.f32 %v1736, %v1741
    %v1743 = vmul.f32 %v1737, %v1741
    %v1744 = vlaneseq
    %v1745 = vshrl.u32 %v1744, 7
    %v1746 = vsub.s32 0, %v1745
    %v1747 = vrot.slane %v1711, %v1746
    %v1748 = vadd.f32 %v1742, %v1747
    %v1749 = vadd.f32 %v1743, %v1747
    %v1750 = vld [vmem:[#allocation5 + $0x290] sm:$0x1]
    %v1751 = vld [vmem:[#allocation5 + $0x298] sm:$0x1]
    %v1752 = vsel %vm59, %v1748, 0.0
    %1753 = vadd.xlane.f32.xlu0 %v1752
    %v1754 = vpop.xlane.xlu0 %1753
    %v1755 = vsel %vm59, %v1749, 0.0
    %1756 = vadd.xlane.f32.xlu0 %v1755
    %v1757 = vpop.xlane.xlu0 %1756
    %v1758 = vmul.f32 %v1754, %v642
    %v1759 = vmul.f32 %v1757, %v642
    %v1760 = vsub.f32 %v1748, %v1758
    %v1761 = vsub.f32 %v1749, %v1759
    %v1762 = vmul.f32 %v1760, %v1760
    %v1763 = vmul.f32 %v1761, %v1761
    %v1764 = vsel %vm59, %v1762, 0.0
    %1765 = vadd.xlane.f32.xlu0 %v1764
    %v1766 = vpop.xlane.xlu0 %1765
    %v1767 = vsel %vm59, %v1763, 0.0
    %1768 = vadd.xlane.f32.xlu0 %v1767
    %v1769 = vpop.xlane.xlu0 %1768
    %v1770 = vmul.f32 %v1766, %v642
    %v1771 = vmul.f32 %v1769, %v642
    %v1772 = vadd.f32 %v1770, 1e-05
    %v1773 = vadd.f32 %v1771, 1e-05
    %v1774 = vrsqrt.pop %v1772
    %v1775 = vrsqrt.pop %v1773
    %v1776 = vmul.f32 %v1760, %v1774
    %v1777 = vmul.f32 %v1761, %v1775
    %v1778 = vlaneseq
    %v1779 = vshrl.u32 %v1778, 7
    %v1780 = vsub.s32 0, %v1779
    %v1781 = vrot.slane %v1750, %v1780
    %v1782 = vmul.f32 %v1776, %v1781
    %v1783 = vmul.f32 %v1777, %v1781
    %v1784 = vlaneseq
    %v1785 = vshrl.u32 %v1784, 7
    %v1786 = vsub.s32 0, %v1785
    %v1787 = vrot.slane %v1751, %v1786
    %v1788 = vadd.f32 %v1782, %v1787
    %v1789 = vadd.f32 %v1783, %v1787
    %v1790 = vld [vmem:[#allocation5 + $0x2a0] sm:$0xff]
    %v1791 = vld [vmem:[#allocation5 + $0x2a8] sm:$0xff]
    %v1792 = vld [vmem:[#allocation5 + $0x2b0] sm:$0xff]
    %v1793 = vld [vmem:[#allocation5 + $0x2b8] sm:$0xff]
    %v1794 = vld [vmem:[#allocation5 + $0x2c0] sm:$0x1]
    %v1795 = vlaneseq
    %v1796 = vshrl.u32 %v1795, 7
    %v1797 = vsub.s32 0, %v1796
    %v1798 = vrot.slane %v1794, %v1797
    %1799 = vmatprep.subr.mxu0 0.0
    %1800 = vmatpush1.msra.mxu0 %v1790
    %1801 = vmatprep.subr.mxu0 0.0
    %1802 = vmatpush1.msra.mxu0 %v1791
    %1803 = vmatprep.subr.mxu0 0.0
    %1804 = vmatpush1.msra.mxu0 %v1792
    %1805 = vmatprep.subr.mxu0 0.0
    %1806 = vmatpush1.msra.mxu0 %v1793
    %1807 = vmatprep.subr.mxu0 0.0
    %1808 = vmatpush1.msra.mxu0 0.0
    %1809 = vmatprep.subr.mxu0 0.0
    %1810 = vmatpush1.msra.mxu0 0.0
    %1811 = vmatprep.subr.mxu0 0.0
    %1812 = vmatpush1.msra.mxu0 0.0
    %1813 = vmatprep.subr.mxu0 0.0
    %1814 = vmatpush1.msra.mxu0 0.0
    %1815 = vmatprep.subr.mxu0 0.0
    %1816 = vmatpush1.msra.mxu0 0.0
    %1817 = vmatprep.subr.mxu0 0.0
    %1818 = vmatpush1.msra.mxu0 0.0
    %1819 = vmatprep.subr.mxu0 0.0
    %1820 = vmatpush1.msra.mxu0 0.0
    %1821 = vmatprep.subr.mxu0 0.0
    %1822 = vmatpush1.msra.mxu0 0.0
    %1823 = vmatprep.subr.mxu0 0.0
    %1824 = vmatpush1.msra.mxu0 0.0
    %1825 = vmatprep.subr.mxu0 0.0
    %1826 = vmatpush1.msra.mxu0 0.0
    %1827 = vmatprep.subr.mxu0 0.0
    %1828 = vmatpush1.msra.mxu0 0.0
    %1829 = vmatprep.subr.mxu0 0.0
    %1830 = vmatpush1.msra.mxu0 0.0
    %1831 = vmatprep.subr.mxu0 0.0
    %1832 = vmatpush1.msra.mxu0 0.0
    %1833 = vmatprep.subr.mxu0 0.0
    %1834 = vmatpush1.msra.mxu0 0.0
    %1835 = vmatprep.subr.mxu0 0.0
    %1836 = vmatpush1.msra.mxu0 0.0
    %1837 = vmatprep.subr.mxu0 0.0
    %1838 = vmatpush1.msra.mxu0 0.0
    %1839 = vmatprep.subr.mxu0 0.0
    %1840 = vmatpush1.msra.mxu0 0.0
    %1841 = vmatprep.subr.mxu0 0.0
    %1842 = vmatpush1.msra.mxu0 0.0
    %1843 = vmatprep.subr.mxu0 0.0
    %1844 = vmatpush1.msra.mxu0 0.0
    %1845 = vmatprep.subr.mxu0 0.0
    %1846 = vmatpush1.msra.mxu0 0.0
    %1847 = vmatprep.subr.mxu0 0.0
    %1848 = vmatpush1.msra.mxu0 0.0
    %1849 = vmatprep.subr.mxu0 0.0
    %1850 = vmatpush1.msra.mxu0 0.0
    %1851 = vmatprep.subr.mxu0 0.0
    %1852 = vmatpush1.msra.mxu0 0.0
    %1853 = vmatprep.subr.mxu0 0.0
    %1854 = vmatpush1.msra.mxu0 0.0
    %1855 = vmatprep.subr.mxu0 0.0
    %1856 = vmatpush1.msra.mxu0 0.0
    %1857 = vmatprep.subr.mxu0 0.0
    %1858 = vmatpush1.msra.mxu0 0.0
    %1859 = vmatprep.subr.mxu0 0.0
    %1860 = vmatpush1.msra.mxu0 0.0
    %1861 = vmatprep.subr.mxu0 0.0
    %1862 = vmatpush1.msra.mxu0 0.0
    %1863 = vmatprep.mubr.f32.mxu0 0.0
    %1864 = vmatmul.mubr.f32.gmra.mrb[0].mxu0 %v61
    %v1865 = vpop.f32.mrb[0].mxu0
    %v1866 = vadd.f32 %v1798, %v1865
    %v1867 = vpop.f32.mrb[0].mxu0
    %1868 = vmatprep.mubr.f32.mxu0 0.0
    %1869 = vmatmul.mubr.f32.gmra.mrb[0].mxu0 %v64
    %v1870 = vpop.f32.mrb[0].mxu0
    %v1871 = vadd.f32 %v1798, %v1870
    %v1872 = vpop.f32.mrb[0].mxu0
    %1873 = vdwg.mxu0
    %v1874 = vld [vmem:[#allocation5 + $0x2c8] sm:$0xff]
    %v1875 = vld [vmem:[#allocation5 + $0x2d0] sm:$0xff]
    %v1876 = vld [vmem:[#allocation5 + $0x2d8] sm:$0xff]
    %v1877 = vld [vmem:[#allocation5 + $0x2e0] sm:$0xff]
    %v1878 = vld [vmem:[#allocation5 + $0x2e8] sm:$0x1]
    %v1879 = vlaneseq
    %v1880 = vshrl.u32 %v1879, 7
    %v1881 = vsub.s32 0, %v1880
    %v1882 = vrot.slane %v1878, %v1881
    %1883 = vmatprep.subr.mxu0 0.0
    %1884 = vmatpush1.msra.mxu0 %v1874
    %1885 = vmatprep.subr.mxu0 0.0
    %1886 = vmatpush1.msra.mxu0 %v1875
    %1887 = vmatprep.subr.mxu0 0.0
    %1888 = vmatpush1.msra.mxu0 %v1876
    %1889 = vmatprep.subr.mxu0 0.0
    %1890 = vmatpush1.msra.mxu0 %v1877
    %1891 = vmatprep.subr.mxu0 0.0
    %1892 = vmatpush1.msra.mxu0 0.0
    %1893 = vmatprep.subr.mxu0 0.0
    %1894 = vmatpush1.msra.mxu0 0.0
    %1895 = vmatprep.subr.mxu0 0.0
    %1896 = vmatpush1.msra.mxu0 0.0
    %1897 = vmatprep.subr.mxu0 0.0
    %1898 = vmatpush1.msra.mxu0 0.0
    %1899 = vmatprep.subr.mxu0 0.0
    %1900 = vmatpush1.msra.mxu0 0.0
    %1901 = vmatprep.subr.mxu0 0.0
    %1902 = vmatpush1.msra.mxu0 0.0
    %1903 = vmatprep.subr.mxu0 0.0
    %1904 = vmatpush1.msra.mxu0 0.0
    %1905 = vmatprep.subr.mxu0 0.0
    %1906 = vmatpush1.msra.mxu0 0.0
    %1907 = vmatprep.subr.mxu0 0.0
    %1908 = vmatpush1.msra.mxu0 0.0
    %1909 = vmatprep.subr.mxu0 0.0
    %1910 = vmatpush1.msra.mxu0 0.0
    %1911 = vmatprep.subr.mxu0 0.0
    %1912 = vmatpush1.msra.mxu0 0.0
    %1913 = vmatprep.subr.mxu0 0.0
    %1914 = vmatpush1.msra.mxu0 0.0
    %1915 = vmatprep.subr.mxu0 0.0
    %1916 = vmatpush1.msra.mxu0 0.0
    %1917 = vmatprep.subr.mxu0 0.0
    %1918 = vmatpush1.msra.mxu0 0.0
    %1919 = vmatprep.subr.mxu0 0.0
    %1920 = vmatpush1.msra.mxu0 0.0
    %1921 = vmatprep.subr.mxu0 0.0
    %1922 = vmatpush1.msra.mxu0 0.0
    %1923 = vmatprep.subr.mxu0 0.0
    %1924 = vmatpush1.msra.mxu0 0.0
    %1925 = vmatprep.subr.mxu0 0.0
    %1926 = vmatpush1.msra.mxu0 0.0
    %1927 = vmatprep.subr.mxu0 0.0
    %1928 = vmatpush1.msra.mxu0 0.0
    %1929 = vmatprep.subr.mxu0 0.0
    %1930 = vmatpush1.msra.mxu0 0.0
    %1931 = vmatprep.subr.mxu0 0.0
    %1932 = vmatpush1.msra.mxu0 0.0
    %1933 = vmatprep.subr.mxu0 0.0
    %1934 = vmatpush1.msra.mxu0 0.0
    %1935 = vmatprep.subr.mxu0 0.0
    %1936 = vmatpush1.msra.mxu0 0.0
    %1937 = vmatprep.subr.mxu0 0.0
    %1938 = vmatpush1.msra.mxu0 0.0
    %1939 = vmatprep.subr.mxu0 0.0
    %1940 = vmatpush1.msra.mxu0 0.0
    %1941 = vmatprep.subr.mxu0 0.0
    %1942 = vmatpush1.msra.mxu0 0.0
    %1943 = vmatprep.subr.mxu0 0.0
    %1944 = vmatpush1.msra.mxu0 0.0
    %1945 = vmatprep.subr.mxu0 0.0
    %1946 = vmatpush1.msra.mxu0 0.0
    %1947 = vmatprep.mubr.f32.mxu0 0.0
    %1948 = vmatmul.mubr.f32.gmra.mrb[0].mxu0 %v61
    %v1949 = vpop.f32.mrb[0].mxu0
    %v1950 = vadd.f32 %v1882, %v1949
    %v1951 = vpop.f32.mrb[0].mxu0
    %1952 = vmatprep.mubr.f32.mxu0 0.0
    %1953 = vmatmul.mubr.f32.gmra.mrb[0].mxu0 %v64
    %v1954 = vpop.f32.mrb[0].mxu0
    %v1955 = vadd.f32 %v1882, %v1954
    %v1956 = vpop.f32.mrb[0].mxu0
    %1957 = vdwg.mxu0
    %v1958 = vld [vmem:[#allocation5 + $0x2f0] sm:$0xff]
    %v1959 = vld [vmem:[#allocation5 + $0x2f8] sm:$0xff]
    %v1960 = vld [vmem:[#allocation5 + $0x300] sm:$0xff]
    %v1961 = vld [vmem:[#allocation5 + $0x308] sm:$0xff]
    %v1962 = vld [vmem:[#allocation5 + $0x310] sm:$0x1]
    %v1963 = vlaneseq
    %v1964 = vshrl.u32 %v1963, 7
    %v1965 = vsub.s32 0, %v1964
    %v1966 = vrot.slane %v1962, %v1965
    %1967 = vmatprep.subr.mxu0 0.0
    %1968 = vmatpush1.msra.mxu0 %v1958
    %1969 = vmatprep.subr.mxu0 0.0
    %1970 = vmatpush1.msra.mxu0 %v1959
    %1971 = vmatprep.subr.mxu0 0.0
    %1972 = vmatpush1.msra.mxu0 %v1960
    %1973 = vmatprep.subr.mxu0 0.0
    %1974 = vmatpush1.msra.mxu0 %v1961
    %1975 = vmatprep.subr.mxu0 0.0
    %1976 = vmatpush1.msra.mxu0 0.0
    %1977 = vmatprep.subr.mxu0 0.0
    %1978 = vmatpush1.msra.mxu0 0.0
    %1979 = vmatprep.subr.mxu0 0.0
    %1980 = vmatpush1.msra.mxu0 0.0
    %1981 = vmatprep.subr.mxu0 0.0
    %1982 = vmatpush1.msra.mxu0 0.0
    %1983 = vmatprep.subr.mxu0 0.0
    %1984 = vmatpush1.msra.mxu0 0.0
    %1985 = vmatprep.subr.mxu0 0.0
    %1986 = vmatpush1.msra.mxu0 0.0
    %1987 = vmatprep.subr.mxu0 0.0
    %1988 = vmatpush1.msra.mxu0 0.0
    %1989 = vmatprep.subr.mxu0 0.0
    %1990 = vmatpush1.msra.mxu0 0.0
    %1991 = vmatprep.subr.mxu0 0.0
    %1992 = vmatpush1.msra.mxu0 0.0
    %1993 = vmatprep.subr.mxu0 0.0
    %1994 = vmatpush1.msra.mxu0 0.0
    %1995 = vmatprep.subr.mxu0 0.0
    %1996 = vmatpush1.msra.mxu0 0.0
    %1997 = vmatprep.subr.mxu0 0.0
    %1998 = vmatpush1.msra.mxu0 0.0
    %1999 = vmatprep.subr.mxu0 0.0
    %2000 = vmatpush1.msra.mxu0 0.0
    %2001 = vmatprep.subr.mxu0 0.0
    %2002 = vmatpush1.msra.mxu0 0.0
    %2003 = vmatprep.subr.mxu0 0.0
    %2004 = vmatpush1.msra.mxu0 0.0
    %2005 = vmatprep.subr.mxu0 0.0
    %2006 = vmatpush1.msra.mxu0 0.0
    %2007 = vmatprep.subr.mxu0 0.0
    %2008 = vmatpush1.msra.mxu0 0.0
    %2009 = vmatprep.subr.mxu0 0.0
    %2010 = vmatpush1.msra.mxu0 0.0
    %2011 = vmatprep.subr.mxu0 0.0
    %2012 = vmatpush1.msra.mxu0 0.0
    %2013 = vmatprep.subr.mxu0 0.0
    %2014 = vmatpush1.msra.mxu0 0.0
    %2015 = vmatprep.subr.mxu0 0.0
    %2016 = vmatpush1.msra.mxu0 0.0
    %2017 = vmatprep.subr.mxu0 0.0
    %2018 = vmatpush1.msra.mxu0 0.0
    %2019 = vmatprep.subr.mxu0 0.0
    %2020 = vmatpush1.msra.mxu0 0.0
    %2021 = vmatprep.subr.mxu0 0.0
    %2022 = vmatpush1.msra.mxu0 0.0
    %2023 = vmatprep.subr.mxu0 0.0
    %2024 = vmatpush1.msra.mxu0 0.0
    %2025 = vmatprep.subr.mxu0 0.0
    %2026 = vmatpush1.msra.mxu0 0.0
    %2027 = vmatprep.subr.mxu0 0.0
    %2028 = vmatpush1.msra.mxu0 0.0
    %2029 = vmatprep.subr.mxu0 0.0
    %2030 = vmatpush1.msra.mxu0 0.0
    %2031 = vmatprep.mubr.f32.mxu0 0.0
    %2032 = vmatmul.mubr.f32.gmra.mrb[0].mxu0 %v61
    %v2033 = vpop.f32.mrb[0].mxu0
    %v2034 = vadd.f32 %v1966, %v2033
    %v2035 = vpop.f32.mrb[0].mxu0
    %2036 = vmatprep.mubr.f32.mxu0 0.0
    %2037 = vmatmul.mubr.f32.gmra.mrb[0].mxu0 %v64
    %v2038 = vpop.f32.mrb[0].mxu0
    %v2039 = vadd.f32 %v1966, %v2038
    %v2040 = vpop.f32.mrb[0].mxu0
    %2041 = vdwg.mxu0
    %v2042 = vmul.f32 %v1866, 0.35355338
    %v2043 = vmul.f32 %v1871, 0.35355338
    %v2044 = vmul.f32 %v2042, %v1950
    %v2045 = vmul.f32 %v2042, %v1955
    %v2046 = vmul.f32 %v2043, %v1950
    %v2047 = vmul.f32 %v2043, %v1955
    %v2049 = vsel %vm59, %v2044, 0
    %v2052 = vsel %vm59, %v2045, 0
    %v2055 = vsel %vm59, %v2046, 0
    %v2058 = vsel %vm59, %v2047, 0
    %2060 = vmatprep.subr.mxu0 0.0
    %2061 = vmatpush1.msra.mxu0 %v40
    %2062 = vmatprep.subr.mxu0 0.0
    %2063 = vmatpush1.msra.mxu0 %v41
    %2064 = vmatprep.subr.mxu0 0.0
    %2065 = vmatpush1.msra.mxu0 %v42
    %2066 = vmatprep.subr.mxu0 0.0
    %2067 = vmatpush1.msra.mxu0 %v43
    %2068 = vmatprep.subr.mxu0 0.0
    %2069 = vmatpush1.msra.mxu0 0.0
    %2070 = vmatprep.subr.mxu0 0.0
    %2071 = vmatpush1.msra.mxu0 0.0
    %2072 = vmatprep.subr.mxu0 0.0
    %2073 = vmatpush1.msra.mxu0 0.0
    %2074 = vmatprep.subr.mxu0 0.0
    %2075 = vmatpush1.msra.mxu0 0.0
    %2076 = vmatprep.subr.mxu0 0.0
    %2077 = vmatpush1.msra.mxu0 0.0
    %2078 = vmatprep.subr.mxu0 0.0
    %2079 = vmatpush1.msra.mxu0 0.0
    %2080 = vmatprep.subr.mxu0 0.0
    %2081 = vmatpush1.msra.mxu0 0.0
    %2082 = vmatprep.subr.mxu0 0.0
    %2083 = vmatpush1.msra.mxu0 0.0
    %2084 = vmatprep.subr.mxu0 0.0
    %2085 = vmatpush1.msra.mxu0 0.0
    %2086 = vmatprep.subr.mxu0 0.0
    %2087 = vmatpush1.msra.mxu0 0.0
    %2088 = vmatprep.subr.mxu0 0.0
    %2089 = vmatpush1.msra.mxu0 0.0
    %2090 = vmatprep.subr.mxu0 0.0
    %2091 = vmatpush1.msra.mxu0 0.0
    %2092 = vmatprep.subr.mxu0 0.0
    %2093 = vmatpush1.msra.mxu0 0.0
    %2094 = vmatprep.subr.mxu0 0.0
    %2095 = vmatpush1.msra.mxu0 0.0
    %2096 = vmatprep.subr.mxu0 0.0
    %2097 = vmatpush1.msra.mxu0 0.0
    %2098 = vmatprep.subr.mxu0 0.0
    %2099 = vmatpush1.msra.mxu0 0.0
    %2100 = vmatprep.subr.mxu0 0.0
    %2101 = vmatpush1.msra.mxu0 0.0
    %2102 = vmatprep.subr.mxu0 0.0
    %2103 = vmatpush1.msra.mxu0 0.0
    %2104 = vmatprep.subr.mxu0 0.0
    %2105 = vmatpush1.msra.mxu0 0.0
    %2106 = vmatprep.subr.mxu0 0.0
    %2107 = vmatpush1.msra.mxu0 0.0
    %2108 = vmatprep.subr.mxu0 0.0
    %2109 = vmatpush1.msra.mxu0 0.0
    %2110 = vmatprep.subr.mxu0 0.0
    %2111 = vmatpush1.msra.mxu0 0.0
    %2112 = vmatprep.subr.mxu0 0.0
    %2113 = vmatpush1.msra.mxu0 0.0
    %2114 = vmatprep.subr.mxu0 0.0
    %2115 = vmatpush1.msra.mxu0 0.0
    %2116 = vmatprep.subr.mxu0 0.0
    %2117 = vmatpush1.msra.mxu0 0.0
    %2118 = vmatprep.subr.mxu0 0.0
    %2119 = vmatpush1.msra.mxu0 0.0
    %2120 = vmatprep.subr.mxu0 0.0
    %2121 = vmatpush1.msra.mxu0 0.0
    %2122 = vmatprep.subr.mxu0 0.0
    %2123 = vmatpush1.msra.mxu0 0.0
    %2124 = vmatprep.mubr.f32.mxu0 0.0
    %2125 = vmatmul.mubr.f32.gmra.mrb[0].mxu0 %v2049
    %v2126 = vpop.f32.mrb[0].mxu0
    %v2127 = vadd.f32 0.0, %v2126
    %v2128 = vpop.f32.mrb[0].mxu0
    %2129 = vmatprep.mubr.f32.mxu0 0.0
    %2130 = vmatmul.mubr.f32.gmra.mrb[0].mxu0 %v2052
    %v2131 = vpop.f32.mrb[0].mxu0
    %v2132 = vadd.f32 0.0, %v2131
    %v2133 = vpop.f32.mrb[0].mxu0
    %2134 = vmatprep.mubr.f32.mxu0 0.0
    %2135 = vmatmul.mubr.f32.gmra.mrb[0].mxu0 %v2055
    %v2136 = vpop.f32.mrb[0].mxu0
    %v2137 = vadd.f32 0.0, %v2136
    %v2138 = vpop.f32.mrb[0].mxu0
    %2139 = vmatprep.mubr.f32.mxu0 0.0
    %2140 = vmatmul.mubr.f32.gmra.mrb[0].mxu0 %v2058
    %v2141 = vpop.f32.mrb[0].mxu0
    %v2142 = vadd.f32 0.0, %v2141
    %v2143 = vpop.f32.mrb[0].mxu0
    %2144 = vdwg.mxu0
    %v2145 = vmax.f32 %v2127, %v2132
    %v2146 = vsub.f32 %v2127, %v2145
    %v2147 = vmul.f32 %v2146, 1.442695
    %v2148 = vpow.pop %v2147
    %v2149 = vsub.f32 %v2132, %v2145
    %v2150 = vmul.f32 %v2149, 1.442695
    %v2151 = vpow.pop %v2150
    %v2152 = vadd.f32 %v2148, %v2151
    %v2153 = vrcp.pop %v2152
    %v2154 = vmul.f32 %v2148, %v2153
    %v2155 = vmul.f32 %v2151, %v2153
    %v2156 = vmax.f32 %v2137, %v2142
    %v2157 = vsub.f32 %v2137, %v2156
    %v2158 = vmul.f32 %v2157, 1.442695
    %v2159 = vpow.pop %v2158
    %v2160 = vsub.f32 %v2142, %v2156
    %v2161 = vmul.f32 %v2160, 1.442695
    %v2162 = vpow.pop %v2161
    %v2163 = vadd.f32 %v2159, %v2162
    %v2164 = vrcp.pop %v2163
    %v2165 = vmul.f32 %v2159, %v2164
    %v2166 = vmul.f32 %v2162, %v2164
    %v2168 = vsel %vm434, %v2154, 0
    %v2171 = vsel %vm434, %v2155, 0
    %v2174 = vsel %vm434, %v2165, 0
    %v2177 = vsel %vm434, %v2166, 0
    %2179 = vmatprep.subr.mxu0 0.0
    %2180 = vmatpush1.msra.mxu0 %v449
    %2181 = vmatprep.subr.mxu0 0.0
    %2182 = vmatpush1.msra.mxu0 0.0
    %2183 = vmatprep.subr.mxu0 0.0
    %2184 = vmatpush1.msra.mxu0 0.0
    %2185 = vmatprep.subr.mxu0 0.0
    %2186 = vmatpush1.msra.mxu0 0.0
    %2187 = vmatprep.subr.mxu0 0.0
    %2188 = vmatpush1.msra.mxu0 0.0
    %2189 = vmatprep.subr.mxu0 0.0
    %2190 = vmatpush1.msra.mxu0 0.0
    %2191 = vmatprep.subr.mxu0 0.0
    %2192 = vmatpush1.msra.mxu0 0.0
    %2193 = vmatprep.subr.mxu0 0.0
    %2194 = vmatpush1.msra.mxu0 0.0
    %2195 = vmatprep.subr.mxu0 0.0
    %2196 = vmatpush1.msra.mxu0 0.0
    %2197 = vmatprep.subr.mxu0 0.0
    %2198 = vmatpush1.msra.mxu0 0.0
    %2199 = vmatprep.subr.mxu0 0.0
    %2200 = vmatpush1.msra.mxu0 0.0
    %2201 = vmatprep.subr.mxu0 0.0
    %2202 = vmatpush1.msra.mxu0 0.0
    %2203 = vmatprep.subr.mxu0 0.0
    %2204 = vmatpush1.msra.mxu0 0.0
    %2205 = vmatprep.subr.mxu0 0.0
    %2206 = vmatpush1.msra.mxu0 0.0
    %2207 = vmatprep.subr.mxu0 0.0
    %2208 = vmatpush1.msra.mxu0 0.0
    %2209 = vmatprep.subr.mxu0 0.0
    %2210 = vmatpush1.msra.mxu0 0.0
    %2211 = vmatprep.subr.mxu0 0.0
    %2212 = vmatpush1.msra.mxu0 0.0
    %2213 = vmatprep.subr.mxu0 0.0
    %2214 = vmatpush1.msra.mxu0 0.0
    %2215 = vmatprep.subr.mxu0 0.0
    %2216 = vmatpush1.msra.mxu0 0.0
    %2217 = vmatprep.subr.mxu0 0.0
    %2218 = vmatpush1.msra.mxu0 0.0
    %2219 = vmatprep.subr.mxu0 0.0
    %2220 = vmatpush1.msra.mxu0 0.0
    %2221 = vmatprep.subr.mxu0 0.0
    %2222 = vmatpush1.msra.mxu0 0.0
    %2223 = vmatprep.subr.mxu0 0.0
    %2224 = vmatpush1.msra.mxu0 0.0
    %2225 = vmatprep.subr.mxu0 0.0
    %2226 = vmatpush1.msra.mxu0 0.0
    %2227 = vmatprep.subr.mxu0 0.0
    %2228 = vmatpush1.msra.mxu0 0.0
    %2229 = vmatprep.subr.mxu0 0.0
    %2230 = vmatpush1.msra.mxu0 0.0
    %2231 = vmatprep.subr.mxu0 0.0
    %2232 = vmatpush1.msra.mxu0 0.0
    %2233 = vmatprep.subr.mxu0 0.0
    %2234 = vmatpush1.msra.mxu0 0.0
    %2235 = vmatprep.subr.mxu0 0.0
    %2236 = vmatpush1.msra.mxu0 0.0
    %2237 = vmatprep.subr.mxu0 0.0
    %2238 = vmatpush1.msra.mxu0 0.0
    %2239 = vmatprep.subr.mxu0 0.0
    %2240 = vmatpush1.msra.mxu0 0.0
    %2241 = vmatprep.subr.mxu0 0.0
    %2242 = vmatpush1.msra.mxu0 0.0
    %2243 = vmatprep.mubr.f32.mxu0 0.0
    %2244 = vmatmul.mubr.f32.gmra.mrb[0].mxu0 %v2168
    %v2245 = vpop.f32.mrb[0].mxu0
    %v2246 = vadd.f32 0.0, %v2245
    %v2247 = vpop.f32.mrb[0].mxu0
    %2248 = vmatprep.mubr.f32.mxu0 0.0
    %2249 = vmatmul.mubr.f32.gmra.mrb[0].mxu0 %v2171
    %v2250 = vpop.f32.mrb[0].mxu0
    %v2251 = vadd.f32 0.0, %v2250
    %v2252 = vpop.f32.mrb[0].mxu0
    %2253 = vmatprep.mubr.f32.mxu0 0.0
    %2254 = vmatmul.mubr.f32.gmra.mrb[0].mxu0 %v2174
    %v2255 = vpop.f32.mrb[0].mxu0
    %v2256 = vadd.f32 0.0, %v2255
    %v2257 = vpop.f32.mrb[0].mxu0
    %2258 = vmatprep.mubr.f32.mxu0 0.0
    %2259 = vmatmul.mubr.f32.gmra.mrb[0].mxu0 %v2177
    %v2260 = vpop.f32.mrb[0].mxu0
    %v2261 = vadd.f32 0.0, %v2260
    %v2262 = vpop.f32.mrb[0].mxu0
    %2263 = vdwg.mxu0
    %v2264 = vmul.f32 %v2246, %v2034
    %v2265 = vmul.f32 %v2251, %v2039
    %v2266 = vadd.f32 %v2264, %v2265
    %v2267 = vmul.f32 %v2256, %v2034
    %v2268 = vmul.f32 %v2261, %v2039
    %v2269 = vadd.f32 %v2267, %v2268
    %v2270 = vld [vmem:[#allocation5 + $0x318] sm:$0xff]
    %v2271 = vld [vmem:[#allocation5 + $0x320] sm:$0xff]
    %v2272 = vld [vmem:[#allocation5 + $0x328] sm:$0xff]
    %v2273 = vld [vmem:[#allocation5 + $0x330] sm:$0xff]
    %v2274 = vld [vmem:[#allocation5 + $0x338] sm:$0x1]
    %v2275 = vlaneseq
    %v2276 = vshrl.u32 %v2275, 7
    %v2277 = vsub.s32 0, %v2276
    %v2278 = vrot.slane %v2274, %v2277
    %v2280 = vsel %vm59, %v2266, 0
    %v2283 = vsel %vm59, %v2269, 0
    %2285 = vmatprep.subr.mxu0 0.0
    %2286 = vmatpush1.msra.mxu0 %v2270
    %2287 = vmatprep.subr.mxu0 0.0
    %2288 = vmatpush1.msra.mxu0 %v2271
    %2289 = vmatprep.subr.mxu0 0.0
    %2290 = vmatpush1.msra.mxu0 %v2272
    %2291 = vmatprep.subr.mxu0 0.0
    %2292 = vmatpush1.msra.mxu0 %v2273
    %2293 = vmatprep.subr.mxu0 0.0
    %2294 = vmatpush1.msra.mxu0 0.0
    %2295 = vmatprep.subr.mxu0 0.0
    %2296 = vmatpush1.msra.mxu0 0.0
    %2297 = vmatprep.subr.mxu0 0.0
    %2298 = vmatpush1.msra.mxu0 0.0
    %2299 = vmatprep.subr.mxu0 0.0
    %2300 = vmatpush1.msra.mxu0 0.0
    %2301 = vmatprep.subr.mxu0 0.0
    %2302 = vmatpush1.msra.mxu0 0.0
    %2303 = vmatprep.subr.mxu0 0.0
    %2304 = vmatpush1.msra.mxu0 0.0
    %2305 = vmatprep.subr.mxu0 0.0
    %2306 = vmatpush1.msra.mxu0 0.0
    %2307 = vmatprep.subr.mxu0 0.0
    %2308 = vmatpush1.msra.mxu0 0.0
    %2309 = vmatprep.subr.mxu0 0.0
    %2310 = vmatpush1.msra.mxu0 0.0
    %2311 = vmatprep.subr.mxu0 0.0
    %2312 = vmatpush1.msra.mxu0 0.0
    %2313 = vmatprep.subr.mxu0 0.0
    %2314 = vmatpush1.msra.mxu0 0.0
    %2315 = vmatprep.subr.mxu0 0.0
    %2316 = vmatpush1.msra.mxu0 0.0
    %2317 = vmatprep.subr.mxu0 0.0
    %2318 = vmatpush1.msra.mxu0 0.0
    %2319 = vmatprep.subr.mxu0 0.0
    %2320 = vmatpush1.msra.mxu0 0.0
    %2321 = vmatprep.subr.mxu0 0.0
    %2322 = vmatpush1.msra.mxu0 0.0
    %2323 = vmatprep.subr.mxu0 0.0
    %2324 = vmatpush1.msra.mxu0 0.0
    %2325 = vmatprep.subr.mxu0 0.0
    %2326 = vmatpush1.msra.mxu0 0.0
    %2327 = vmatprep.subr.mxu0 0.0
    %2328 = vmatpush1.msra.mxu0 0.0
    %2329 = vmatprep.subr.mxu0 0.0
    %2330 = vmatpush1.msra.mxu0 0.0
    %2331 = vmatprep.subr.mxu0 0.0
    %2332 = vmatpush1.msra.mxu0 0.0
    %2333 = vmatprep.subr.mxu0 0.0
    %2334 = vmatpush1.msra.mxu0 0.0
    %2335 = vmatprep.subr.mxu0 0.0
    %2336 = vmatpush1.msra.mxu0 0.0
    %2337 = vmatprep.subr.mxu0 0.0
    %2338 = vmatpush1.msra.mxu0 0.0
    %2339 = vmatprep.subr.mxu0 0.0
    %2340 = vmatpush1.msra.mxu0 0.0
    %2341 = vmatprep.subr.mxu0 0.0
    %2342 = vmatpush1.msra.mxu0 0.0
    %2343 = vmatprep.subr.mxu0 0.0
    %2344 = vmatpush1.msra.mxu0 0.0
    %2345 = vmatprep.subr.mxu0 0.0
    %2346 = vmatpush1.msra.mxu0 0.0
    %2347 = vmatprep.subr.mxu0 0.0
    %2348 = vmatpush1.msra.mxu0 0.0
    %2349 = vmatprep.mubr.f32.mxu0 0.0
    %2350 = vmatmul.mubr.f32.gmra.mrb[0].mxu0 %v2280
    %v2351 = vpop.f32.mrb[0].mxu0
    %v2352 = vadd.f32 %v2278, %v2351
    %v2353 = vpop.f32.mrb[0].mxu0
    %2354 = vmatprep.mubr.f32.mxu0 0.0
    %2355 = vmatmul.mubr.f32.gmra.mrb[0].mxu0 %v2283
    %v2356 = vpop.f32.mrb[0].mxu0
    %v2357 = vadd.f32 %v2278, %v2356
    %v2358 = vpop.f32.mrb[0].mxu0
    %2359 = vdwg.mxu0
    %v2360 = vadd.f32 %v48, %v2352
    %v2361 = vadd.f32 %v49, %v2357
    %v2362 = vld [vmem:[#allocation5 + $0x3e0] sm:$0x1]
    %v2363 = vld [vmem:[#allocation5 + $0x3e8] sm:$0x1]
    %v2364 = vsel %vm59, %v2360, 0.0
    %2365 = vadd.xlane.f32.xlu0 %v2364
    %v2366 = vpop.xlane.xlu0 %2365
    %v2367 = vsel %vm59, %v2361, 0.0
    %2368 = vadd.xlane.f32.xlu0 %v2367
    %v2369 = vpop.xlane.xlu0 %2368
    %v2370 = vmul.f32 %v2366, %v642
    %v2371 = vmul.f32 %v2369, %v642
    %v2372 = vsub.f32 %v2360, %v2370
    %v2373 = vsub.f32 %v2361, %v2371
    %v2374 = vmul.f32 %v2372, %v2372
    %v2375 = vmul.f32 %v2373, %v2373
    %v2376 = vsel %vm59, %v2374, 0.0
    %2377 = vadd.xlane.f32.xlu0 %v2376
    %v2378 = vpop.xlane.xlu0 %2377
    %v2379 = vsel %vm59, %v2375, 0.0
    %2380 = vadd.xlane.f32.xlu0 %v2379
    %v2381 = vpop.xlane.xlu0 %2380
    %v2382 = vmul.f32 %v2378, %v642
    %v2383 = vmul.f32 %v2381, %v642
    %v2384 = vadd.f32 %v2382, 1e-05
    %v2385 = vadd.f32 %v2383, 1e-05
    %v2386 = vrsqrt.pop %v2384
    %v2387 = vrsqrt.pop %v2385
    %v2388 = vmul.f32 %v2372, %v2386
    %v2389 = vmul.f32 %v2373, %v2387
    %v2390 = vlaneseq
    %v2391 = vshrl.u32 %v2390, 7
    %v2392 = vsub.s32 0, %v2391
    %v2393 = vrot.slane %v2362, %v2392
    %v2394 = vmul.f32 %v2388, %v2393
    %v2395 = vmul.f32 %v2389, %v2393
    %v2396 = vlaneseq
    %v2397 = vshrl.u32 %v2396, 7
    %v2398 = vsub.s32 0, %v2397
    %v2399 = vrot.slane %v2363, %v2398
    %v2400 = vadd.f32 %v2394, %v2399
    %v2401 = vadd.f32 %v2395, %v2399
    %v2402 = vld [vmem:[#allocation5 + $0x340] sm:$0xff]
    %v2403 = vld [vmem:[#allocation5 + $0x348] sm:$0xff]
    %v2404 = vld [vmem:[#allocation5 + $0x350] sm:$0xff]
    %v2405 = vld [vmem:[#allocation5 + $0x358] sm:$0xff]
    %v2406 = vld [vmem:[#allocation5 + $0x360] sm:$0x1]
    %v2407 = vlaneseq
    %v2408 = vshrl.u32 %v2407, 7
    %v2409 = vsub.s32 0, %v2408
    %v2410 = vrot.slane %v2406, %v2409
    %v2412 = vsel %vm59, %v2400, 0
    %v2415 = vsel %vm59, %v2401, 0
    %2417 = vmatprep.subr.mxu0 0.0
    %2418 = vmatpush1.msra.mxu0 %v2402
    %2419 = vmatprep.subr.mxu0 0.0
    %2420 = vmatpush1.msra.mxu0 %v2403
    %2421 = vmatprep.subr.mxu0 0.0
    %2422 = vmatpush1.msra.mxu0 %v2404
    %2423 = vmatprep.subr.mxu0 0.0
    %2424 = vmatpush1.msra.mxu0 %v2405
    %2425 = vmatprep.subr.mxu0 0.0
    %2426 = vmatpush1.msra.mxu0 0.0
    %2427 = vmatprep.subr.mxu0 0.0
    %2428 = vmatpush1.msra.mxu0 0.0
    %2429 = vmatprep.subr.mxu0 0.0
    %2430 = vmatpush1.msra.mxu0 0.0
    %2431 = vmatprep.subr.mxu0 0.0
    %2432 = vmatpush1.msra.mxu0 0.0
    %2433 = vmatprep.subr.mxu0 0.0
    %2434 = vmatpush1.msra.mxu0 0.0
    %2435 = vmatprep.subr.mxu0 0.0
    %2436 = vmatpush1.msra.mxu0 0.0
    %2437 = vmatprep.subr.mxu0 0.0
    %2438 = vmatpush1.msra.mxu0 0.0
    %2439 = vmatprep.subr.mxu0 0.0
    %2440 = vmatpush1.msra.mxu0 0.0
    %2441 = vmatprep.subr.mxu0 0.0
    %2442 = vmatpush1.msra.mxu0 0.0
    %2443 = vmatprep.subr.mxu0 0.0
    %2444 = vmatpush1.msra.mxu0 0.0
    %2445 = vmatprep.subr.mxu0 0.0
    %2446 = vmatpush1.msra.mxu0 0.0
    %2447 = vmatprep.subr.mxu0 0.0
    %2448 = vmatpush1.msra.mxu0 0.0
    %2449 = vmatprep.subr.mxu0 0.0
    %2450 = vmatpush1.msra.mxu0 0.0
    %2451 = vmatprep.subr.mxu0 0.0
    %2452 = vmatpush1.msra.mxu0 0.0
    %2453 = vmatprep.subr.mxu0 0.0
    %2454 = vmatpush1.msra.mxu0 0.0
    %2455 = vmatprep.subr.mxu0 0.0
    %2456 = vmatpush1.msra.mxu0 0.0
    %2457 = vmatprep.subr.mxu0 0.0
    %2458 = vmatpush1.msra.mxu0 0.0
    %2459 = vmatprep.subr.mxu0 0.0
    %2460 = vmatpush1.msra.mxu0 0.0
    %2461 = vmatprep.subr.mxu0 0.0
    %2462 = vmatpush1.msra.mxu0 0.0
    %2463 = vmatprep.subr.mxu0 0.0
    %2464 = vmatpush1.msra.mxu0 0.0
    %2465 = vmatprep.subr.mxu0 0.0
    %2466 = vmatpush1.msra.mxu0 0.0
    %2467 = vmatprep.subr.mxu0 0.0
    %2468 = vmatpush1.msra.mxu0 0.0
    %2469 = vmatprep.subr.mxu0 0.0
    %2470 = vmatpush1.msra.mxu0 0.0
    %2471 = vmatprep.subr.mxu0 0.0
    %2472 = vmatpush1.msra.mxu0 0.0
    %2473 = vmatprep.subr.mxu0 0.0
    %2474 = vmatpush1.msra.mxu0 0.0
    %2475 = vmatprep.subr.mxu0 0.0
    %2476 = vmatpush1.msra.mxu0 0.0
    %2477 = vmatprep.subr.mxu0 0.0
    %2478 = vmatpush1.msra.mxu0 0.0
    %2479 = vmatprep.subr.mxu0 0.0
    %2480 = vmatpush1.msra.mxu0 0.0
    %2481 = vmatprep.mubr.f32.mxu0 0.0
    %2482 = vmatmul.mubr.f32.gmra.mrb[0].mxu0 %v2412
    %v2483 = vpop.f32.mrb[0].mxu0
    %v2484 = vadd.f32 %v2410, %v2483
    %v2485 = vpop.f32.mrb[0].mxu0
    %2486 = vmatprep.mubr.f32.mxu0 0.0
    %2487 = vmatmul.mubr.f32.gmra.mrb[0].mxu0 %v2415
    %v2488 = vpop.f32.mrb[0].mxu0
    %v2489 = vadd.f32 %v2410, %v2488
    %v2490 = vpop.f32.mrb[0].mxu0
    %2491 = vdwg.mxu0
    %v2492 = vld [vmem:[#allocation5 + $0x368] sm:$0xff]
    %v2493 = vld [vmem:[#allocation5 + $0x370] sm:$0xff]
    %v2494 = vld [vmem:[#allocation5 + $0x378] sm:$0xff]
    %v2495 = vld [vmem:[#allocation5 + $0x380] sm:$0xff]
    %v2496 = vld [vmem:[#allocation5 + $0x388] sm:$0x1]
    %v2497 = vlaneseq
    %v2498 = vshrl.u32 %v2497, 7
    %v2499 = vsub.s32 0, %v2498
    %v2500 = vrot.slane %v2496, %v2499
    %v2502 = vsel %vm59, %v1788, 0
    %v2505 = vsel %vm59, %v1789, 0
    %2507 = vmatprep.subr.mxu0 0.0
    %2508 = vmatpush1.msra.mxu0 %v2492
    %2509 = vmatprep.subr.mxu0 0.0
    %2510 = vmatpush1.msra.mxu0 %v2493
    %2511 = vmatprep.subr.mxu0 0.0
    %2512 = vmatpush1.msra.mxu0 %v2494
    %2513 = vmatprep.subr.mxu0 0.0
    %2514 = vmatpush1.msra.mxu0 %v2495
    %2515 = vmatprep.subr.mxu0 0.0
    %2516 = vmatpush1.msra.mxu0 0.0
    %2517 = vmatprep.subr.mxu0 0.0
    %2518 = vmatpush1.msra.mxu0 0.0
    %2519 = vmatprep.subr.mxu0 0.0
    %2520 = vmatpush1.msra.mxu0 0.0
    %2521 = vmatprep.subr.mxu0 0.0
    %2522 = vmatpush1.msra.mxu0 0.0
    %2523 = vmatprep.subr.mxu0 0.0
    %2524 = vmatpush1.msra.mxu0 0.0
    %2525 = vmatprep.subr.mxu0 0.0
    %2526 = vmatpush1.msra.mxu0 0.0
    %2527 = vmatprep.subr.mxu0 0.0
    %2528 = vmatpush1.msra.mxu0 0.0
    %2529 = vmatprep.subr.mxu0 0.0
    %2530 = vmatpush1.msra.mxu0 0.0
    %2531 = vmatprep.subr.mxu0 0.0
    %2532 = vmatpush1.msra.mxu0 0.0
    %2533 = vmatprep.subr.mxu0 0.0
    %2534 = vmatpush1.msra.mxu0 0.0
    %2535 = vmatprep.subr.mxu0 0.0
    %2536 = vmatpush1.msra.mxu0 0.0
    %2537 = vmatprep.subr.mxu0 0.0
    %2538 = vmatpush1.msra.mxu0 0.0
    %2539 = vmatprep.subr.mxu0 0.0
    %2540 = vmatpush1.msra.mxu0 0.0
    %2541 = vmatprep.subr.mxu0 0.0
    %2542 = vmatpush1.msra.mxu0 0.0
    %2543 = vmatprep.subr.mxu0 0.0
    %2544 = vmatpush1.msra.mxu0 0.0
    %2545 = vmatprep.subr.mxu0 0.0
    %2546 = vmatpush1.msra.mxu0 0.0
    %2547 = vmatprep.subr.mxu0 0.0
    %2548 = vmatpush1.msra.mxu0 0.0
    %2549 = vmatprep.subr.mxu0 0.0
    %2550 = vmatpush1.msra.mxu0 0.0
    %2551 = vmatprep.subr.mxu0 0.0
    %2552 = vmatpush1.msra.mxu0 0.0
    %2553 = vmatprep.subr.mxu0 0.0
    %2554 = vmatpush1.msra.mxu0 0.0
    %2555 = vmatprep.subr.mxu0 0.0
    %2556 = vmatpush1.msra.mxu0 0.0
    %2557 = vmatprep.subr.mxu0 0.0
    %2558 = vmatpush1.msra.mxu0 0.0
    %2559 = vmatprep.subr.mxu0 0.0
    %2560 = vmatpush1.msra.mxu0 0.0
    %2561 = vmatprep.subr.mxu0 0.0
    %2562 = vmatpush1.msra.mxu0 0.0
    %2563 = vmatprep.subr.mxu0 0.0
    %2564 = vmatpush1.msra.mxu0 0.0
    %2565 = vmatprep.subr.mxu0 0.0
    %2566 = vmatpush1.msra.mxu0 0.0
    %2567 = vmatprep.subr.mxu0 0.0
    %2568 = vmatpush1.msra.mxu0 0.0
    %2569 = vmatprep.subr.mxu0 0.0
    %2570 = vmatpush1.msra.mxu0 0.0
    %2571 = vmatprep.mubr.f32.mxu0 0.0
    %2572 = vmatmul.mubr.f32.gmra.mrb[0].mxu0 %v2502
    %v2573 = vpop.f32.mrb[0].mxu0
    %v2574 = vadd.f32 %v2500, %v2573
    %v2575 = vpop.f32.mrb[0].mxu0
    %2576 = vmatprep.mubr.f32.mxu0 0.0
    %2577 = vmatmul.mubr.f32.gmra.mrb[0].mxu0 %v2505
    %v2578 = vpop.f32.mrb[0].mxu0
    %v2579 = vadd.f32 %v2500, %v2578
    %v2580 = vpop.f32.mrb[0].mxu0
    %2581 = vdwg.mxu0
    %v2582 = vld [vmem:[#allocation5 + $0x390] sm:$0xff]
    %v2583 = vld [vmem:[#allocation5 + $0x398] sm:$0xff]
    %v2584 = vld [vmem:[#allocation5 + $0x3a0] sm:$0xff]
    %v2585 = vld [vmem:[#allocation5 + $0x3a8] sm:$0xff]
    %v2586 = vld [vmem:[#allocation5 + $0x3b0] sm:$0x1]
    %v2587 = vlaneseq
    %v2588 = vshrl.u32 %v2587, 7
    %v2589 = vsub.s32 0, %v2588
    %v2590 = vrot.slane %v2586, %v2589
    %2591 = vmatprep.subr.mxu0 0.0
    %2592 = vmatpush1.msra.mxu0 %v2582
    %2593 = vmatprep.subr.mxu0 0.0
    %2594 = vmatpush1.msra.mxu0 %v2583
    %2595 = vmatprep.subr.mxu0 0.0
    %2596 = vmatpush1.msra.mxu0 %v2584
    %2597 = vmatprep.subr.mxu0 0.0
    %2598 = vmatpush1.msra.mxu0 %v2585
    %2599 = vmatprep.subr.mxu0 0.0
    %2600 = vmatpush1.msra.mxu0 0.0
    %2601 = vmatprep.subr.mxu0 0.0
    %2602 = vmatpush1.msra.mxu0 0.0
    %2603 = vmatprep.subr.mxu0 0.0
    %2604 = vmatpush1.msra.mxu0 0.0
    %2605 = vmatprep.subr.mxu0 0.0
    %2606 = vmatpush1.msra.mxu0 0.0
    %2607 = vmatprep.subr.mxu0 0.0
    %2608 = vmatpush1.msra.mxu0 0.0
    %2609 = vmatprep.subr.mxu0 0.0
    %2610 = vmatpush1.msra.mxu0 0.0
    %2611 = vmatprep.subr.mxu0 0.0
    %2612 = vmatpush1.msra.mxu0 0.0
    %2613 = vmatprep.subr.mxu0 0.0
    %2614 = vmatpush1.msra.mxu0 0.0
    %2615 = vmatprep.subr.mxu0 0.0
    %2616 = vmatpush1.msra.mxu0 0.0
    %2617 = vmatprep.subr.mxu0 0.0
    %2618 = vmatpush1.msra.mxu0 0.0
    %2619 = vmatprep.subr.mxu0 0.0
    %2620 = vmatpush1.msra.mxu0 0.0
    %2621 = vmatprep.subr.mxu0 0.0
    %2622 = vmatpush1.msra.mxu0 0.0
    %2623 = vmatprep.subr.mxu0 0.0
    %2624 = vmatpush1.msra.mxu0 0.0
    %2625 = vmatprep.subr.mxu0 0.0
    %2626 = vmatpush1.msra.mxu0 0.0
    %2627 = vmatprep.subr.mxu0 0.0
    %2628 = vmatpush1.msra.mxu0 0.0
    %2629 = vmatprep.subr.mxu0 0.0
    %2630 = vmatpush1.msra.mxu0 0.0
    %2631 = vmatprep.subr.mxu0 0.0
    %2632 = vmatpush1.msra.mxu0 0.0
    %2633 = vmatprep.subr.mxu0 0.0
    %2634 = vmatpush1.msra.mxu0 0.0
    %2635 = vmatprep.subr.mxu0 0.0
    %2636 = vmatpush1.msra.mxu0 0.0
    %2637 = vmatprep.subr.mxu0 0.0
    %2638 = vmatpush1.msra.mxu0 0.0
    %2639 = vmatprep.subr.mxu0 0.0
    %2640 = vmatpush1.msra.mxu0 0.0
    %2641 = vmatprep.subr.mxu0 0.0
    %2642 = vmatpush1.msra.mxu0 0.0
    %2643 = vmatprep.subr.mxu0 0.0
    %2644 = vmatpush1.msra.mxu0 0.0
    %2645 = vmatprep.subr.mxu0 0.0
    %2646 = vmatpush1.msra.mxu0 0.0
    %2647 = vmatprep.subr.mxu0 0.0
    %2648 = vmatpush1.msra.mxu0 0.0
    %2649 = vmatprep.subr.mxu0 0.0
    %2650 = vmatpush1.msra.mxu0 0.0
    %2651 = vmatprep.subr.mxu0 0.0
    %2652 = vmatpush1.msra.mxu0 0.0
    %2653 = vmatprep.subr.mxu0 0.0
    %2654 = vmatpush1.msra.mxu0 0.0
    %2655 = vmatprep.mubr.f32.mxu0 0.0
    %2656 = vmatmul.mubr.f32.gmra.mrb[0].mxu0 %v2502
    %v2657 = vpop.f32.mrb[0].mxu0
    %v2658 = vadd.f32 %v2590, %v2657
    %v2659 = vpop.f32.mrb[0].mxu0
    %2660 = vmatprep.mubr.f32.mxu0 0.0
    %2661 = vmatmul.mubr.f32.gmra.mrb[0].mxu0 %v2505
    %v2662 = vpop.f32.mrb[0].mxu0
    %v2663 = vadd.f32 %v2590, %v2662
    %v2664 = vpop.f32.mrb[0].mxu0
    %2665 = vdwg.mxu0
    %v2666 = vmul.f32 %v2484, 0.35355338
    %v2667 = vmul.f32 %v2489, 0.35355338
    %v2668 = vmul.f32 %v2666, %v2574
    %v2669 = vmul.f32 %v2666, %v2579
    %v2670 = vmul.f32 %v2667, %v2574
    %v2671 = vmul.f32 %v2667, %v2579
    %v2673 = vsel %vm59, %v2668, 0
    %v2676 = vsel %vm59, %v2669, 0
    %v2679 = vsel %vm59, %v2670, 0
    %v2682 = vsel %vm59, %v2671, 0
    %2684 = vmatprep.subr.mxu0 0.0
    %2685 = vmatpush1.msra.mxu0 %v40
    %2686 = vmatprep.subr.mxu0 0.0
    %2687 = vmatpush1.msra.mxu0 %v41
    %2688 = vmatprep.subr.mxu0 0.0
    %2689 = vmatpush1.msra.mxu0 %v42
    %2690 = vmatprep.subr.mxu0 0.0
    %2691 = vmatpush1.msra.mxu0 %v43
    %2692 = vmatprep.subr.mxu0 0.0
    %2693 = vmatpush1.msra.mxu0 0.0
    %2694 = vmatprep.subr.mxu0 0.0
    %2695 = vmatpush1.msra.mxu0 0.0
    %2696 = vmatprep.subr.mxu0 0.0
    %2697 = vmatpush1.msra.mxu0 0.0
    %2698 = vmatprep.subr.mxu0 0.0
    %2699 = vmatpush1.msra.mxu0 0.0
    %2700 = vmatprep.subr.mxu0 0.0
    %2701 = vmatpush1.msra.mxu0 0.0
    %2702 = vmatprep.subr.mxu0 0.0
    %2703 = vmatpush1.msra.mxu0 0.0
    %2704 = vmatprep.subr.mxu0 0.0
    %2705 = vmatpush1.msra.mxu0 0.0
    %2706 = vmatprep.subr.mxu0 0.0
    %2707 = vmatpush1.msra.mxu0 0.0
    %2708 = vmatprep.subr.mxu0 0.0
    %2709 = vmatpush1.msra.mxu0 0.0
    %2710 = vmatprep.subr.mxu0 0.0
    %2711 = vmatpush1.msra.mxu0 0.0
    %2712 = vmatprep.subr.mxu0 0.0
    %2713 = vmatpush1.msra.mxu0 0.0
    %2714 = vmatprep.subr.mxu0 0.0
    %2715 = vmatpush1.msra.mxu0 0.0
    %2716 = vmatprep.subr.mxu0 0.0
    %2717 = vmatpush1.msra.mxu0 0.0
    %2718 = vmatprep.subr.mxu0 0.0
    %2719 = vmatpush1.msra.mxu0 0.0
    %2720 = vmatprep.subr.mxu0 0.0
    %2721 = vmatpush1.msra.mxu0 0.0
    %2722 = vmatprep.subr.mxu0 0.0
    %2723 = vmatpush1.msra.mxu0 0.0
    %2724 = vmatprep.subr.mxu0 0.0
    %2725 = vmatpush1.msra.mxu0 0.0
    %2726 = vmatprep.subr.mxu0 0.0
    %2727 = vmatpush1.msra.mxu0 0.0
    %2728 = vmatprep.subr.mxu0 0.0
    %2729 = vmatpush1.msra.mxu0 0.0
    %2730 = vmatprep.subr.mxu0 0.0
    %2731 = vmatpush1.msra.mxu0 0.0
    %2732 = vmatprep.subr.mxu0 0.0
    %2733 = vmatpush1.msra.mxu0 0.0
    %2734 = vmatprep.subr.mxu0 0.0
    %2735 = vmatpush1.msra.mxu0 0.0
    %2736 = vmatprep.subr.mxu0 0.0
    %2737 = vmatpush1.msra.mxu0 0.0
    %2738 = vmatprep.subr.mxu0 0.0
    %2739 = vmatpush1.msra.mxu0 0.0
    %2740 = vmatprep.subr.mxu0 0.0
    %2741 = vmatpush1.msra.mxu0 0.0
    %2742 = vmatprep.subr.mxu0 0.0
    %2743 = vmatpush1.msra.mxu0 0.0
    %2744 = vmatprep.subr.mxu0 0.0
    %2745 = vmatpush1.msra.mxu0 0.0
    %2746 = vmatprep.subr.mxu0 0.0
    %2747 = vmatpush1.msra.mxu0 0.0
    %2748 = vmatprep.mubr.f32.mxu0 0.0
    %2749 = vmatmul.mubr.f32.gmra.mrb[0].mxu0 %v2673
    %v2750 = vpop.f32.mrb[0].mxu0
    %v2751 = vadd.f32 0.0, %v2750
    %v2752 = vpop.f32.mrb[0].mxu0
    %2753 = vmatprep.mubr.f32.mxu0 0.0
    %2754 = vmatmul.mubr.f32.gmra.mrb[0].mxu0 %v2676
    %v2755 = vpop.f32.mrb[0].mxu0
    %v2756 = vadd.f32 0.0, %v2755
    %v2757 = vpop.f32.mrb[0].mxu0
    %2758 = vmatprep.mubr.f32.mxu0 0.0
    %2759 = vmatmul.mubr.f32.gmra.mrb[0].mxu0 %v2679
    %v2760 = vpop.f32.mrb[0].mxu0
    %v2761 = vadd.f32 0.0, %v2760
    %v2762 = vpop.f32.mrb[0].mxu0
    %2763 = vmatprep.mubr.f32.mxu0 0.0
    %2764 = vmatmul.mubr.f32.gmra.mrb[0].mxu0 %v2682
    %v2765 = vpop.f32.mrb[0].mxu0
    %v2766 = vadd.f32 0.0, %v2765
    %v2767 = vpop.f32.mrb[0].mxu0
    %2768 = vdwg.mxu0
    %v2769 = vmax.f32 %v2751, %v2756
    %v2770 = vsub.f32 %v2751, %v2769
    %v2771 = vmul.f32 %v2770, 1.442695
    %v2772 = vpow.pop %v2771
    %v2773 = vsub.f32 %v2756, %v2769
    %v2774 = vmul.f32 %v2773, 1.442695
    %v2775 = vpow.pop %v2774
    %v2776 = vadd.f32 %v2772, %v2775
    %v2777 = vrcp.pop %v2776
    %v2778 = vmul.f32 %v2772, %v2777
    %v2779 = vmul.f32 %v2775, %v2777
    %v2780 = vmax.f32 %v2761, %v2766
    %v2781 = vsub.f32 %v2761, %v2780
    %v2782 = vmul.f32 %v2781, 1.442695
    %v2783 = vpow.pop %v2782
    %v2784 = vsub.f32 %v2766, %v2780
    %v2785 = vmul.f32 %v2784, 1.442695
    %v2786 = vpow.pop %v2785
    %v2787 = vadd.f32 %v2783, %v2786
    %v2788 = vrcp.pop %v2787
    %v2789 = vmul.f32 %v2783, %v2788
    %v2790 = vmul.f32 %v2786, %v2788
    %v2792 = vsel %vm434, %v2778, 0
    %v2795 = vsel %vm434, %v2779, 0
    %v2798 = vsel %vm434, %v2789, 0
    %v2801 = vsel %vm434, %v2790, 0
    %2803 = vmatprep.subr.mxu0 0.0
    %2804 = vmatpush1.msra.mxu0 %v449
    %2805 = vmatprep.subr.mxu0 0.0
    %2806 = vmatpush1.msra.mxu0 0.0
    %2807 = vmatprep.subr.mxu0 0.0
    %2808 = vmatpush1.msra.mxu0 0.0
    %2809 = vmatprep.subr.mxu0 0.0
    %2810 = vmatpush1.msra.mxu0 0.0
    %2811 = vmatprep.subr.mxu0 0.0
    %2812 = vmatpush1.msra.mxu0 0.0
    %2813 = vmatprep.subr.mxu0 0.0
    %2814 = vmatpush1.msra.mxu0 0.0
    %2815 = vmatprep.subr.mxu0 0.0
    %2816 = vmatpush1.msra.mxu0 0.0
    %2817 = vmatprep.subr.mxu0 0.0
    %2818 = vmatpush1.msra.mxu0 0.0
    %2819 = vmatprep.subr.mxu0 0.0
    %2820 = vmatpush1.msra.mxu0 0.0
    %2821 = vmatprep.subr.mxu0 0.0
    %2822 = vmatpush1.msra.mxu0 0.0
    %2823 = vmatprep.subr.mxu0 0.0
    %2824 = vmatpush1.msra.mxu0 0.0
    %2825 = vmatprep.subr.mxu0 0.0
    %2826 = vmatpush1.msra.mxu0 0.0
    %2827 = vmatprep.subr.mxu0 0.0
    %2828 = vmatpush1.msra.mxu0 0.0
    %2829 = vmatprep.subr.mxu0 0.0
    %2830 = vmatpush1.msra.mxu0 0.0
    %2831 = vmatprep.subr.mxu0 0.0
    %2832 = vmatpush1.msra.mxu0 0.0
    %2833 = vmatprep.subr.mxu0 0.0
    %2834 = vmatpush1.msra.mxu0 0.0
    %2835 = vmatprep.subr.mxu0 0.0
    %2836 = vmatpush1.msra.mxu0 0.0
    %2837 = vmatprep.subr.mxu0 0.0
    %2838 = vmatpush1.msra.mxu0 0.0
    %2839 = vmatprep.subr.mxu0 0.0
    %2840 = vmatpush1.msra.mxu0 0.0
    %2841 = vmatprep.subr.mxu0 0.0
    %2842 = vmatpush1.msra.mxu0 0.0
    %2843 = vmatprep.subr.mxu0 0.0
    %2844 = vmatpush1.msra.mxu0 0.0
    %2845 = vmatprep.subr.mxu0 0.0
    %2846 = vmatpush1.msra.mxu0 0.0
    %2847 = vmatprep.subr.mxu0 0.0
    %2848 = vmatpush1.msra.mxu0 0.0
    %2849 = vmatprep.subr.mxu0 0.0
    %2850 = vmatpush1.msra.mxu0 0.0
    %2851 = vmatprep.subr.mxu0 0.0
    %2852 = vmatpush1.msra.mxu0 0.0
    %2853 = vmatprep.subr.mxu0 0.0
    %2854 = vmatpush1.msra.mxu0 0.0
    %2855 = vmatprep.subr.mxu0 0.0
    %2856 = vmatpush1.msra.mxu0 0.0
    %2857 = vmatprep.subr.mxu0 0.0
    %2858 = vmatpush1.msra.mxu0 0.0
    %2859 = vmatprep.subr.mxu0 0.0
    %2860 = vmatpush1.msra.mxu0 0.0
    %2861 = vmatprep.subr.mxu0 0.0
    %2862 = vmatpush1.msra.mxu0 0.0
    %2863 = vmatprep.subr.mxu0 0.0
    %2864 = vmatpush1.msra.mxu0 0.0
    %2865 = vmatprep.subr.mxu0 0.0
    %2866 = vmatpush1.msra.mxu0 0.0
    %2867 = vmatprep.mubr.f32.mxu0 0.0
    %2868 = vmatmul.mubr.f32.gmra.mrb[0].mxu0 %v2792
    %v2869 = vpop.f32.mrb[0].mxu0
    %v2870 = vadd.f32 0.0, %v2869
    %v2871 = vpop.f32.mrb[0].mxu0
    %2872 = vmatprep.mubr.f32.mxu0 0.0
    %2873 = vmatmul.mubr.f32.gmra.mrb[0].mxu0 %v2795
    %v2874 = vpop.f32.mrb[0].mxu0
    %v2875 = vadd.f32 0.0, %v2874
    %v2876 = vpop.f32.mrb[0].mxu0
    %2877 = vmatprep.mubr.f32.mxu0 0.0
    %2878 = vmatmul.mubr.f32.gmra.mrb[0].mxu0 %v2798
    %v2879 = vpop.f32.mrb[0].mxu0
    %v2880 = vadd.f32 0.0, %v2879
    %v2881 = vpop.f32.mrb[0].mxu0
    %2882 = vmatprep.mubr.f32.mxu0 0.0
    %2883 = vmatmul.mubr.f32.gmra.mrb[0].mxu0 %v2801
    %v2884 = vpop.f32.mrb[0].mxu0
    %v2885 = vadd.f32 0.0, %v2884
    %v2886 = vpop.f32.mrb[0].mxu0
    %2887 = vdwg.mxu0
    %v2888 = vmul.f32 %v2870, %v2658
    %v2889 = vmul.f32 %v2875, %v2663
    %v2890 = vadd.f32 %v2888, %v2889
    %v2891 = vmul.f32 %v2880, %v2658
    %v2892 = vmul.f32 %v2885, %v2663
    %v2893 = vadd.f32 %v2891, %v2892
    %v2894 = vld [vmem:[#allocation5 + $0x3b8] sm:$0xff]
    %v2895 = vld [vmem:[#allocation5 + $0x3c0] sm:$0xff]
    %v2896 = vld [vmem:[#allocation5 + $0x3c8] sm:$0xff]
    %v2897 = vld [vmem:[#allocation5 + $0x3d0] sm:$0xff]
    %v2898 = vld [vmem:[#allocation5 + $0x3d8] sm:$0x1]
    %v2899 = vlaneseq
    %v2900 = vshrl.u32 %v2899, 7
    %v2901 = vsub.s32 0, %v2900
    %v2902 = vrot.slane %v2898, %v2901
    %v2904 = vsel %vm59, %v2890, 0
    %v2907 = vsel %vm59, %v2893, 0
    %2909 = vmatprep.subr.mxu0 0.0
    %2910 = vmatpush1.msra.mxu0 %v2894
    %2911 = vmatprep.subr.mxu0 0.0
    %2912 = vmatpush1.msra.mxu0 %v2895
    %2913 = vmatprep.subr.mxu0 0.0
    %2914 = vmatpush1.msra.mxu0 %v2896
    %2915 = vmatprep.subr.mxu0 0.0
    %2916 = vmatpush1.msra.mxu0 %v2897
    %2917 = vmatprep.subr.mxu0 0.0
    %2918 = vmatpush1.msra.mxu0 0.0
    %2919 = vmatprep.subr.mxu0 0.0
    %2920 = vmatpush1.msra.mxu0 0.0
    %2921 = vmatprep.subr.mxu0 0.0
    %2922 = vmatpush1.msra.mxu0 0.0
    %2923 = vmatprep.subr.mxu0 0.0
    %2924 = vmatpush1.msra.mxu0 0.0
    %2925 = vmatprep.subr.mxu0 0.0
    %2926 = vmatpush1.msra.mxu0 0.0
    %2927 = vmatprep.subr.mxu0 0.0
    %2928 = vmatpush1.msra.mxu0 0.0
    %2929 = vmatprep.subr.mxu0 0.0
    %2930 = vmatpush1.msra.mxu0 0.0
    %2931 = vmatprep.subr.mxu0 0.0
    %2932 = vmatpush1.msra.mxu0 0.0
    %2933 = vmatprep.subr.mxu0 0.0
    %2934 = vmatpush1.msra.mxu0 0.0
    %2935 = vmatprep.subr.mxu0 0.0
    %2936 = vmatpush1.msra.mxu0 0.0
    %2937 = vmatprep.subr.mxu0 0.0
    %2938 = vmatpush1.msra.mxu0 0.0
    %2939 = vmatprep.subr.mxu0 0.0
    %2940 = vmatpush1.msra.mxu0 0.0
    %2941 = vmatprep.subr.mxu0 0.0
    %2942 = vmatpush1.msra.mxu0 0.0
    %2943 = vmatprep.subr.mxu0 0.0
    %2944 = vmatpush1.msra.mxu0 0.0
    %2945 = vmatprep.subr.mxu0 0.0
    %2946 = vmatpush1.msra.mxu0 0.0
    %2947 = vmatprep.subr.mxu0 0.0
    %2948 = vmatpush1.msra.mxu0 0.0
    %2949 = vmatprep.subr.mxu0 0.0
    %2950 = vmatpush1.msra.mxu0 0.0
    %2951 = vmatprep.subr.mxu0 0.0
    %2952 = vmatpush1.msra.mxu0 0.0
    %2953 = vmatprep.subr.mxu0 0.0
    %2954 = vmatpush1.msra.mxu0 0.0
    %2955 = vmatprep.subr.mxu0 0.0
    %2956 = vmatpush1.msra.mxu0 0.0
    %2957 = vmatprep.subr.mxu0 0.0
    %2958 = vmatpush1.msra.mxu0 0.0
    %2959 = vmatprep.subr.mxu0 0.0
    %2960 = vmatpush1.msra.mxu0 0.0
    %2961 = vmatprep.subr.mxu0 0.0
    %2962 = vmatpush1.msra.mxu0 0.0
    %2963 = vmatprep.subr.mxu0 0.0
    %2964 = vmatpush1.msra.mxu0 0.0
    %2965 = vmatprep.subr.mxu0 0.0
    %2966 = vmatpush1.msra.mxu0 0.0
    %2967 = vmatprep.subr.mxu0 0.0
    %2968 = vmatpush1.msra.mxu0 0.0
    %2969 = vmatprep.subr.mxu0 0.0
    %2970 = vmatpush1.msra.mxu0 0.0
    %2971 = vmatprep.subr.mxu0 0.0
    %2972 = vmatpush1.msra.mxu0 0.0
    %2973 = vmatprep.mubr.f32.mxu0 0.0
    %2974 = vmatmul.mubr.f32.gmra.mrb[0].mxu0 %v2904
    %v2975 = vpop.f32.mrb[0].mxu0
    %v2976 = vadd.f32 %v2902, %v2975
    %v2977 = vpop.f32.mrb[0].mxu0
    %2978 = vmatprep.mubr.f32.mxu0 0.0
    %2979 = vmatmul.mubr.f32.gmra.mrb[0].mxu0 %v2907
    %v2980 = vpop.f32.mrb[0].mxu0
    %v2981 = vadd.f32 %v2902, %v2980
    %v2982 = vpop.f32.mrb[0].mxu0
    %2983 = vdwg.mxu0
    %v2984 = vadd.f32 %v2400, %v2976
    %v2985 = vadd.f32 %v2401, %v2981
    %v2986 = vld [vmem:[#allocation5 + $0x3f0] sm:$0x1]
    %v2987 = vld [vmem:[#allocation5 + $0x3f8] sm:$0x1]
    %v2988 = vsel %vm59, %v2984, 0.0
    %2989 = vadd.xlane.f32.xlu0 %v2988
    %v2990 = vpop.xlane.xlu0 %2989
    %v2991 = vsel %vm59, %v2985, 0.0
    %2992 = vadd.xlane.f32.xlu0 %v2991
    %v2993 = vpop.xlane.xlu0 %2992
    %v2994 = vmul.f32 %v2990, %v642
    %v2995 = vmul.f32 %v2993, %v642
    %v2996 = vsub.f32 %v2984, %v2994
    %v2997 = vsub.f32 %v2985, %v2995
    %v2998 = vmul.f32 %v2996, %v2996
    %v2999 = vmul.f32 %v2997, %v2997
    %v3000 = vsel %vm59, %v2998, 0.0
    %3001 = vadd.xlane.f32.xlu0 %v3000
    %v3002 = vpop.xlane.xlu0 %3001
    %v3003 = vsel %vm59, %v2999, 0.0
    %3004 = vadd.xlane.f32.xlu0 %v3003
    %v3005 = vpop.xlane.xlu0 %3004
    %v3006 = vmul.f32 %v3002, %v642
    %v3007 = vmul.f32 %v3005, %v642
    %v3008 = vadd.f32 %v3006, 1e-05
    %v3009 = vadd.f32 %v3007, 1e-05
    %v3010 = vrsqrt.pop %v3008
    %v3011 = vrsqrt.pop %v3009
    %v3012 = vmul.f32 %v2996, %v3010
    %v3013 = vmul.f32 %v2997, %v3011
    %v3014 = vlaneseq
    %v3015 = vshrl.u32 %v3014, 7
    %v3016 = vsub.s32 0, %v3015
    %v3017 = vrot.slane %v2986, %v3016
    %v3018 = vmul.f32 %v3012, %v3017
    %v3019 = vmul.f32 %v3013, %v3017
    %v3020 = vlaneseq
    %v3021 = vshrl.u32 %v3020, 7
    %v3022 = vsub.s32 0, %v3021
    %v3023 = vrot.slane %v2987, %v3022
    %v3024 = vadd.f32 %v3018, %v3023
    %v3025 = vadd.f32 %v3019, %v3023
    %v3026 = vld [vmem:[#allocation5 + $0x410] sm:$0xff]
    %v3027 = vld [vmem:[#allocation5 + $0x418] sm:$0xff]
    %v3028 = vld [vmem:[#allocation5 + $0x420] sm:$0xff]
    %v3029 = vld [vmem:[#allocation5 + $0x428] sm:$0xff]
    %v3030 = vld [vmem:[#allocation5 + $0x430] sm:$0x1]
    %v3031 = vlaneseq
    %v3032 = vshrl.u32 %v3031, 7
    %v3033 = vsub.s32 0, %v3032
    %v3034 = vrot.slane %v3030, %v3033
    %v3036 = vsel %vm59, %v3024, 0
    %v3039 = vsel %vm59, %v3025, 0
    %3041 = vmatprep.subr.mxu0 0.0
    %3042 = vmatpush1.msra.mxu0 %v3026
    %3043 = vmatprep.subr.mxu0 0.0
    %3044 = vmatpush1.msra.mxu0 %v3027
    %3045 = vmatprep.subr.mxu0 0.0
    %3046 = vmatpush1.msra.mxu0 %v3028
    %3047 = vmatprep.subr.mxu0 0.0
    %3048 = vmatpush1.msra.mxu0 %v3029
    %3049 = vmatprep.subr.mxu0 0.0
    %3050 = vmatpush1.msra.mxu0 0.0
    %3051 = vmatprep.subr.mxu0 0.0
    %3052 = vmatpush1.msra.mxu0 0.0
    %3053 = vmatprep.subr.mxu0 0.0
    %3054 = vmatpush1.msra.mxu0 0.0
    %3055 = vmatprep.subr.mxu0 0.0
    %3056 = vmatpush1.msra.mxu0 0.0
    %3057 = vmatprep.subr.mxu0 0.0
    %3058 = vmatpush1.msra.mxu0 0.0
    %3059 = vmatprep.subr.mxu0 0.0
    %3060 = vmatpush1.msra.mxu0 0.0
    %3061 = vmatprep.subr.mxu0 0.0
    %3062 = vmatpush1.msra.mxu0 0.0
    %3063 = vmatprep.subr.mxu0 0.0
    %3064 = vmatpush1.msra.mxu0 0.0
    %3065 = vmatprep.subr.mxu0 0.0
    %3066 = vmatpush1.msra.mxu0 0.0
    %3067 = vmatprep.subr.mxu0 0.0
    %3068 = vmatpush1.msra.mxu0 0.0
    %3069 = vmatprep.subr.mxu0 0.0
    %3070 = vmatpush1.msra.mxu0 0.0
    %3071 = vmatprep.subr.mxu0 0.0
    %3072 = vmatpush1.msra.mxu0 0.0
    %3073 = vmatprep.subr.mxu0 0.0
    %3074 = vmatpush1.msra.mxu0 0.0
    %3075 = vmatprep.subr.mxu0 0.0
    %3076 = vmatpush1.msra.mxu0 0.0
    %3077 = vmatprep.subr.mxu0 0.0
    %3078 = vmatpush1.msra.mxu0 0.0
    %3079 = vmatprep.subr.mxu0 0.0
    %3080 = vmatpush1.msra.mxu0 0.0
    %3081 = vmatprep.subr.mxu0 0.0
    %3082 = vmatpush1.msra.mxu0 0.0
    %3083 = vmatprep.subr.mxu0 0.0
    %3084 = vmatpush1.msra.mxu0 0.0
    %3085 = vmatprep.subr.mxu0 0.0
    %3086 = vmatpush1.msra.mxu0 0.0
    %3087 = vmatprep.subr.mxu0 0.0
    %3088 = vmatpush1.msra.mxu0 0.0
    %3089 = vmatprep.subr.mxu0 0.0
    %3090 = vmatpush1.msra.mxu0 0.0
    %3091 = vmatprep.subr.mxu0 0.0
    %3092 = vmatpush1.msra.mxu0 0.0
    %3093 = vmatprep.subr.mxu0 0.0
    %3094 = vmatpush1.msra.mxu0 0.0
    %3095 = vmatprep.subr.mxu0 0.0
    %3096 = vmatpush1.msra.mxu0 0.0
    %3097 = vmatprep.subr.mxu0 0.0
    %3098 = vmatpush1.msra.mxu0 0.0
    %3099 = vmatprep.subr.mxu0 0.0
    %3100 = vmatpush1.msra.mxu0 0.0
    %3101 = vmatprep.subr.mxu0 0.0
    %3102 = vmatpush1.msra.mxu0 0.0
    %3103 = vmatprep.subr.mxu0 0.0
    %3104 = vmatpush1.msra.mxu0 0.0
    %3105 = vmatprep.mubr.f32.mxu0 0.0
    %3106 = vmatmul.mubr.f32.gmra.mrb[0].mxu0 %v3036
    %v3107 = vpop.f32.mrb[0].mxu0
    %v3108 = vadd.f32 %v3034, %v3107
    %v3109 = vpop.f32.mrb[0].mxu0
    %3110 = vmatprep.mubr.f32.mxu0 0.0
    %3111 = vmatmul.mubr.f32.gmra.mrb[0].mxu0 %v3039
    %v3112 = vpop.f32.mrb[0].mxu0
    %v3113 = vadd.f32 %v3034, %v3112
    %v3114 = vpop.f32.mrb[0].mxu0
    %3115 = vdwg.mxu0
    %v3116 = vmax.f32 %v3108, 0.0
    %v3117 = vmax.f32 %v3113, 0.0
    %v3118 = vld [vmem:[#allocation5 + $0x438] sm:$0xff]
    %v3119 = vld [vmem:[#allocation5 + $0x440] sm:$0xff]
    %v3120 = vld [vmem:[#allocation5 + $0x448] sm:$0xff]
    %v3121 = vld [vmem:[#allocation5 + $0x450] sm:$0xff]
    %v3122 = vld [vmem:[#allocation5 + $0x458] sm:$0xff]
    %v3123 = vld [vmem:[#allocation5 + $0x460] sm:$0xff]
    %v3124 = vld [vmem:[#allocation5 + $0x468] sm:$0xff]
    %v3125 = vld [vmem:[#allocation5 + $0x470] sm:$0xff]
    %v3126 = vld [vmem:[#allocation5 + $0x478] sm:$0x1]
    %v3127 = vlaneseq
    %v3128 = vshrl.u32 %v3127, 7
    %v3129 = vsub.s32 0, %v3128
    %v3130 = vrot.slane %v3126, %v3129
    %v3132 = vsel %vm780, %v3116, 0
    %v3135 = vsel %vm780, %v3117, 0
    %3137 = vmatprep.subr.mxu0 0.0
    %3138 = vmatpush1.msra.mxu0 %v3118
    %3139 = vmatprep.subr.mxu0 0.0
    %3140 = vmatpush1.msra.mxu0 %v3119
    %3141 = vmatprep.subr.mxu0 0.0
    %3142 = vmatpush1.msra.mxu0 %v3120
    %3143 = vmatprep.subr.mxu0 0.0
    %3144 = vmatpush1.msra.mxu0 %v3121
    %3145 = vmatprep.subr.mxu0 0.0
    %3146 = vmatpush1.msra.mxu0 %v3122
    %3147 = vmatprep.subr.mxu0 0.0
    %3148 = vmatpush1.msra.mxu0 %v3123
    %3149 = vmatprep.subr.mxu0 0.0
    %3150 = vmatpush1.msra.mxu0 %v3124
    %3151 = vmatprep.subr.mxu0 0.0
    %3152 = vmatpush1.msra.mxu0 %v3125
    %3153 = vmatprep.subr.mxu0 0.0
    %3154 = vmatpush1.msra.mxu0 0.0
    %3155 = vmatprep.subr.mxu0 0.0
    %3156 = vmatpush1.msra.mxu0 0.0
    %3157 = vmatprep.subr.mxu0 0.0
    %3158 = vmatpush1.msra.mxu0 0.0
    %3159 = vmatprep.subr.mxu0 0.0
    %3160 = vmatpush1.msra.mxu0 0.0
    %3161 = vmatprep.subr.mxu0 0.0
    %3162 = vmatpush1.msra.mxu0 0.0
    %3163 = vmatprep.subr.mxu0 0.0
    %3164 = vmatpush1.msra.mxu0 0.0
    %3165 = vmatprep.subr.mxu0 0.0
    %3166 = vmatpush1.msra.mxu0 0.0
    %3167 = vmatprep.subr.mxu0 0.0
    %3168 = vmatpush1.msra.mxu0 0.0
    %3169 = vmatprep.subr.mxu0 0.0
    %3170 = vmatpush1.msra.mxu0 0.0
    %3171 = vmatprep.subr.mxu0 0.0
    %3172 = vmatpush1.msra.mxu0 0.0
    %3173 = vmatprep.subr.mxu0 0.0
    %3174 = vmatpush1.msra.mxu0 0.0
    %3175 = vmatprep.subr.mxu0 0.0
    %3176 = vmatpush1.msra.mxu0 0.0
    %3177 = vmatprep.subr.mxu0 0.0
    %3178 = vmatpush1.msra.mxu0 0.0
    %3179 = vmatprep.subr.mxu0 0.0
    %3180 = vmatpush1.msra.mxu0 0.0
    %3181 = vmatprep.subr.mxu0 0.0
    %3182 = vmatpush1.msra.mxu0 0.0
    %3183 = vmatprep.subr.mxu0 0.0
    %3184 = vmatpush1.msra.mxu0 0.0
    %3185 = vmatprep.subr.mxu0 0.0
    %3186 = vmatpush1.msra.mxu0 0.0
    %3187 = vmatprep.subr.mxu0 0.0
    %3188 = vmatpush1.msra.mxu0 0.0
    %3189 = vmatprep.subr.mxu0 0.0
    %3190 = vmatpush1.msra.mxu0 0.0
    %3191 = vmatprep.subr.mxu0 0.0
    %3192 = vmatpush1.msra.mxu0 0.0
    %3193 = vmatprep.subr.mxu0 0.0
    %3194 = vmatpush1.msra.mxu0 0.0
    %3195 = vmatprep.subr.mxu0 0.0
    %3196 = vmatpush1.msra.mxu0 0.0
    %3197 = vmatprep.subr.mxu0 0.0
    %3198 = vmatpush1.msra.mxu0 0.0
    %3199 = vmatprep.subr.mxu0 0.0
    %3200 = vmatpush1.msra.mxu0 0.0
    %3201 = vmatprep.mubr.f32.mxu0 0.0
    %3202 = vmatmul.mubr.f32.gmra.mrb[0].mxu0 %v3132
    %v3203 = vpop.f32.mrb[0].mxu0
    %v3204 = vadd.f32 %v3130, %v3203
    %v3205 = vpop.f32.mrb[0].mxu0
    %3206 = vmatprep.mubr.f32.mxu0 0.0
    %3207 = vmatmul.mubr.f32.gmra.mrb[0].mxu0 %v3135
    %v3208 = vpop.f32.mrb[0].mxu0
    %v3209 = vadd.f32 %v3130, %v3208
    %v3210 = vpop.f32.mrb[0].mxu0
    %3211 = vdwg.mxu0
    %v3212 = vadd.f32 %v3024, %v3204
    %v3213 = vadd.f32 %v3025, %v3209
    %v3214 = vld [vmem:[#allocation5 + $0x400] sm:$0x1]
    %v3215 = vld [vmem:[#allocation5 + $0x408] sm:$0x1]
    %v3216 = vsel %vm59, %v3212, 0.0
    %3217 = vadd.xlane.f32.xlu0 %v3216
    %v3218 = vpop.xlane.xlu0 %3217
    %v3219 = vsel %vm59, %v3213, 0.0
    %3220 = vadd.xlane.f32.xlu0 %v3219
    %v3221 = vpop.xlane.xlu0 %3220
    %v3222 = vmul.f32 %v3218, %v642
    %v3223 = vmul.f32 %v3221, %v642
    %v3224 = vsub.f32 %v3212, %v3222
    %v3225 = vsub.f32 %v3213, %v3223
    %v3226 = vmul.f32 %v3224, %v3224
    %v3227 = vmul.f32 %v3225, %v3225
    %v3228 = vsel %vm59, %v3226, 0.0
    %3229 = vadd.xlane.f32.xlu0 %v3228
    %v3230 = vpop.xlane.xlu0 %3229
    %v3231 = vsel %vm59, %v3227, 0.0
    %3232 = vadd.xlane.f32.xlu0 %v3231
    %v3233 = vpop.xlane.xlu0 %3232
    %v3234 = vmul.f32 %v3230, %v642
    %v3235 = vmul.f32 %v3233, %v642
    %v3236 = vadd.f32 %v3234, 1e-05
    %v3237 = vadd.f32 %v3235, 1e-05
    %v3238 = vrsqrt.pop %v3236
    %v3239 = vrsqrt.pop %v3237
    %v3240 = vmul.f32 %v3224, %v3238
    %v3241 = vmul.f32 %v3225, %v3239
    %v3242 = vlaneseq
    %v3243 = vshrl.u32 %v3242, 7
    %v3244 = vsub.s32 0, %v3243
    %v3245 = vrot.slane %v3214, %v3244
    %v3246 = vmul.f32 %v3240, %v3245
    %v3247 = vmul.f32 %v3241, %v3245
    %v3248 = vlaneseq
    %v3249 = vshrl.u32 %v3248, 7
    %v3250 = vsub.s32 0, %v3249
    %v3251 = vrot.slane %v3215, %v3250
    %v3252 = vadd.f32 %v3246, %v3251
    %v3253 = vadd.f32 %v3247, %v3251
    %v3254 = vld [vmem:[#allocation5 + $0x480] sm:$0xff]
    %v3255 = vld [vmem:[#allocation5 + $0x488] sm:$0xff]
    %v3256 = vld [vmem:[#allocation5 + $0x490] sm:$0xff]
    %v3257 = vld [vmem:[#allocation5 + $0x498] sm:$0xff]
    %v3258 = vld [vmem:[#allocation5 + $0x4a0] sm:$0x1]
    %v3259 = vlaneseq
    %v3260 = vshrl.u32 %v3259, 7
    %v3261 = vsub.s32 0, %v3260
    %v3262 = vrot.slane %v3258, %v3261
    %v3264 = vsel %vm59, %v3252, 0
    %v3267 = vsel %vm59, %v3253, 0
    %3269 = vmatprep.subr.mxu0 0.0
    %3270 = vmatpush1.msra.mxu0 %v3254
    %3271 = vmatprep.subr.mxu0 0.0
    %3272 = vmatpush1.msra.mxu0 %v3255
    %3273 = vmatprep.subr.mxu0 0.0
    %3274 = vmatpush1.msra.mxu0 %v3256
    %3275 = vmatprep.subr.mxu0 0.0
    %3276 = vmatpush1.msra.mxu0 %v3257
    %3277 = vmatprep.subr.mxu0 0.0
    %3278 = vmatpush1.msra.mxu0 0.0
    %3279 = vmatprep.subr.mxu0 0.0
    %3280 = vmatpush1.msra.mxu0 0.0
    %3281 = vmatprep.subr.mxu0 0.0
    %3282 = vmatpush1.msra.mxu0 0.0
    %3283 = vmatprep.subr.mxu0 0.0
    %3284 = vmatpush1.msra.mxu0 0.0
    %3285 = vmatprep.subr.mxu0 0.0
    %3286 = vmatpush1.msra.mxu0 0.0
    %3287 = vmatprep.subr.mxu0 0.0
    %3288 = vmatpush1.msra.mxu0 0.0
    %3289 = vmatprep.subr.mxu0 0.0
    %3290 = vmatpush1.msra.mxu0 0.0
    %3291 = vmatprep.subr.mxu0 0.0
    %3292 = vmatpush1.msra.mxu0 0.0
    %3293 = vmatprep.subr.mxu0 0.0
    %3294 = vmatpush1.msra.mxu0 0.0
    %3295 = vmatprep.subr.mxu0 0.0
    %3296 = vmatpush1.msra.mxu0 0.0
    %3297 = vmatprep.subr.mxu0 0.0
    %3298 = vmatpush1.msra.mxu0 0.0
    %3299 = vmatprep.subr.mxu0 0.0
    %3300 = vmatpush1.msra.mxu0 0.0
    %3301 = vmatprep.subr.mxu0 0.0
    %3302 = vmatpush1.msra.mxu0 0.0
    %3303 = vmatprep.subr.mxu0 0.0
    %3304 = vmatpush1.msra.mxu0 0.0
    %3305 = vmatprep.subr.mxu0 0.0
    %3306 = vmatpush1.msra.mxu0 0.0
    %3307 = vmatprep.subr.mxu0 0.0
    %3308 = vmatpush1.msra.mxu0 0.0
    %3309 = vmatprep.subr.mxu0 0.0
    %3310 = vmatpush1.msra.mxu0 0.0
    %3311 = vmatprep.subr.mxu0 0.0
    %3312 = vmatpush1.msra.mxu0 0.0
    %3313 = vmatprep.subr.mxu0 0.0
    %3314 = vmatpush1.msra.mxu0 0.0
    %3315 = vmatprep.subr.mxu0 0.0
    %3316 = vmatpush1.msra.mxu0 0.0
    %3317 = vmatprep.subr.mxu0 0.0
    %3318 = vmatpush1.msra.mxu0 0.0
    %3319 = vmatprep.subr.mxu0 0.0
    %3320 = vmatpush1.msra.mxu0 0.0
    %3321 = vmatprep.subr.mxu0 0.0
    %3322 = vmatpush1.msra.mxu0 0.0
    %3323 = vmatprep.subr.mxu0 0.0
    %3324 = vmatpush1.msra.mxu0 0.0
    %3325 = vmatprep.subr.mxu0 0.0
    %3326 = vmatpush1.msra.mxu0 0.0
    %3327 = vmatprep.subr.mxu0 0.0
    %3328 = vmatpush1.msra.mxu0 0.0
    %3329 = vmatprep.subr.mxu0 0.0
    %3330 = vmatpush1.msra.mxu0 0.0
    %3331 = vmatprep.subr.mxu0 0.0
    %3332 = vmatpush1.msra.mxu0 0.0
    %3333 = vmatprep.mubr.f32.mxu0 0.0
    %3334 = vmatmul.mubr.f32.gmra.mrb[0].mxu0 %v3264
    %v3335 = vpop.f32.mrb[0].mxu0
    %v3336 = vadd.f32 %v3262, %v3335
    %v3337 = vpop.f32.mrb[0].mxu0
    %3338 = vmatprep.mubr.f32.mxu0 0.0
    %3339 = vmatmul.mubr.f32.gmra.mrb[0].mxu0 %v3267
    %v3340 = vpop.f32.mrb[0].mxu0
    %v3341 = vadd.f32 %v3262, %v3340
    %v3342 = vpop.f32.mrb[0].mxu0
    %3343 = vdwg.mxu0
    %v3344 = vld [vmem:[#allocation5 + $0x4a8] sm:$0xff]
    %v3345 = vld [vmem:[#allocation5 + $0x4b0] sm:$0xff]
    %v3346 = vld [vmem:[#allocation5 + $0x4b8] sm:$0xff]
    %v3347 = vld [vmem:[#allocation5 + $0x4c0] sm:$0xff]
    %v3348 = vld [vmem:[#allocation5 + $0x4c8] sm:$0x1]
    %v3349 = vlaneseq
    %v3350 = vshrl.u32 %v3349, 7
    %v3351 = vsub.s32 0, %v3350
    %v3352 = vrot.slane %v3348, %v3351
    %3353 = vmatprep.subr.mxu0 0.0
    %3354 = vmatpush1.msra.mxu0 %v3344
    %3355 = vmatprep.subr.mxu0 0.0
    %3356 = vmatpush1.msra.mxu0 %v3345
    %3357 = vmatprep.subr.mxu0 0.0
    %3358 = vmatpush1.msra.mxu0 %v3346
    %3359 = vmatprep.subr.mxu0 0.0
    %3360 = vmatpush1.msra.mxu0 %v3347
    %3361 = vmatprep.subr.mxu0 0.0
    %3362 = vmatpush1.msra.mxu0 0.0
    %3363 = vmatprep.subr.mxu0 0.0
    %3364 = vmatpush1.msra.mxu0 0.0
    %3365 = vmatprep.subr.mxu0 0.0
    %3366 = vmatpush1.msra.mxu0 0.0
    %3367 = vmatprep.subr.mxu0 0.0
    %3368 = vmatpush1.msra.mxu0 0.0
    %3369 = vmatprep.subr.mxu0 0.0
    %3370 = vmatpush1.msra.mxu0 0.0
    %3371 = vmatprep.subr.mxu0 0.0
    %3372 = vmatpush1.msra.mxu0 0.0
    %3373 = vmatprep.subr.mxu0 0.0
    %3374 = vmatpush1.msra.mxu0 0.0
    %3375 = vmatprep.subr.mxu0 0.0
    %3376 = vmatpush1.msra.mxu0 0.0
    %3377 = vmatprep.subr.mxu0 0.0
    %3378 = vmatpush1.msra.mxu0 0.0
    %3379 = vmatprep.subr.mxu0 0.0
    %3380 = vmatpush1.msra.mxu0 0.0
    %3381 = vmatprep.subr.mxu0 0.0
    %3382 = vmatpush1.msra.mxu0 0.0
    %3383 = vmatprep.subr.mxu0 0.0
    %3384 = vmatpush1.msra.mxu0 0.0
    %3385 = vmatprep.subr.mxu0 0.0
    %3386 = vmatpush1.msra.mxu0 0.0
    %3387 = vmatprep.subr.mxu0 0.0
    %3388 = vmatpush1.msra.mxu0 0.0
    %3389 = vmatprep.subr.mxu0 0.0
    %3390 = vmatpush1.msra.mxu0 0.0
    %3391 = vmatprep.subr.mxu0 0.0
    %3392 = vmatpush1.msra.mxu0 0.0
    %3393 = vmatprep.subr.mxu0 0.0
    %3394 = vmatpush1.msra.mxu0 0.0
    %3395 = vmatprep.subr.mxu0 0.0
    %3396 = vmatpush1.msra.mxu0 0.0
    %3397 = vmatprep.subr.mxu0 0.0
    %3398 = vmatpush1.msra.mxu0 0.0
    %3399 = vmatprep.subr.mxu0 0.0
    %3400 = vmatpush1.msra.mxu0 0.0
    %3401 = vmatprep.subr.mxu0 0.0
    %3402 = vmatpush1.msra.mxu0 0.0
    %3403 = vmatprep.subr.mxu0 0.0
    %3404 = vmatpush1.msra.mxu0 0.0
    %3405 = vmatprep.subr.mxu0 0.0
    %3406 = vmatpush1.msra.mxu0 0.0
    %3407 = vmatprep.subr.mxu0 0.0
    %3408 = vmatpush1.msra.mxu0 0.0
    %3409 = vmatprep.subr.mxu0 0.0
    %3410 = vmatpush1.msra.mxu0 0.0
    %3411 = vmatprep.subr.mxu0 0.0
    %3412 = vmatpush1.msra.mxu0 0.0
    %3413 = vmatprep.subr.mxu0 0.0
    %3414 = vmatpush1.msra.mxu0 0.0
    %3415 = vmatprep.subr.mxu0 0.0
    %3416 = vmatpush1.msra.mxu0 0.0
    %3417 = vmatprep.mubr.f32.mxu0 0.0
    %3418 = vmatmul.mubr.f32.gmra.mrb[0].mxu0 %v3264
    %v3419 = vpop.f32.mrb[0].mxu0
    %v3420 = vadd.f32 %v3352, %v3419
    %v3421 = vpop.f32.mrb[0].mxu0
    %3422 = vmatprep.mubr.f32.mxu0 0.0
    %3423 = vmatmul.mubr.f32.gmra.mrb[0].mxu0 %v3267
    %v3424 = vpop.f32.mrb[0].mxu0
    %v3425 = vadd.f32 %v3352, %v3424
    %v3426 = vpop.f32.mrb[0].mxu0
    %3427 = vdwg.mxu0
    %v3428 = vld [vmem:[#allocation5 + $0x4d0] sm:$0xff]
    %v3429 = vld [vmem:[#allocation5 + $0x4d8] sm:$0xff]
    %v3430 = vld [vmem:[#allocation5 + $0x4e0] sm:$0xff]
    %v3431 = vld [vmem:[#allocation5 + $0x4e8] sm:$0xff]
    %v3432 = vld [vmem:[#allocation5 + $0x4f0] sm:$0x1]
    %v3433 = vlaneseq
    %v3434 = vshrl.u32 %v3433, 7
    %v3435 = vsub.s32 0, %v3434
    %v3436 = vrot.slane %v3432, %v3435
    %3437 = vmatprep.subr.mxu0 0.0
    %3438 = vmatpush1.msra.mxu0 %v3428
    %3439 = vmatprep.subr.mxu0 0.0
    %3440 = vmatpush1.msra.mxu0 %v3429
    %3441 = vmatprep.subr.mxu0 0.0
    %3442 = vmatpush1.msra.mxu0 %v3430
    %3443 = vmatprep.subr.mxu0 0.0
    %3444 = vmatpush1.msra.mxu0 %v3431
    %3445 = vmatprep.subr.mxu0 0.0
    %3446 = vmatpush1.msra.mxu0 0.0
    %3447 = vmatprep.subr.mxu0 0.0
    %3448 = vmatpush1.msra.mxu0 0.0
    %3449 = vmatprep.subr.mxu0 0.0
    %3450 = vmatpush1.msra.mxu0 0.0
    %3451 = vmatprep.subr.mxu0 0.0
    %3452 = vmatpush1.msra.mxu0 0.0
    %3453 = vmatprep.subr.mxu0 0.0
    %3454 = vmatpush1.msra.mxu0 0.0
    %3455 = vmatprep.subr.mxu0 0.0
    %3456 = vmatpush1.msra.mxu0 0.0
    %3457 = vmatprep.subr.mxu0 0.0
    %3458 = vmatpush1.msra.mxu0 0.0
    %3459 = vmatprep.subr.mxu0 0.0
    %3460 = vmatpush1.msra.mxu0 0.0
    %3461 = vmatprep.subr.mxu0 0.0
    %3462 = vmatpush1.msra.mxu0 0.0
    %3463 = vmatprep.subr.mxu0 0.0
    %3464 = vmatpush1.msra.mxu0 0.0
    %3465 = vmatprep.subr.mxu0 0.0
    %3466 = vmatpush1.msra.mxu0 0.0
    %3467 = vmatprep.subr.mxu0 0.0
    %3468 = vmatpush1.msra.mxu0 0.0
    %3469 = vmatprep.subr.mxu0 0.0
    %3470 = vmatpush1.msra.mxu0 0.0
    %3471 = vmatprep.subr.mxu0 0.0
    %3472 = vmatpush1.msra.mxu0 0.0
    %3473 = vmatprep.subr.mxu0 0.0
    %3474 = vmatpush1.msra.mxu0 0.0
    %3475 = vmatprep.subr.mxu0 0.0
    %3476 = vmatpush1.msra.mxu0 0.0
    %3477 = vmatprep.subr.mxu0 0.0
    %3478 = vmatpush1.msra.mxu0 0.0
    %3479 = vmatprep.subr.mxu0 0.0
    %3480 = vmatpush1.msra.mxu0 0.0
    %3481 = vmatprep.subr.mxu0 0.0
    %3482 = vmatpush1.msra.mxu0 0.0
    %3483 = vmatprep.subr.mxu0 0.0
    %3484 = vmatpush1.msra.mxu0 0.0
    %3485 = vmatprep.subr.mxu0 0.0
    %3486 = vmatpush1.msra.mxu0 0.0
    %3487 = vmatprep.subr.mxu0 0.0
    %3488 = vmatpush1.msra.mxu0 0.0
    %3489 = vmatprep.subr.mxu0 0.0
    %3490 = vmatpush1.msra.mxu0 0.0
    %3491 = vmatprep.subr.mxu0 0.0
    %3492 = vmatpush1.msra.mxu0 0.0
    %3493 = vmatprep.subr.mxu0 0.0
    %3494 = vmatpush1.msra.mxu0 0.0
    %3495 = vmatprep.subr.mxu0 0.0
    %3496 = vmatpush1.msra.mxu0 0.0
    %3497 = vmatprep.subr.mxu0 0.0
    %3498 = vmatpush1.msra.mxu0 0.0
    %3499 = vmatprep.subr.mxu0 0.0
    %3500 = vmatpush1.msra.mxu0 0.0
    %3501 = vmatprep.mubr.f32.mxu0 0.0
    %3502 = vmatmul.mubr.f32.gmra.mrb[0].mxu0 %v3264
    %v3503 = vpop.f32.mrb[0].mxu0
    %v3504 = vadd.f32 %v3436, %v3503
    %v3505 = vpop.f32.mrb[0].mxu0
    %3506 = vmatprep.mubr.f32.mxu0 0.0
    %3507 = vmatmul.mubr.f32.gmra.mrb[0].mxu0 %v3267
    %v3508 = vpop.f32.mrb[0].mxu0
    %v3509 = vadd.f32 %v3436, %v3508
    %v3510 = vpop.f32.mrb[0].mxu0
    %3511 = vdwg.mxu0
    %v3512 = vmul.f32 %v3336, 0.35355338
    %v3513 = vmul.f32 %v3341, 0.35355338
    %v3514 = vmul.f32 %v3512, %v3420
    %v3515 = vmul.f32 %v3512, %v3425
    %v3516 = vmul.f32 %v3513, %v3420
    %v3517 = vmul.f32 %v3513, %v3425
    %v3519 = vsel %vm59, %v3514, 0
    %v3522 = vsel %vm59, %v3515, 0
    %v3525 = vsel %vm59, %v3516, 0
    %v3528 = vsel %vm59, %v3517, 0
    %3530 = vmatprep.subr.mxu0 0.0
    %3531 = vmatpush1.msra.mxu0 %v40
    %3532 = vmatprep.subr.mxu0 0.0
    %3533 = vmatpush1.msra.mxu0 %v41
    %3534 = vmatprep.subr.mxu0 0.0
    %3535 = vmatpush1.msra.mxu0 %v42
    %3536 = vmatprep.subr.mxu0 0.0
    %3537 = vmatpush1.msra.mxu0 %v43
    %3538 = vmatprep.subr.mxu0 0.0
    %3539 = vmatpush1.msra.mxu0 0.0
    %3540 = vmatprep.subr.mxu0 0.0
    %3541 = vmatpush1.msra.mxu0 0.0
    %3542 = vmatprep.subr.mxu0 0.0
    %3543 = vmatpush1.msra.mxu0 0.0
    %3544 = vmatprep.subr.mxu0 0.0
    %3545 = vmatpush1.msra.mxu0 0.0
    %3546 = vmatprep.subr.mxu0 0.0
    %3547 = vmatpush1.msra.mxu0 0.0
    %3548 = vmatprep.subr.mxu0 0.0
    %3549 = vmatpush1.msra.mxu0 0.0
    %3550 = vmatprep.subr.mxu0 0.0
    %3551 = vmatpush1.msra.mxu0 0.0
    %3552 = vmatprep.subr.mxu0 0.0
    %3553 = vmatpush1.msra.mxu0 0.0
    %3554 = vmatprep.subr.mxu0 0.0
    %3555 = vmatpush1.msra.mxu0 0.0
    %3556 = vmatprep.subr.mxu0 0.0
    %3557 = vmatpush1.msra.mxu0 0.0
    %3558 = vmatprep.subr.mxu0 0.0
    %3559 = vmatpush1.msra.mxu0 0.0
    %3560 = vmatprep.subr.mxu0 0.0
    %3561 = vmatpush1.msra.mxu0 0.0
    %3562 = vmatprep.subr.mxu0 0.0
    %3563 = vmatpush1.msra.mxu0 0.0
    %3564 = vmatprep.subr.mxu0 0.0
    %3565 = vmatpush1.msra.mxu0 0.0
    %3566 = vmatprep.subr.mxu0 0.0
    %3567 = vmatpush1.msra.mxu0 0.0
    %3568 = vmatprep.subr.mxu0 0.0
    %3569 = vmatpush1.msra.mxu0 0.0
    %3570 = vmatprep.subr.mxu0 0.0
    %3571 = vmatpush1.msra.mxu0 0.0
    %3572 = vmatprep.subr.mxu0 0.0
    %3573 = vmatpush1.msra.mxu0 0.0
    %3574 = vmatprep.subr.mxu0 0.0
    %3575 = vmatpush1.msra.mxu0 0.0
    %3576 = vmatprep.subr.mxu0 0.0
    %3577 = vmatpush1.msra.mxu0 0.0
    %3578 = vmatprep.subr.mxu0 0.0
    %3579 = vmatpush1.msra.mxu0 0.0
    %3580 = vmatprep.subr.mxu0 0.0
    %3581 = vmatpush1.msra.mxu0 0.0
    %3582 = vmatprep.subr.mxu0 0.0
    %3583 = vmatpush1.msra.mxu0 0.0
    %3584 = vmatprep.subr.mxu0 0.0
    %3585 = vmatpush1.msra.mxu0 0.0
    %3586 = vmatprep.subr.mxu0 0.0
    %3587 = vmatpush1.msra.mxu0 0.0
    %3588 = vmatprep.subr.mxu0 0.0
    %3589 = vmatpush1.msra.mxu0 0.0
    %3590 = vmatprep.subr.mxu0 0.0
    %3591 = vmatpush1.msra.mxu0 0.0
    %3592 = vmatprep.subr.mxu0 0.0
    %3593 = vmatpush1.msra.mxu0 0.0
    %3594 = vmatprep.mubr.f32.mxu0 0.0
    %3595 = vmatmul.mubr.f32.gmra.mrb[0].mxu0 %v3519
    %v3596 = vpop.f32.mrb[0].mxu0
    %v3597 = vadd.f32 0.0, %v3596
    %v3598 = vpop.f32.mrb[0].mxu0
    %3599 = vmatprep.mubr.f32.mxu0 0.0
    %3600 = vmatmul.mubr.f32.gmra.mrb[0].mxu0 %v3522
    %v3601 = vpop.f32.mrb[0].mxu0
    %v3602 = vadd.f32 0.0, %v3601
    %v3603 = vpop.f32.mrb[0].mxu0
    %3604 = vmatprep.mubr.f32.mxu0 0.0
    %3605 = vmatmul.mubr.f32.gmra.mrb[0].mxu0 %v3525
    %v3606 = vpop.f32.mrb[0].mxu0
    %v3607 = vadd.f32 0.0, %v3606
    %v3608 = vpop.f32.mrb[0].mxu0
    %3609 = vmatprep.mubr.f32.mxu0 0.0
    %3610 = vmatmul.mubr.f32.gmra.mrb[0].mxu0 %v3528
    %v3611 = vpop.f32.mrb[0].mxu0
    %v3612 = vadd.f32 0.0, %v3611
    %v3613 = vpop.f32.mrb[0].mxu0
    %3614 = vdwg.mxu0
    %v3615 = vmax.f32 %v3597, %v3602
    %v3616 = vsub.f32 %v3597, %v3615
    %v3617 = vmul.f32 %v3616, 1.442695
    %v3618 = vpow.pop %v3617
    %v3619 = vsub.f32 %v3602, %v3615
    %v3620 = vmul.f32 %v3619, 1.442695
    %v3621 = vpow.pop %v3620
    %v3622 = vadd.f32 %v3618, %v3621
    %v3623 = vrcp.pop %v3622
    %v3624 = vmul.f32 %v3618, %v3623
    %v3625 = vmul.f32 %v3621, %v3623
    %v3626 = vmax.f32 %v3607, %v3612
    %v3627 = vsub.f32 %v3607, %v3626
    %v3628 = vmul.f32 %v3627, 1.442695
    %v3629 = vpow.pop %v3628
    %v3630 = vsub.f32 %v3612, %v3626
    %v3631 = vmul.f32 %v3630, 1.442695
    %v3632 = vpow.pop %v3631
    %v3633 = vadd.f32 %v3629, %v3632
    %v3634 = vrcp.pop %v3633
    %v3635 = vmul.f32 %v3629, %v3634
    %v3636 = vmul.f32 %v3632, %v3634
    %v3638 = vsel %vm434, %v3624, 0
    %v3641 = vsel %vm434, %v3625, 0
    %v3644 = vsel %vm434, %v3635, 0
    %v3647 = vsel %vm434, %v3636, 0
    %3649 = vmatprep.subr.mxu0 0.0
    %3650 = vmatpush1.msra.mxu0 %v449
    %3651 = vmatprep.subr.mxu0 0.0
    %3652 = vmatpush1.msra.mxu0 0.0
    %3653 = vmatprep.subr.mxu0 0.0
    %3654 = vmatpush1.msra.mxu0 0.0
    %3655 = vmatprep.subr.mxu0 0.0
    %3656 = vmatpush1.msra.mxu0 0.0
    %3657 = vmatprep.subr.mxu0 0.0
    %3658 = vmatpush1.msra.mxu0 0.0
    %3659 = vmatprep.subr.mxu0 0.0
    %3660 = vmatpush1.msra.mxu0 0.0
    %3661 = vmatprep.subr.mxu0 0.0
    %3662 = vmatpush1.msra.mxu0 0.0
    %3663 = vmatprep.subr.mxu0 0.0
    %3664 = vmatpush1.msra.mxu0 0.0
    %3665 = vmatprep.subr.mxu0 0.0
    %3666 = vmatpush1.msra.mxu0 0.0
    %3667 = vmatprep.subr.mxu0 0.0
    %3668 = vmatpush1.msra.mxu0 0.0
    %3669 = vmatprep.subr.mxu0 0.0
    %3670 = vmatpush1.msra.mxu0 0.0
    %3671 = vmatprep.subr.mxu0 0.0
    %3672 = vmatpush1.msra.mxu0 0.0
    %3673 = vmatprep.subr.mxu0 0.0
    %3674 = vmatpush1.msra.mxu0 0.0
    %3675 = vmatprep.subr.mxu0 0.0
    %3676 = vmatpush1.msra.mxu0 0.0
    %3677 = vmatprep.subr.mxu0 0.0
    %3678 = vmatpush1.msra.mxu0 0.0
    %3679 = vmatprep.subr.mxu0 0.0
    %3680 = vmatpush1.msra.mxu0 0.0
    %3681 = vmatprep.subr.mxu0 0.0
    %3682 = vmatpush1.msra.mxu0 0.0
    %3683 = vmatprep.subr.mxu0 0.0
    %3684 = vmatpush1.msra.mxu0 0.0
    %3685 = vmatprep.subr.mxu0 0.0
    %3686 = vmatpush1.msra.mxu0 0.0
    %3687 = vmatprep.subr.mxu0 0.0
    %3688 = vmatpush1.msra.mxu0 0.0
    %3689 = vmatprep.subr.mxu0 0.0
    %3690 = vmatpush1.msra.mxu0 0.0
    %3691 = vmatprep.subr.mxu0 0.0
    %3692 = vmatpush1.msra.mxu0 0.0
    %3693 = vmatprep.subr.mxu0 0.0
    %3694 = vmatpush1.msra.mxu0 0.0
    %3695 = vmatprep.subr.mxu0 0.0
    %3696 = vmatpush1.msra.mxu0 0.0
    %3697 = vmatprep.subr.mxu0 0.0
    %3698 = vmatpush1.msra.mxu0 0.0
    %3699 = vmatprep.subr.mxu0 0.0
    %3700 = vmatpush1.msra.mxu0 0.0
    %3701 = vmatprep.subr.mxu0 0.0
    %3702 = vmatpush1.msra.mxu0 0.0
    %3703 = vmatprep.subr.mxu0 0.0
    %3704 = vmatpush1.msra.mxu0 0.0
    %3705 = vmatprep.subr.mxu0 0.0
    %3706 = vmatpush1.msra.mxu0 0.0
    %3707 = vmatprep.subr.mxu0 0.0
    %3708 = vmatpush1.msra.mxu0 0.0
    %3709 = vmatprep.subr.mxu0 0.0
    %3710 = vmatpush1.msra.mxu0 0.0
    %3711 = vmatprep.subr.mxu0 0.0
    %3712 = vmatpush1.msra.mxu0 0.0
    %3713 = vmatprep.mubr.f32.mxu0 0.0
    %3714 = vmatmul.mubr.f32.gmra.mrb[0].mxu0 %v3638
    %v3715 = vpop.f32.mrb[0].mxu0
    %v3716 = vadd.f32 0.0, %v3715
    %v3717 = vpop.f32.mrb[0].mxu0
    %3718 = vmatprep.mubr.f32.mxu0 0.0
    %3719 = vmatmul.mubr.f32.gmra.mrb[0].mxu0 %v3641
    %v3720 = vpop.f32.mrb[0].mxu0
    %v3721 = vadd.f32 0.0, %v3720
    %v3722 = vpop.f32.mrb[0].mxu0
    %3723 = vmatprep.mubr.f32.mxu0 0.0
    %3724 = vmatmul.mubr.f32.gmra.mrb[0].mxu0 %v3644
    %v3725 = vpop.f32.mrb[0].mxu0
    %v3726 = vadd.f32 0.0, %v3725
    %v3727 = vpop.f32.mrb[0].mxu0
    %3728 = vmatprep.mubr.f32.mxu0 0.0
    %3729 = vmatmul.mubr.f32.gmra.mrb[0].mxu0 %v3647
    %v3730 = vpop.f32.mrb[0].mxu0
    %v3731 = vadd.f32 0.0, %v3730
    %v3732 = vpop.f32.mrb[0].mxu0
    %3733 = vdwg.mxu0
    %v3734 = vmul.f32 %v3716, %v3504
    %v3735 = vmul.f32 %v3721, %v3509
    %v3736 = vadd.f32 %v3734, %v3735
    %v3737 = vmul.f32 %v3726, %v3504
    %v3738 = vmul.f32 %v3731, %v3509
    %v3739 = vadd.f32 %v3737, %v3738
    %v3740 = vld [vmem:[#allocation5 + $0x4f8] sm:$0xff]
    %v3741 = vld [vmem:[#allocation5 + $0x500] sm:$0xff]
    %v3742 = vld [vmem:[#allocation5 + $0x508] sm:$0xff]
    %v3743 = vld [vmem:[#allocation5 + $0x510] sm:$0xff]
    %v3744 = vld [vmem:[#allocation5 + $0x518] sm:$0x1]
    %v3745 = vlaneseq
    %v3746 = vshrl.u32 %v3745, 7
    %v3747 = vsub.s32 0, %v3746
    %v3748 = vrot.slane %v3744, %v3747
    %v3750 = vsel %vm59, %v3736, 0
    %v3753 = vsel %vm59, %v3739, 0
    %3755 = vmatprep.subr.mxu0 0.0
    %3756 = vmatpush1.msra.mxu0 %v3740
    %3757 = vmatprep.subr.mxu0 0.0
    %3758 = vmatpush1.msra.mxu0 %v3741
    %3759 = vmatprep.subr.mxu0 0.0
    %3760 = vmatpush1.msra.mxu0 %v3742
    %3761 = vmatprep.subr.mxu0 0.0
    %3762 = vmatpush1.msra.mxu0 %v3743
    %3763 = vmatprep.subr.mxu0 0.0
    %3764 = vmatpush1.msra.mxu0 0.0
    %3765 = vmatprep.subr.mxu0 0.0
    %3766 = vmatpush1.msra.mxu0 0.0
    %3767 = vmatprep.subr.mxu0 0.0
    %3768 = vmatpush1.msra.mxu0 0.0
    %3769 = vmatprep.subr.mxu0 0.0
    %3770 = vmatpush1.msra.mxu0 0.0
    %3771 = vmatprep.subr.mxu0 0.0
    %3772 = vmatpush1.msra.mxu0 0.0
    %3773 = vmatprep.subr.mxu0 0.0
    %3774 = vmatpush1.msra.mxu0 0.0
    %3775 = vmatprep.subr.mxu0 0.0
    %3776 = vmatpush1.msra.mxu0 0.0
    %3777 = vmatprep.subr.mxu0 0.0
    %3778 = vmatpush1.msra.mxu0 0.0
    %3779 = vmatprep.subr.mxu0 0.0
    %3780 = vmatpush1.msra.mxu0 0.0
    %3781 = vmatprep.subr.mxu0 0.0
    %3782 = vmatpush1.msra.mxu0 0.0
    %3783 = vmatprep.subr.mxu0 0.0
    %3784 = vmatpush1.msra.mxu0 0.0
    %3785 = vmatprep.subr.mxu0 0.0
    %3786 = vmatpush1.msra.mxu0 0.0
    %3787 = vmatprep.subr.mxu0 0.0
    %3788 = vmatpush1.msra.mxu0 0.0
    %3789 = vmatprep.subr.mxu0 0.0
    %3790 = vmatpush1.msra.mxu0 0.0
    %3791 = vmatprep.subr.mxu0 0.0
    %3792 = vmatpush1.msra.mxu0 0.0
    %3793 = vmatprep.subr.mxu0 0.0
    %3794 = vmatpush1.msra.mxu0 0.0
    %3795 = vmatprep.subr.mxu0 0.0
    %3796 = vmatpush1.msra.mxu0 0.0
    %3797 = vmatprep.subr.mxu0 0.0
    %3798 = vmatpush1.msra.mxu0 0.0
    %3799 = vmatprep.subr.mxu0 0.0
    %3800 = vmatpush1.msra.mxu0 0.0
    %3801 = vmatprep.subr.mxu0 0.0
    %3802 = vmatpush1.msra.mxu0 0.0
    %3803 = vmatprep.subr.mxu0 0.0
    %3804 = vmatpush1.msra.mxu0 0.0
    %3805 = vmatprep.subr.mxu0 0.0
    %3806 = vmatpush1.msra.mxu0 0.0
    %3807 = vmatprep.subr.mxu0 0.0
    %3808 = vmatpush1.msra.mxu0 0.0
    %3809 = vmatprep.subr.mxu0 0.0
    %3810 = vmatpush1.msra.mxu0 0.0
    %3811 = vmatprep.subr.mxu0 0.0
    %3812 = vmatpush1.msra.mxu0 0.0
    %3813 = vmatprep.subr.mxu0 0.0
    %3814 = vmatpush1.msra.mxu0 0.0
    %3815 = vmatprep.subr.mxu0 0.0
    %3816 = vmatpush1.msra.mxu0 0.0
    %3817 = vmatprep.subr.mxu0 0.0
    %3818 = vmatpush1.msra.mxu0 0.0
    %3819 = vmatprep.mubr.f32.mxu0 0.0
    %3820 = vmatmul.mubr.f32.gmra.mrb[0].mxu0 %v3750
    %v3821 = vpop.f32.mrb[0].mxu0
    %v3822 = vadd.f32 %v3748, %v3821
    %v3823 = vpop.f32.mrb[0].mxu0
    %3824 = vmatprep.mubr.f32.mxu0 0.0
    %3825 = vmatmul.mubr.f32.gmra.mrb[0].mxu0 %v3753
    %v3826 = vpop.f32.mrb[0].mxu0
    %v3827 = vadd.f32 %v3748, %v3826
    %v3828 = vpop.f32.mrb[0].mxu0
    %3829 = vdwg.mxu0
    %v3830 = vadd.f32 %v3252, %v3822
    %v3831 = vadd.f32 %v3253, %v3827
    %v3832 = vld [vmem:[#allocation5 + $0x5c0] sm:$0x1]
    %v3833 = vld [vmem:[#allocation5 + $0x5c8] sm:$0x1]
    %v3834 = vsel %vm59, %v3830, 0.0
    %3835 = vadd.xlane.f32.xlu0 %v3834
    %v3836 = vpop.xlane.xlu0 %3835
    %v3837 = vsel %vm59, %v3831, 0.0
    %3838 = vadd.xlane.f32.xlu0 %v3837
    %v3839 = vpop.xlane.xlu0 %3838
    %v3840 = vmul.f32 %v3836, %v642
    %v3841 = vmul.f32 %v3839, %v642
    %v3842 = vsub.f32 %v3830, %v3840
    %v3843 = vsub.f32 %v3831, %v3841
    %v3844 = vmul.f32 %v3842, %v3842
    %v3845 = vmul.f32 %v3843, %v3843
    %v3846 = vsel %vm59, %v3844, 0.0
    %3847 = vadd.xlane.f32.xlu0 %v3846
    %v3848 = vpop.xlane.xlu0 %3847
    %v3849 = vsel %vm59, %v3845, 0.0
    %3850 = vadd.xlane.f32.xlu0 %v3849
    %v3851 = vpop.xlane.xlu0 %3850
    %v3852 = vmul.f32 %v3848, %v642
    %v3853 = vmul.f32 %v3851, %v642
    %v3854 = vadd.f32 %v3852, 1e-05
    %v3855 = vadd.f32 %v3853, 1e-05
    %v3856 = vrsqrt.pop %v3854
    %v3857 = vrsqrt.pop %v3855
    %v3858 = vmul.f32 %v3842, %v3856
    %v3859 = vmul.f32 %v3843, %v3857
    %v3860 = vlaneseq
    %v3861 = vshrl.u32 %v3860, 7
    %v3862 = vsub.s32 0, %v3861
    %v3863 = vrot.slane %v3832, %v3862
    %v3864 = vmul.f32 %v3858, %v3863
    %v3865 = vmul.f32 %v3859, %v3863
    %v3866 = vlaneseq
    %v3867 = vshrl.u32 %v3866, 7
    %v3868 = vsub.s32 0, %v3867
    %v3869 = vrot.slane %v3833, %v3868
    %v3870 = vadd.f32 %v3864, %v3869
    %v3871 = vadd.f32 %v3865, %v3869
    %v3872 = vld [vmem:[#allocation5 + $0x520] sm:$0xff]
    %v3873 = vld [vmem:[#allocation5 + $0x528] sm:$0xff]
    %v3874 = vld [vmem:[#allocation5 + $0x530] sm:$0xff]
    %v3875 = vld [vmem:[#allocation5 + $0x538] sm:$0xff]
    %v3876 = vld [vmem:[#allocation5 + $0x540] sm:$0x1]
    %v3877 = vlaneseq
    %v3878 = vshrl.u32 %v3877, 7
    %v3879 = vsub.s32 0, %v3878
    %v3880 = vrot.slane %v3876, %v3879
    %v3882 = vsel %vm59, %v3870, 0
    %v3885 = vsel %vm59, %v3871, 0
    %3887 = vmatprep.subr.mxu0 0.0
    %3888 = vmatpush1.msra.mxu0 %v3872
    %3889 = vmatprep.subr.mxu0 0.0
    %3890 = vmatpush1.msra.mxu0 %v3873
    %3891 = vmatprep.subr.mxu0 0.0
    %3892 = vmatpush1.msra.mxu0 %v3874
    %3893 = vmatprep.subr.mxu0 0.0
    %3894 = vmatpush1.msra.mxu0 %v3875
    %3895 = vmatprep.subr.mxu0 0.0
    %3896 = vmatpush1.msra.mxu0 0.0
    %3897 = vmatprep.subr.mxu0 0.0
    %3898 = vmatpush1.msra.mxu0 0.0
    %3899 = vmatprep.subr.mxu0 0.0
    %3900 = vmatpush1.msra.mxu0 0.0
    %3901 = vmatprep.subr.mxu0 0.0
    %3902 = vmatpush1.msra.mxu0 0.0
    %3903 = vmatprep.subr.mxu0 0.0
    %3904 = vmatpush1.msra.mxu0 0.0
    %3905 = vmatprep.subr.mxu0 0.0
    %3906 = vmatpush1.msra.mxu0 0.0
    %3907 = vmatprep.subr.mxu0 0.0
    %3908 = vmatpush1.msra.mxu0 0.0
    %3909 = vmatprep.subr.mxu0 0.0
    %3910 = vmatpush1.msra.mxu0 0.0
    %3911 = vmatprep.subr.mxu0 0.0
    %3912 = vmatpush1.msra.mxu0 0.0
    %3913 = vmatprep.subr.mxu0 0.0
    %3914 = vmatpush1.msra.mxu0 0.0
    %3915 = vmatprep.subr.mxu0 0.0
    %3916 = vmatpush1.msra.mxu0 0.0
    %3917 = vmatprep.subr.mxu0 0.0
    %3918 = vmatpush1.msra.mxu0 0.0
    %3919 = vmatprep.subr.mxu0 0.0
    %3920 = vmatpush1.msra.mxu0 0.0
    %3921 = vmatprep.subr.mxu0 0.0
    %3922 = vmatpush1.msra.mxu0 0.0
    %3923 = vmatprep.subr.mxu0 0.0
    %3924 = vmatpush1.msra.mxu0 0.0
    %3925 = vmatprep.subr.mxu0 0.0
    %3926 = vmatpush1.msra.mxu0 0.0
    %3927 = vmatprep.subr.mxu0 0.0
    %3928 = vmatpush1.msra.mxu0 0.0
    %3929 = vmatprep.subr.mxu0 0.0
    %3930 = vmatpush1.msra.mxu0 0.0
    %3931 = vmatprep.subr.mxu0 0.0
    %3932 = vmatpush1.msra.mxu0 0.0
    %3933 = vmatprep.subr.mxu0 0.0
    %3934 = vmatpush1.msra.mxu0 0.0
    %3935 = vmatprep.subr.mxu0 0.0
    %3936 = vmatpush1.msra.mxu0 0.0
    %3937 = vmatprep.subr.mxu0 0.0
    %3938 = vmatpush1.msra.mxu0 0.0
    %3939 = vmatprep.subr.mxu0 0.0
    %3940 = vmatpush1.msra.mxu0 0.0
    %3941 = vmatprep.subr.mxu0 0.0
    %3942 = vmatpush1.msra.mxu0 0.0
    %3943 = vmatprep.subr.mxu0 0.0
    %3944 = vmatpush1.msra.mxu0 0.0
    %3945 = vmatprep.subr.mxu0 0.0
    %3946 = vmatpush1.msra.mxu0 0.0
    %3947 = vmatprep.subr.mxu0 0.0
    %3948 = vmatpush1.msra.mxu0 0.0
    %3949 = vmatprep.subr.mxu0 0.0
    %3950 = vmatpush1.msra.mxu0 0.0
    %3951 = vmatprep.mubr.f32.mxu0 0.0
    %3952 = vmatmul.mubr.f32.gmra.mrb[0].mxu0 %v3882
    %v3953 = vpop.f32.mrb[0].mxu0
    %v3954 = vadd.f32 %v3880, %v3953
    %v3955 = vpop.f32.mrb[0].mxu0
    %3956 = vmatprep.mubr.f32.mxu0 0.0
    %3957 = vmatmul.mubr.f32.gmra.mrb[0].mxu0 %v3885
    %v3958 = vpop.f32.mrb[0].mxu0
    %v3959 = vadd.f32 %v3880, %v3958
    %v3960 = vpop.f32.mrb[0].mxu0
    %3961 = vdwg.mxu0
    %v3962 = vld [vmem:[#allocation5 + $0x548] sm:$0xff]
    %v3963 = vld [vmem:[#allocation5 + $0x550] sm:$0xff]
    %v3964 = vld [vmem:[#allocation5 + $0x558] sm:$0xff]
    %v3965 = vld [vmem:[#allocation5 + $0x560] sm:$0xff]
    %v3966 = vld [vmem:[#allocation5 + $0x568] sm:$0x1]
    %v3967 = vlaneseq
    %v3968 = vshrl.u32 %v3967, 7
    %v3969 = vsub.s32 0, %v3968
    %v3970 = vrot.slane %v3966, %v3969
    %3971 = vmatprep.subr.mxu0 0.0
    %3972 = vmatpush1.msra.mxu0 %v3962
    %3973 = vmatprep.subr.mxu0 0.0
    %3974 = vmatpush1.msra.mxu0 %v3963
    %3975 = vmatprep.subr.mxu0 0.0
    %3976 = vmatpush1.msra.mxu0 %v3964
    %3977 = vmatprep.subr.mxu0 0.0
    %3978 = vmatpush1.msra.mxu0 %v3965
    %3979 = vmatprep.subr.mxu0 0.0
    %3980 = vmatpush1.msra.mxu0 0.0
    %3981 = vmatprep.subr.mxu0 0.0
    %3982 = vmatpush1.msra.mxu0 0.0
    %3983 = vmatprep.subr.mxu0 0.0
    %3984 = vmatpush1.msra.mxu0 0.0
    %3985 = vmatprep.subr.mxu0 0.0
    %3986 = vmatpush1.msra.mxu0 0.0
    %3987 = vmatprep.subr.mxu0 0.0
    %3988 = vmatpush1.msra.mxu0 0.0
    %3989 = vmatprep.subr.mxu0 0.0
    %3990 = vmatpush1.msra.mxu0 0.0
    %3991 = vmatprep.subr.mxu0 0.0
    %3992 = vmatpush1.msra.mxu0 0.0
    %3993 = vmatprep.subr.mxu0 0.0
    %3994 = vmatpush1.msra.mxu0 0.0
    %3995 = vmatprep.subr.mxu0 0.0
    %3996 = vmatpush1.msra.mxu0 0.0
    %3997 = vmatprep.subr.mxu0 0.0
    %3998 = vmatpush1.msra.mxu0 0.0
    %3999 = vmatprep.subr.mxu0 0.0
    %4000 = vmatpush1.msra.mxu0 0.0
    %4001 = vmatprep.subr.mxu0 0.0
    %4002 = vmatpush1.msra.mxu0 0.0
    %4003 = vmatprep.subr.mxu0 0.0
    %4004 = vmatpush1.msra.mxu0 0.0
    %4005 = vmatprep.subr.mxu0 0.0
    %4006 = vmatpush1.msra.mxu0 0.0
    %4007 = vmatprep.subr.mxu0 0.0
    %4008 = vmatpush1.msra.mxu0 0.0
    %4009 = vmatprep.subr.mxu0 0.0
    %4010 = vmatpush1.msra.mxu0 0.0
    %4011 = vmatprep.subr.mxu0 0.0
    %4012 = vmatpush1.msra.mxu0 0.0
    %4013 = vmatprep.subr.mxu0 0.0
    %4014 = vmatpush1.msra.mxu0 0.0
    %4015 = vmatprep.subr.mxu0 0.0
    %4016 = vmatpush1.msra.mxu0 0.0
    %4017 = vmatprep.subr.mxu0 0.0
    %4018 = vmatpush1.msra.mxu0 0.0
    %4019 = vmatprep.subr.mxu0 0.0
    %4020 = vmatpush1.msra.mxu0 0.0
    %4021 = vmatprep.subr.mxu0 0.0
    %4022 = vmatpush1.msra.mxu0 0.0
    %4023 = vmatprep.subr.mxu0 0.0
    %4024 = vmatpush1.msra.mxu0 0.0
    %4025 = vmatprep.subr.mxu0 0.0
    %4026 = vmatpush1.msra.mxu0 0.0
    %4027 = vmatprep.subr.mxu0 0.0
    %4028 = vmatpush1.msra.mxu0 0.0
    %4029 = vmatprep.subr.mxu0 0.0
    %4030 = vmatpush1.msra.mxu0 0.0
    %4031 = vmatprep.subr.mxu0 0.0
    %4032 = vmatpush1.msra.mxu0 0.0
    %4033 = vmatprep.subr.mxu0 0.0
    %4034 = vmatpush1.msra.mxu0 0.0
    %4035 = vmatprep.mubr.f32.mxu0 0.0
    %4036 = vmatmul.mubr.f32.gmra.mrb[0].mxu0 %v2502
    %v4037 = vpop.f32.mrb[0].mxu0
    %v4038 = vadd.f32 %v3970, %v4037
    %v4039 = vpop.f32.mrb[0].mxu0
    %4040 = vmatprep.mubr.f32.mxu0 0.0
    %4041 = vmatmul.mubr.f32.gmra.mrb[0].mxu0 %v2505
    %v4042 = vpop.f32.mrb[0].mxu0
    %v4043 = vadd.f32 %v3970, %v4042
    %v4044 = vpop.f32.mrb[0].mxu0
    %4045 = vdwg.mxu0
    %v4046 = vld [vmem:[#allocation5 + $0x570] sm:$0xff]
    %v4047 = vld [vmem:[#allocation5 + $0x578] sm:$0xff]
    %v4048 = vld [vmem:[#allocation5 + $0x580] sm:$0xff]
    %v4049 = vld [vmem:[#allocation5 + $0x588] sm:$0xff]
    %v4050 = vld [vmem:[#allocation5 + $0x590] sm:$0x1]
    %v4051 = vlaneseq
    %v4052 = vshrl.u32 %v4051, 7
    %v4053 = vsub.s32 0, %v4052
    %v4054 = vrot.slane %v4050, %v4053
    %4055 = vmatprep.subr.mxu0 0.0
    %4056 = vmatpush1.msra.mxu0 %v4046
    %4057 = vmatprep.subr.mxu0 0.0
    %4058 = vmatpush1.msra.mxu0 %v4047
    %4059 = vmatprep.subr.mxu0 0.0
    %4060 = vmatpush1.msra.mxu0 %v4048
    %4061 = vmatprep.subr.mxu0 0.0
    %4062 = vmatpush1.msra.mxu0 %v4049
    %4063 = vmatprep.subr.mxu0 0.0
    %4064 = vmatpush1.msra.mxu0 0.0
    %4065 = vmatprep.subr.mxu0 0.0
    %4066 = vmatpush1.msra.mxu0 0.0
    %4067 = vmatprep.subr.mxu0 0.0
    %4068 = vmatpush1.msra.mxu0 0.0
    %4069 = vmatprep.subr.mxu0 0.0
    %4070 = vmatpush1.msra.mxu0 0.0
    %4071 = vmatprep.subr.mxu0 0.0
    %4072 = vmatpush1.msra.mxu0 0.0
    %4073 = vmatprep.subr.mxu0 0.0
    %4074 = vmatpush1.msra.mxu0 0.0
    %4075 = vmatprep.subr.mxu0 0.0
    %4076 = vmatpush1.msra.mxu0 0.0
    %4077 = vmatprep.subr.mxu0 0.0
    %4078 = vmatpush1.msra.mxu0 0.0
    %4079 = vmatprep.subr.mxu0 0.0
    %4080 = vmatpush1.msra.mxu0 0.0
    %4081 = vmatprep.subr.mxu0 0.0
    %4082 = vmatpush1.msra.mxu0 0.0
    %4083 = vmatprep.subr.mxu0 0.0
    %4084 = vmatpush1.msra.mxu0 0.0
    %4085 = vmatprep.subr.mxu0 0.0
    %4086 = vmatpush1.msra.mxu0 0.0
    %4087 = vmatprep.subr.mxu0 0.0
    %4088 = vmatpush1.msra.mxu0 0.0
    %4089 = vmatprep.subr.mxu0 0.0
    %4090 = vmatpush1.msra.mxu0 0.0
    %4091 = vmatprep.subr.mxu0 0.0
    %4092 = vmatpush1.msra.mxu0 0.0
    %4093 = vmatprep.subr.mxu0 0.0
    %4094 = vmatpush1.msra.mxu0 0.0
    %4095 = vmatprep.subr.mxu0 0.0
    %4096 = vmatpush1.msra.mxu0 0.0
    %4097 = vmatprep.subr.mxu0 0.0
    %4098 = vmatpush1.msra.mxu0 0.0
    %4099 = vmatprep.subr.mxu0 0.0
    %4100 = vmatpush1.msra.mxu0 0.0
    %4101 = vmatprep.subr.mxu0 0.0
    %4102 = vmatpush1.msra.mxu0 0.0
    %4103 = vmatprep.subr.mxu0 0.0
    %4104 = vmatpush1.msra.mxu0 0.0
    %4105 = vmatprep.subr.mxu0 0.0
    %4106 = vmatpush1.msra.mxu0 0.0
    %4107 = vmatprep.subr.mxu0 0.0
    %4108 = vmatpush1.msra.mxu0 0.0
    %4109 = vmatprep.subr.mxu0 0.0
    %4110 = vmatpush1.msra.mxu0 0.0
    %4111 = vmatprep.subr.mxu0 0.0
    %4112 = vmatpush1.msra.mxu0 0.0
    %4113 = vmatprep.subr.mxu0 0.0
    %4114 = vmatpush1.msra.mxu0 0.0
    %4115 = vmatprep.subr.mxu0 0.0
    %4116 = vmatpush1.msra.mxu0 0.0
    %4117 = vmatprep.subr.mxu0 0.0
    %4118 = vmatpush1.msra.mxu0 0.0
    %4119 = vmatprep.mubr.f32.mxu0 0.0
    %4120 = vmatmul.mubr.f32.gmra.mrb[0].mxu0 %v2502
    %v4121 = vpop.f32.mrb[0].mxu0
    %v4122 = vadd.f32 %v4054, %v4121
    %v4123 = vpop.f32.mrb[0].mxu0
    %4124 = vmatprep.mubr.f32.mxu0 0.0
    %4125 = vmatmul.mubr.f32.gmra.mrb[0].mxu0 %v2505
    %v4126 = vpop.f32.mrb[0].mxu0
    %v4127 = vadd.f32 %v4054, %v4126
    %v4128 = vpop.f32.mrb[0].mxu0
    %4129 = vdwg.mxu0
    %v4130 = vmul.f32 %v3954, 0.35355338
    %v4131 = vmul.f32 %v3959, 0.35355338
    %v4132 = vmul.f32 %v4130, %v4038
    %v4133 = vmul.f32 %v4130, %v4043
    %v4134 = vmul.f32 %v4131, %v4038
    %v4135 = vmul.f32 %v4131, %v4043
    %v4137 = vsel %vm59, %v4132, 0
    %v4140 = vsel %vm59, %v4133, 0
    %v4143 = vsel %vm59, %v4134, 0
    %v4146 = vsel %vm59, %v4135, 0
    %4148 = vmatprep.subr.mxu0 0.0
    %4149 = vmatpush1.msra.mxu0 %v40
    %4150 = vmatprep.subr.mxu0 0.0
    %4151 = vmatpush1.msra.mxu0 %v41
    %4152 = vmatprep.subr.mxu0 0.0
    %4153 = vmatpush1.msra.mxu0 %v42
    %4154 = vmatprep.subr.mxu0 0.0
    %4155 = vmatpush1.msra.mxu0 %v43
    %4156 = vmatprep.subr.mxu0 0.0
    %4157 = vmatpush1.msra.mxu0 0.0
    %4158 = vmatprep.subr.mxu0 0.0
    %4159 = vmatpush1.msra.mxu0 0.0
    %4160 = vmatprep.subr.mxu0 0.0
    %4161 = vmatpush1.msra.mxu0 0.0
    %4162 = vmatprep.subr.mxu0 0.0
    %4163 = vmatpush1.msra.mxu0 0.0
    %4164 = vmatprep.subr.mxu0 0.0
    %4165 = vmatpush1.msra.mxu0 0.0
    %4166 = vmatprep.subr.mxu0 0.0
    %4167 = vmatpush1.msra.mxu0 0.0
    %4168 = vmatprep.subr.mxu0 0.0
    %4169 = vmatpush1.msra.mxu0 0.0
    %4170 = vmatprep.subr.mxu0 0.0
    %4171 = vmatpush1.msra.mxu0 0.0
    %4172 = vmatprep.subr.mxu0 0.0
    %4173 = vmatpush1.msra.mxu0 0.0
    %4174 = vmatprep.subr.mxu0 0.0
    %4175 = vmatpush1.msra.mxu0 0.0
    %4176 = vmatprep.subr.mxu0 0.0
    %4177 = vmatpush1.msra.mxu0 0.0
    %4178 = vmatprep.subr.mxu0 0.0
    %4179 = vmatpush1.msra.mxu0 0.0
    %4180 = vmatprep.subr.mxu0 0.0
    %4181 = vmatpush1.msra.mxu0 0.0
    %4182 = vmatprep.subr.mxu0 0.0
    %4183 = vmatpush1.msra.mxu0 0.0
    %4184 = vmatprep.subr.mxu0 0.0
    %4185 = vmatpush1.msra.mxu0 0.0
    %4186 = vmatprep.subr.mxu0 0.0
    %4187 = vmatpush1.msra.mxu0 0.0
    %4188 = vmatprep.subr.mxu0 0.0
    %4189 = vmatpush1.msra.mxu0 0.0
    %4190 = vmatprep.subr.mxu0 0.0
    %4191 = vmatpush1.msra.mxu0 0.0
    %4192 = vmatprep.subr.mxu0 0.0
    %4193 = vmatpush1.msra.mxu0 0.0
    %4194 = vmatprep.subr.mxu0 0.0
    %4195 = vmatpush1.msra.mxu0 0.0
    %4196 = vmatprep.subr.mxu0 0.0
    %4197 = vmatpush1.msra.mxu0 0.0
    %4198 = vmatprep.subr.mxu0 0.0
    %4199 = vmatpush1.msra.mxu0 0.0
    %4200 = vmatprep.subr.mxu0 0.0
    %4201 = vmatpush1.msra.mxu0 0.0
    %4202 = vmatprep.subr.mxu0 0.0
    %4203 = vmatpush1.msra.mxu0 0.0
    %4204 = vmatprep.subr.mxu0 0.0
    %4205 = vmatpush1.msra.mxu0 0.0
    %4206 = vmatprep.subr.mxu0 0.0
    %4207 = vmatpush1.msra.mxu0 0.0
    %4208 = vmatprep.subr.mxu0 0.0
    %4209 = vmatpush1.msra.mxu0 0.0
    %4210 = vmatprep.subr.mxu0 0.0
    %4211 = vmatpush1.msra.mxu0 0.0
    %4212 = vmatprep.mubr.f32.mxu0 0.0
    %4213 = vmatmul.mubr.f32.gmra.mrb[0].mxu0 %v4137
    %v4214 = vpop.f32.mrb[0].mxu0
    %v4215 = vadd.f32 0.0, %v4214
    %v4216 = vpop.f32.mrb[0].mxu0
    %4217 = vmatprep.mubr.f32.mxu0 0.0
    %4218 = vmatmul.mubr.f32.gmra.mrb[0].mxu0 %v4140
    %v4219 = vpop.f32.mrb[0].mxu0
    %v4220 = vadd.f32 0.0, %v4219
    %v4221 = vpop.f32.mrb[0].mxu0
    %4222 = vmatprep.mubr.f32.mxu0 0.0
    %4223 = vmatmul.mubr.f32.gmra.mrb[0].mxu0 %v4143
    %v4224 = vpop.f32.mrb[0].mxu0
    %v4225 = vadd.f32 0.0, %v4224
    %v4226 = vpop.f32.mrb[0].mxu0
    %4227 = vmatprep.mubr.f32.mxu0 0.0
    %4228 = vmatmul.mubr.f32.gmra.mrb[0].mxu0 %v4146
    %v4229 = vpop.f32.mrb[0].mxu0
    %v4230 = vadd.f32 0.0, %v4229
    %v4231 = vpop.f32.mrb[0].mxu0
    %4232 = vdwg.mxu0
    %v4233 = vmax.f32 %v4215, %v4220
    %v4234 = vsub.f32 %v4215, %v4233
    %v4235 = vmul.f32 %v4234, 1.442695
    %v4236 = vpow.pop %v4235
    %v4237 = vsub.f32 %v4220, %v4233
    %v4238 = vmul.f32 %v4237, 1.442695
    %v4239 = vpow.pop %v4238
    %v4240 = vadd.f32 %v4236, %v4239
    %v4241 = vrcp.pop %v4240
    %v4242 = vmul.f32 %v4236, %v4241
    %v4243 = vmul.f32 %v4239, %v4241
    %v4244 = vmax.f32 %v4225, %v4230
    %v4245 = vsub.f32 %v4225, %v4244
    %v4246 = vmul.f32 %v4245, 1.442695
    %v4247 = vpow.pop %v4246
    %v4248 = vsub.f32 %v4230, %v4244
    %v4249 = vmul.f32 %v4248, 1.442695
    %v4250 = vpow.pop %v4249
    %v4251 = vadd.f32 %v4247, %v4250
    %v4252 = vrcp.pop %v4251
    %v4253 = vmul.f32 %v4247, %v4252
    %v4254 = vmul.f32 %v4250, %v4252
    %v4256 = vsel %vm434, %v4242, 0
    %v4259 = vsel %vm434, %v4243, 0
    %v4262 = vsel %vm434, %v4253, 0
    %v4265 = vsel %vm434, %v4254, 0
    %4267 = vmatprep.subr.mxu0 0.0
    %4268 = vmatpush1.msra.mxu0 %v449
    %4269 = vmatprep.subr.mxu0 0.0
    %4270 = vmatpush1.msra.mxu0 0.0
    %4271 = vmatprep.subr.mxu0 0.0
    %4272 = vmatpush1.msra.mxu0 0.0
    %4273 = vmatprep.subr.mxu0 0.0
    %4274 = vmatpush1.msra.mxu0 0.0
    %4275 = vmatprep.subr.mxu0 0.0
    %4276 = vmatpush1.msra.mxu0 0.0
    %4277 = vmatprep.subr.mxu0 0.0
    %4278 = vmatpush1.msra.mxu0 0.0
    %4279 = vmatprep.subr.mxu0 0.0
    %4280 = vmatpush1.msra.mxu0 0.0
    %4281 = vmatprep.subr.mxu0 0.0
    %4282 = vmatpush1.msra.mxu0 0.0
    %4283 = vmatprep.subr.mxu0 0.0
    %4284 = vmatpush1.msra.mxu0 0.0
    %4285 = vmatprep.subr.mxu0 0.0
    %4286 = vmatpush1.msra.mxu0 0.0
    %4287 = vmatprep.subr.mxu0 0.0
    %4288 = vmatpush1.msra.mxu0 0.0
    %4289 = vmatprep.subr.mxu0 0.0
    %4290 = vmatpush1.msra.mxu0 0.0
    %4291 = vmatprep.subr.mxu0 0.0
    %4292 = vmatpush1.msra.mxu0 0.0
    %4293 = vmatprep.subr.mxu0 0.0
    %4294 = vmatpush1.msra.mxu0 0.0
    %4295 = vmatprep.subr.mxu0 0.0
    %4296 = vmatpush1.msra.mxu0 0.0
    %4297 = vmatprep.subr.mxu0 0.0
    %4298 = vmatpush1.msra.mxu0 0.0
    %4299 = vmatprep.subr.mxu0 0.0
    %4300 = vmatpush1.msra.mxu0 0.0
    %4301 = vmatprep.subr.mxu0 0.0
    %4302 = vmatpush1.msra.mxu0 0.0
    %4303 = vmatprep.subr.mxu0 0.0
    %4304 = vmatpush1.msra.mxu0 0.0
    %4305 = vmatprep.subr.mxu0 0.0
    %4306 = vmatpush1.msra.mxu0 0.0
    %4307 = vmatprep.subr.mxu0 0.0
    %4308 = vmatpush1.msra.mxu0 0.0
    %4309 = vmatprep.subr.mxu0 0.0
    %4310 = vmatpush1.msra.mxu0 0.0
    %4311 = vmatprep.subr.mxu0 0.0
    %4312 = vmatpush1.msra.mxu0 0.0
    %4313 = vmatprep.subr.mxu0 0.0
    %4314 = vmatpush1.msra.mxu0 0.0
    %4315 = vmatprep.subr.mxu0 0.0
    %4316 = vmatpush1.msra.mxu0 0.0
    %4317 = vmatprep.subr.mxu0 0.0
    %4318 = vmatpush1.msra.mxu0 0.0
    %4319 = vmatprep.subr.mxu0 0.0
    %4320 = vmatpush1.msra.mxu0 0.0
    %4321 = vmatprep.subr.mxu0 0.0
    %4322 = vmatpush1.msra.mxu0 0.0
    %4323 = vmatprep.subr.mxu0 0.0
    %4324 = vmatpush1.msra.mxu0 0.0
    %4325 = vmatprep.subr.mxu0 0.0
    %4326 = vmatpush1.msra.mxu0 0.0
    %4327 = vmatprep.subr.mxu0 0.0
    %4328 = vmatpush1.msra.mxu0 0.0
    %4329 = vmatprep.subr.mxu0 0.0
    %4330 = vmatpush1.msra.mxu0 0.0
    %4331 = vmatprep.mubr.f32.mxu0 0.0
    %4332 = vmatmul.mubr.f32.gmra.mrb[0].mxu0 %v4256
    %v4333 = vpop.f32.mrb[0].mxu0
    %v4334 = vadd.f32 0.0, %v4333
    %v4335 = vpop.f32.mrb[0].mxu0
    %4336 = vmatprep.mubr.f32.mxu0 0.0
    %4337 = vmatmul.mubr.f32.gmra.mrb[0].mxu0 %v4259
    %v4338 = vpop.f32.mrb[0].mxu0
    %v4339 = vadd.f32 0.0, %v4338
    %v4340 = vpop.f32.mrb[0].mxu0
    %4341 = vmatprep.mubr.f32.mxu0 0.0
    %4342 = vmatmul.mubr.f32.gmra.mrb[0].mxu0 %v4262
    %v4343 = vpop.f32.mrb[0].mxu0
    %v4344 = vadd.f32 0.0, %v4343
    %v4345 = vpop.f32.mrb[0].mxu0
    %4346 = vmatprep.mubr.f32.mxu0 0.0
    %4347 = vmatmul.mubr.f32.gmra.mrb[0].mxu0 %v4265
    %v4348 = vpop.f32.mrb[0].mxu0
    %v4349 = vadd.f32 0.0, %v4348
    %v4350 = vpop.f32.mrb[0].mxu0
    %4351 = vdwg.mxu0
    %v4352 = vmul.f32 %v4334, %v4122
    %v4353 = vmul.f32 %v4339, %v4127
    %v4354 = vadd.f32 %v4352, %v4353
    %v4355 = vmul.f32 %v4344, %v4122
    %v4356 = vmul.f32 %v4349, %v4127
    %v4357 = vadd.f32 %v4355, %v4356
    %v4358 = vld [vmem:[#allocation5 + $0x598] sm:$0xff]
    %v4359 = vld [vmem:[#allocation5 + $0x5a0] sm:$0xff]
    %v4360 = vld [vmem:[#allocation5 + $0x5a8] sm:$0xff]
    %v4361 = vld [vmem:[#allocation5 + $0x5b0] sm:$0xff]
    %v4362 = vld [vmem:[#allocation5 + $0x5b8] sm:$0x1]
    %v4363 = vlaneseq
    %v4364 = vshrl.u32 %v4363, 7
    %v4365 = vsub.s32 0, %v4364
    %v4366 = vrot.slane %v4362, %v4365
    %v4368 = vsel %vm59, %v4354, 0
    %v4371 = vsel %vm59, %v4357, 0
    %4373 = vmatprep.subr.mxu0 0.0
    %4374 = vmatpush1.msra.mxu0 %v4358
    %4375 = vmatprep.subr.mxu0 0.0
    %4376 = vmatpush1.msra.mxu0 %v4359
    %4377 = vmatprep.subr.mxu0 0.0
    %4378 = vmatpush1.msra.mxu0 %v4360
    %4379 = vmatprep.subr.mxu0 0.0
    %4380 = vmatpush1.msra.mxu0 %v4361
    %4381 = vmatprep.subr.mxu0 0.0
    %4382 = vmatpush1.msra.mxu0 0.0
    %4383 = vmatprep.subr.mxu0 0.0
    %4384 = vmatpush1.msra.mxu0 0.0
    %4385 = vmatprep.subr.mxu0 0.0
    %4386 = vmatpush1.msra.mxu0 0.0
    %4387 = vmatprep.subr.mxu0 0.0
    %4388 = vmatpush1.msra.mxu0 0.0
    %4389 = vmatprep.subr.mxu0 0.0
    %4390 = vmatpush1.msra.mxu0 0.0
    %4391 = vmatprep.subr.mxu0 0.0
    %4392 = vmatpush1.msra.mxu0 0.0
    %4393 = vmatprep.subr.mxu0 0.0
    %4394 = vmatpush1.msra.mxu0 0.0
    %4395 = vmatprep.subr.mxu0 0.0
    %4396 = vmatpush1.msra.mxu0 0.0
    %4397 = vmatprep.subr.mxu0 0.0
    %4398 = vmatpush1.msra.mxu0 0.0
    %4399 = vmatprep.subr.mxu0 0.0
    %4400 = vmatpush1.msra.mxu0 0.0
    %4401 = vmatprep.subr.mxu0 0.0
    %4402 = vmatpush1.msra.mxu0 0.0
    %4403 = vmatprep.subr.mxu0 0.0
    %4404 = vmatpush1.msra.mxu0 0.0
    %4405 = vmatprep.subr.mxu0 0.0
    %4406 = vmatpush1.msra.mxu0 0.0
    %4407 = vmatprep.subr.mxu0 0.0
    %4408 = vmatpush1.msra.mxu0 0.0
    %4409 = vmatprep.subr.mxu0 0.0
    %4410 = vmatpush1.msra.mxu0 0.0
    %4411 = vmatprep.subr.mxu0 0.0
    %4412 = vmatpush1.msra.mxu0 0.0
    %4413 = vmatprep.subr.mxu0 0.0
    %4414 = vmatpush1.msra.mxu0 0.0
    %4415 = vmatprep.subr.mxu0 0.0
    %4416 = vmatpush1.msra.mxu0 0.0
    %4417 = vmatprep.subr.mxu0 0.0
    %4418 = vmatpush1.msra.mxu0 0.0
    %4419 = vmatprep.subr.mxu0 0.0
    %4420 = vmatpush1.msra.mxu0 0.0
    %4421 = vmatprep.subr.mxu0 0.0
    %4422 = vmatpush1.msra.mxu0 0.0
    %4423 = vmatprep.subr.mxu0 0.0
    %4424 = vmatpush1.msra.mxu0 0.0
    %4425 = vmatprep.subr.mxu0 0.0
    %4426 = vmatpush1.msra.mxu0 0.0
    %4427 = vmatprep.subr.mxu0 0.0
    %4428 = vmatpush1.msra.mxu0 0.0
    %4429 = vmatprep.subr.mxu0 0.0
    %4430 = vmatpush1.msra.mxu0 0.0
    %4431 = vmatprep.subr.mxu0 0.0
    %4432 = vmatpush1.msra.mxu0 0.0
    %4433 = vmatprep.subr.mxu0 0.0
    %4434 = vmatpush1.msra.mxu0 0.0
    %4435 = vmatprep.subr.mxu0 0.0
    %4436 = vmatpush1.msra.mxu0 0.0
    %4437 = vmatprep.mubr.f32.mxu0 0.0
    %4438 = vmatmul.mubr.f32.gmra.mrb[0].mxu0 %v4368
    %v4439 = vpop.f32.mrb[0].mxu0
    %v4440 = vadd.f32 %v4366, %v4439
    %v4441 = vpop.f32.mrb[0].mxu0
    %4442 = vmatprep.mubr.f32.mxu0 0.0
    %4443 = vmatmul.mubr.f32.gmra.mrb[0].mxu0 %v4371
    %v4444 = vpop.f32.mrb[0].mxu0
    %v4445 = vadd.f32 %v4366, %v4444
    %v4446 = vpop.f32.mrb[0].mxu0
    %4447 = vdwg.mxu0
    %v4448 = vadd.f32 %v3870, %v4440
    %v4449 = vadd.f32 %v3871, %v4445
    %v4450 = vld [vmem:[#allocation5 + $0x5d0] sm:$0x1]
    %v4451 = vld [vmem:[#allocation5 + $0x5d8] sm:$0x1]
    %v4452 = vsel %vm59, %v4448, 0.0
    %4453 = vadd.xlane.f32.xlu0 %v4452
    %v4454 = vpop.xlane.xlu0 %4453
    %v4455 = vsel %vm59, %v4449, 0.0
    %4456 = vadd.xlane.f32.xlu0 %v4455
    %v4457 = vpop.xlane.xlu0 %4456
    %v4458 = vmul.f32 %v4454, %v642
    %v4459 = vmul.f32 %v4457, %v642
    %v4460 = vsub.f32 %v4448, %v4458
    %v4461 = vsub.f32 %v4449, %v4459
    %v4462 = vmul.f32 %v4460, %v4460
    %v4463 = vmul.f32 %v4461, %v4461
    %v4464 = vsel %vm59, %v4462, 0.0
    %4465 = vadd.xlane.f32.xlu0 %v4464
    %v4466 = vpop.xlane.xlu0 %4465
    %v4467 = vsel %vm59, %v4463, 0.0
    %4468 = vadd.xlane.f32.xlu0 %v4467
    %v4469 = vpop.xlane.xlu0 %4468
    %v4470 = vmul.f32 %v4466, %v642
    %v4471 = vmul.f32 %v4469, %v642
    %v4472 = vadd.f32 %v4470, 1e-05
    %v4473 = vadd.f32 %v4471, 1e-05
    %v4474 = vrsqrt.pop %v4472
    %v4475 = vrsqrt.pop %v4473
    %v4476 = vmul.f32 %v4460, %v4474
    %v4477 = vmul.f32 %v4461, %v4475
    %v4478 = vlaneseq
    %v4479 = vshrl.u32 %v4478, 7
    %v4480 = vsub.s32 0, %v4479
    %v4481 = vrot.slane %v4450, %v4480
    %v4482 = vmul.f32 %v4476, %v4481
    %v4483 = vmul.f32 %v4477, %v4481
    %v4484 = vlaneseq
    %v4485 = vshrl.u32 %v4484, 7
    %v4486 = vsub.s32 0, %v4485
    %v4487 = vrot.slane %v4451, %v4486
    %v4488 = vadd.f32 %v4482, %v4487
    %v4489 = vadd.f32 %v4483, %v4487
    %v4490 = vld [vmem:[#allocation5 + $0x5f0] sm:$0xff]
    %v4491 = vld [vmem:[#allocation5 + $0x5f8] sm:$0xff]
    %v4492 = vld [vmem:[#allocation5 + $0x600] sm:$0xff]
    %v4493 = vld [vmem:[#allocation5 + $0x608] sm:$0xff]
    %v4494 = vld [vmem:[#allocation5 + $0x610] sm:$0x1]
    %v4495 = vlaneseq
    %v4496 = vshrl.u32 %v4495, 7
    %v4497 = vsub.s32 0, %v4496
    %v4498 = vrot.slane %v4494, %v4497
    %v4500 = vsel %vm59, %v4488, 0
    %v4503 = vsel %vm59, %v4489, 0
    %4505 = vmatprep.subr.mxu0 0.0
    %4506 = vmatpush1.msra.mxu0 %v4490
    %4507 = vmatprep.subr.mxu0 0.0
    %4508 = vmatpush1.msra.mxu0 %v4491
    %4509 = vmatprep.subr.mxu0 0.0
    %4510 = vmatpush1.msra.mxu0 %v4492
    %4511 = vmatprep.subr.mxu0 0.0
    %4512 = vmatpush1.msra.mxu0 %v4493
    %4513 = vmatprep.subr.mxu0 0.0
    %4514 = vmatpush1.msra.mxu0 0.0
    %4515 = vmatprep.subr.mxu0 0.0
    %4516 = vmatpush1.msra.mxu0 0.0
    %4517 = vmatprep.subr.mxu0 0.0
    %4518 = vmatpush1.msra.mxu0 0.0
    %4519 = vmatprep.subr.mxu0 0.0
    %4520 = vmatpush1.msra.mxu0 0.0
    %4521 = vmatprep.subr.mxu0 0.0
    %4522 = vmatpush1.msra.mxu0 0.0
    %4523 = vmatprep.subr.mxu0 0.0
    %4524 = vmatpush1.msra.mxu0 0.0
    %4525 = vmatprep.subr.mxu0 0.0
    %4526 = vmatpush1.msra.mxu0 0.0
    %4527 = vmatprep.subr.mxu0 0.0
    %4528 = vmatpush1.msra.mxu0 0.0
    %4529 = vmatprep.subr.mxu0 0.0
    %4530 = vmatpush1.msra.mxu0 0.0
    %4531 = vmatprep.subr.mxu0 0.0
    %4532 = vmatpush1.msra.mxu0 0.0
    %4533 = vmatprep.subr.mxu0 0.0
    %4534 = vmatpush1.msra.mxu0 0.0
    %4535 = vmatprep.subr.mxu0 0.0
    %4536 = vmatpush1.msra.mxu0 0.0
    %4537 = vmatprep.subr.mxu0 0.0
    %4538 = vmatpush1.msra.mxu0 0.0
    %4539 = vmatprep.subr.mxu0 0.0
    %4540 = vmatpush1.msra.mxu0 0.0
    %4541 = vmatprep.subr.mxu0 0.0
    %4542 = vmatpush1.msra.mxu0 0.0
    %4543 = vmatprep.subr.mxu0 0.0
    %4544 = vmatpush1.msra.mxu0 0.0
    %4545 = vmatprep.subr.mxu0 0.0
    %4546 = vmatpush1.msra.mxu0 0.0
    %4547 = vmatprep.subr.mxu0 0.0
    %4548 = vmatpush1.msra.mxu0 0.0
    %4549 = vmatprep.subr.mxu0 0.0
    %4550 = vmatpush1.msra.mxu0 0.0
    %4551 = vmatprep.subr.mxu0 0.0
    %4552 = vmatpush1.msra.mxu0 0.0
    %4553 = vmatprep.subr.mxu0 0.0
    %4554 = vmatpush1.msra.mxu0 0.0
    %4555 = vmatprep.subr.mxu0 0.0
    %4556 = vmatpush1.msra.mxu0 0.0
    %4557 = vmatprep.subr.mxu0 0.0
    %4558 = vmatpush1.msra.mxu0 0.0
    %4559 = vmatprep.subr.mxu0 0.0
    %4560 = vmatpush1.msra.mxu0 0.0
    %4561 = vmatprep.subr.mxu0 0.0
    %4562 = vmatpush1.msra.mxu0 0.0
    %4563 = vmatprep.subr.mxu0 0.0
    %4564 = vmatpush1.msra.mxu0 0.0
    %4565 = vmatprep.subr.mxu0 0.0
    %4566 = vmatpush1.msra.mxu0 0.0
    %4567 = vmatprep.subr.mxu0 0.0
    %4568 = vmatpush1.msra.mxu0 0.0
    %4569 = vmatprep.mubr.f32.mxu0 0.0
    %4570 = vmatmul.mubr.f32.gmra.mrb[0].mxu0 %v4500
    %v4571 = vpop.f32.mrb[0].mxu0
    %v4572 = vadd.f32 %v4498, %v4571
    %v4573 = vpop.f32.mrb[0].mxu0
    %4574 = vmatprep.mubr.f32.mxu0 0.0
    %4575 = vmatmul.mubr.f32.gmra.mrb[0].mxu0 %v4503
    %v4576 = vpop.f32.mrb[0].mxu0
    %v4577 = vadd.f32 %v4498, %v4576
    %v4578 = vpop.f32.mrb[0].mxu0
    %4579 = vdwg.mxu0
    %v4580 = vmax.f32 %v4572, 0.0
    %v4581 = vmax.f32 %v4577, 0.0
    %v4582 = vld [vmem:[#allocation5 + $0x618] sm:$0xff]
    %v4583 = vld [vmem:[#allocation5 + $0x620] sm:$0xff]
    %v4584 = vld [vmem:[#allocation5 + $0x628] sm:$0xff]
    %v4585 = vld [vmem:[#allocation5 + $0x630] sm:$0xff]
    %v4586 = vld [vmem:[#allocation5 + $0x638] sm:$0xff]
    %v4587 = vld [vmem:[#allocation5 + $0x640] sm:$0xff]
    %v4588 = vld [vmem:[#allocation5 + $0x648] sm:$0xff]
    %v4589 = vld [vmem:[#allocation5 + $0x650] sm:$0xff]
    %v4590 = vld [vmem:[#allocation5 + $0x658] sm:$0x1]
    %v4591 = vlaneseq
    %v4592 = vshrl.u32 %v4591, 7
    %v4593 = vsub.s32 0, %v4592
    %v4594 = vrot.slane %v4590, %v4593
    %v4596 = vsel %vm780, %v4580, 0
    %v4599 = vsel %vm780, %v4581, 0
    %4601 = vmatprep.subr.mxu0 0.0
    %4602 = vmatpush1.msra.mxu0 %v4582
    %4603 = vmatprep.subr.mxu0 0.0
    %4604 = vmatpush1.msra.mxu0 %v4583
    %4605 = vmatprep.subr.mxu0 0.0
    %4606 = vmatpush1.msra.mxu0 %v4584
    %4607 = vmatprep.subr.mxu0 0.0
    %4608 = vmatpush1.msra.mxu0 %v4585
    %4609 = vmatprep.subr.mxu0 0.0
    %4610 = vmatpush1.msra.mxu0 %v4586
    %4611 = vmatprep.subr.mxu0 0.0
    %4612 = vmatpush1.msra.mxu0 %v4587
    %4613 = vmatprep.subr.mxu0 0.0
    %4614 = vmatpush1.msra.mxu0 %v4588
    %4615 = vmatprep.subr.mxu0 0.0
    %4616 = vmatpush1.msra.mxu0 %v4589
    %4617 = vmatprep.subr.mxu0 0.0
    %4618 = vmatpush1.msra.mxu0 0.0
    %4619 = vmatprep.subr.mxu0 0.0
    %4620 = vmatpush1.msra.mxu0 0.0
    %4621 = vmatprep.subr.mxu0 0.0
    %4622 = vmatpush1.msra.mxu0 0.0
    %4623 = vmatprep.subr.mxu0 0.0
    %4624 = vmatpush1.msra.mxu0 0.0
    %4625 = vmatprep.subr.mxu0 0.0
    %4626 = vmatpush1.msra.mxu0 0.0
    %4627 = vmatprep.subr.mxu0 0.0
    %4628 = vmatpush1.msra.mxu0 0.0
    %4629 = vmatprep.subr.mxu0 0.0
    %4630 = vmatpush1.msra.mxu0 0.0
    %4631 = vmatprep.subr.mxu0 0.0
    %4632 = vmatpush1.msra.mxu0 0.0
    %4633 = vmatprep.subr.mxu0 0.0
    %4634 = vmatpush1.msra.mxu0 0.0
    %4635 = vmatprep.subr.mxu0 0.0
    %4636 = vmatpush1.msra.mxu0 0.0
    %4637 = vmatprep.subr.mxu0 0.0
    %4638 = vmatpush1.msra.mxu0 0.0
    %4639 = vmatprep.subr.mxu0 0.0
    %4640 = vmatpush1.msra.mxu0 0.0
    %4641 = vmatprep.subr.mxu0 0.0
    %4642 = vmatpush1.msra.mxu0 0.0
    %4643 = vmatprep.subr.mxu0 0.0
    %4644 = vmatpush1.msra.mxu0 0.0
    %4645 = vmatprep.subr.mxu0 0.0
    %4646 = vmatpush1.msra.mxu0 0.0
    %4647 = vmatprep.subr.mxu0 0.0
    %4648 = vmatpush1.msra.mxu0 0.0
    %4649 = vmatprep.subr.mxu0 0.0
    %4650 = vmatpush1.msra.mxu0 0.0
    %4651 = vmatprep.subr.mxu0 0.0
    %4652 = vmatpush1.msra.mxu0 0.0
    %4653 = vmatprep.subr.mxu0 0.0
    %4654 = vmatpush1.msra.mxu0 0.0
    %4655 = vmatprep.subr.mxu0 0.0
    %4656 = vmatpush1.msra.mxu0 0.0
    %4657 = vmatprep.subr.mxu0 0.0
    %4658 = vmatpush1.msra.mxu0 0.0
    %4659 = vmatprep.subr.mxu0 0.0
    %4660 = vmatpush1.msra.mxu0 0.0
    %4661 = vmatprep.subr.mxu0 0.0
    %4662 = vmatpush1.msra.mxu0 0.0
    %4663 = vmatprep.subr.mxu0 0.0
    %4664 = vmatpush1.msra.mxu0 0.0
    %4665 = vmatprep.mubr.f32.mxu0 0.0
    %4666 = vmatmul.mubr.f32.gmra.mrb[0].mxu0 %v4596
    %v4667 = vpop.f32.mrb[0].mxu0
    %v4668 = vadd.f32 %v4594, %v4667
    %v4669 = vpop.f32.mrb[0].mxu0
    %4670 = vmatprep.mubr.f32.mxu0 0.0
    %4671 = vmatmul.mubr.f32.gmra.mrb[0].mxu0 %v4599
    %v4672 = vpop.f32.mrb[0].mxu0
    %v4673 = vadd.f32 %v4594, %v4672
    %v4674 = vpop.f32.mrb[0].mxu0
    %4675 = vdwg.mxu0
    %v4676 = vadd.f32 %v4488, %v4668
    %v4677 = vadd.f32 %v4489, %v4673
    %v4678 = vld [vmem:[#allocation5 + $0x5e0] sm:$0x1]
    %v4679 = vld [vmem:[#allocation5 + $0x5e8] sm:$0x1]
    %v4680 = vsel %vm59, %v4676, 0.0
    %4681 = vadd.xlane.f32.xlu0 %v4680
    %v4682 = vpop.xlane.xlu0 %4681
    %v4683 = vsel %vm59, %v4677, 0.0
    %4684 = vadd.xlane.f32.xlu0 %v4683
    %v4685 = vpop.xlane.xlu0 %4684
    %v4686 = vmul.f32 %v4682, %v642
    %v4687 = vmul.f32 %v4685, %v642
    %v4688 = vsub.f32 %v4676, %v4686
    %v4689 = vsub.f32 %v4677, %v4687
    %v4690 = vmul.f32 %v4688, %v4688
    %v4691 = vmul.f32 %v4689, %v4689
    %v4692 = vsel %vm59, %v4690, 0.0
    %4693 = vadd.xlane.f32.xlu0 %v4692
    %v4694 = vpop.xlane.xlu0 %4693
    %v4695 = vsel %vm59, %v4691, 0.0
    %4696 = vadd.xlane.f32.xlu0 %v4695
    %v4697 = vpop.xlane.xlu0 %4696
    %v4698 = vmul.f32 %v4694, %v642
    %v4699 = vmul.f32 %v4697, %v642
    %v4700 = vadd.f32 %v4698, 1e-05
    %v4701 = vadd.f32 %v4699, 1e-05
    %v4702 = vrsqrt.pop %v4700
    %v4703 = vrsqrt.pop %v4701
    %v4704 = vmul.f32 %v4688, %v4702
    %v4705 = vmul.f32 %v4689, %v4703
    %v4706 = vlaneseq
    %v4707 = vshrl.u32 %v4706, 7
    %v4708 = vsub.s32 0, %v4707
    %v4709 = vrot.slane %v4678, %v4708
    %v4710 = vmul.f32 %v4704, %v4709
    %v4711 = vmul.f32 %v4705, %v4709
    %v4712 = vlaneseq
    %v4713 = vshrl.u32 %v4712, 7
    %v4714 = vsub.s32 0, %v4713
    %v4715 = vrot.slane %v4679, %v4714
    %v4716 = vadd.f32 %v4710, %v4715
    %v4717 = vadd.f32 %v4711, %v4715
    %v4718 = vld [vmem:[#allocation5 + $0x660] sm:$0x1]
    %v4719 = vld [vmem:[#allocation5 + $0x668] sm:$0x1]
    %v4720 = vsel %vm59, %v4716, 0.0
    %4721 = vadd.xlane.f32.xlu0 %v4720
    %v4722 = vpop.xlane.xlu0 %4721
    %v4723 = vsel %vm59, %v4717, 0.0
    %4724 = vadd.xlane.f32.xlu0 %v4723
    %v4725 = vpop.xlane.xlu0 %4724
    %v4726 = vmul.f32 %v4722, %v642
    %v4727 = vmul.f32 %v4725, %v642
    %v4728 = vsub.f32 %v4716, %v4726
    %v4729 = vsub.f32 %v4717, %v4727
    %v4730 = vmul.f32 %v4728, %v4728
    %v4731 = vmul.f32 %v4729, %v4729
    %v4732 = vsel %vm59, %v4730, 0.0
    %4733 = vadd.xlane.f32.xlu0 %v4732
    %v4734 = vpop.xlane.xlu0 %4733
    %v4735 = vsel %vm59, %v4731, 0.0
    %4736 = vadd.xlane.f32.xlu0 %v4735
    %v4737 = vpop.xlane.xlu0 %4736
    %v4738 = vmul.f32 %v4734, %v642
    %v4739 = vmul.f32 %v4737, %v642
    %v4740 = vadd.f32 %v4738, 1e-05
    %v4741 = vadd.f32 %v4739, 1e-05
    %v4742 = vrsqrt.pop %v4740
    %v4743 = vrsqrt.pop %v4741
    %v4744 = vmul.f32 %v4728, %v4742
    %v4745 = vmul.f32 %v4729, %v4743
    %v4746 = vlaneseq
    %v4747 = vshrl.u32 %v4746, 7
    %v4748 = vsub.s32 0, %v4747
    %v4749 = vrot.slane %v4718, %v4748
    %v4750 = vmul.f32 %v4744, %v4749
    %v4751 = vmul.f32 %v4745, %v4749
    %v4752 = vlaneseq
    %v4753 = vshrl.u32 %v4752, 7
    %v4754 = vsub.s32 0, %v4753
    %v4755 = vrot.slane %v4719, %v4754
    %v4756 = vadd.f32 %v4750, %v4755
    %v4757 = vadd.f32 %v4751, %v4755
    %v4759 = vrot.slane %v4756, 7
    %v4762 = vrot.slane %v4757, 6
    %vm4764 = vcmask 1040384
    %v4765 = vsel %vm4764, %v4759, %v4762
    %v4766 = vld [vmem:[#allocation5 + $0x670] sm:$0xff]
    %v4767 = vld [vmem:[#allocation5 + $0x678] sm:$0xff]
    %v4768 = vld [vmem:[#allocation5 + $0x680] sm:$0xff]
    %v4769 = vld [vmem:[#allocation5 + $0x688] sm:$0xff]
    %v4770 = vld [vmem:[#allocation5 + $0x690] sm:$0x1]
    %v4771 = vlaneseq
    %v4772 = vshrl.u32 %v4771, 7
    %v4773 = vsub.s32 0, %v4772
    %v4774 = vrot.slane %v4770, %v4773
    %v4776 = vsel %vm59, %v4765, 0
    %4778 = vmatprep.subr.mxu0 0.0
    %4779 = vmatpush1.msra.mxu0 %v4766
    %4780 = vmatprep.subr.mxu0 0.0
    %4781 = vmatpush1.msra.mxu0 %v4767
    %4782 = vmatprep.subr.mxu0 0.0
    %4783 = vmatpush1.msra.mxu0 %v4768
    %4784 = vmatprep.subr.mxu0 0.0
    %4785 = vmatpush1.msra.mxu0 %v4769
    %4786 = vmatprep.subr.mxu0 0.0
    %4787 = vmatpush1.msra.mxu0 0.0
    %4788 = vmatprep.subr.mxu0 0.0
    %4789 = vmatpush1.msra.mxu0 0.0
    %4790 = vmatprep.subr.mxu0 0.0
    %4791 = vmatpush1.msra.mxu0 0.0
    %4792 = vmatprep.subr.mxu0 0.0
    %4793 = vmatpush1.msra.mxu0 0.0
    %4794 = vmatprep.subr.mxu0 0.0
    %4795 = vmatpush1.msra.mxu0 0.0
    %4796 = vmatprep.subr.mxu0 0.0
    %4797 = vmatpush1.msra.mxu0 0.0
    %4798 = vmatprep.subr.mxu0 0.0
    %4799 = vmatpush1.msra.mxu0 0.0
    %4800 = vmatprep.subr.mxu0 0.0
    %4801 = vmatpush1.msra.mxu0 0.0
    %4802 = vmatprep.subr.mxu0 0.0
    %4803 = vmatpush1.msra.mxu0 0.0
    %4804 = vmatprep.subr.mxu0 0.0
    %4805 = vmatpush1.msra.mxu0 0.0
    %4806 = vmatprep.subr.mxu0 0.0
    %4807 = vmatpush1.msra.mxu0 0.0
    %4808 = vmatprep.subr.mxu0 0.0
    %4809 = vmatpush1.msra.mxu0 0.0
    %4810 = vmatprep.subr.mxu0 0.0
    %4811 = vmatpush1.msra.mxu0 0.0
    %4812 = vmatprep.subr.mxu0 0.0
    %4813 = vmatpush1.msra.mxu0 0.0
    %4814 = vmatprep.subr.mxu0 0.0
    %4815 = vmatpush1.msra.mxu0 0.0
    %4816 = vmatprep.subr.mxu0 0.0
    %4817 = vmatpush1.msra.mxu0 0.0
    %4818 = vmatprep.subr.mxu0 0.0
    %4819 = vmatpush1.msra.mxu0 0.0
    %4820 = vmatprep.subr.mxu0 0.0
    %4821 = vmatpush1.msra.mxu0 0.0
    %4822 = vmatprep.subr.mxu0 0.0
    %4823 = vmatpush1.msra.mxu0 0.0
    %4824 = vmatprep.subr.mxu0 0.0
    %4825 = vmatpush1.msra.mxu0 0.0
    %4826 = vmatprep.subr.mxu0 0.0
    %4827 = vmatpush1.msra.mxu0 0.0
    %4828 = vmatprep.subr.mxu0 0.0
    %4829 = vmatpush1.msra.mxu0 0.0
    %4830 = vmatprep.subr.mxu0 0.0
    %4831 = vmatpush1.msra.mxu0 0.0
    %4832 = vmatprep.subr.mxu0 0.0
    %4833 = vmatpush1.msra.mxu0 0.0
    %4834 = vmatprep.subr.mxu0 0.0
    %4835 = vmatpush1.msra.mxu0 0.0
    %4836 = vmatprep.subr.mxu0 0.0
    %4837 = vmatpush1.msra.mxu0 0.0
    %4838 = vmatprep.subr.mxu0 0.0
    %4839 = vmatpush1.msra.mxu0 0.0
    %4840 = vmatprep.subr.mxu0 0.0
    %4841 = vmatpush1.msra.mxu0 0.0
    %4842 = vmatprep.mubr.f32.mxu0 0.0
    %4843 = vmatmul.mubr.f32.gmra.mrb[0].mxu0 %v4776
    %v4844 = vpop.f32.mrb[0].mxu0
    %v4845 = vadd.f32 %v4774, %v4844
    %v4846 = vpop.f32.mrb[0].mxu0
    %4847 = vdwg.mxu0
    %v4848 = vsub.f32 0.0, %v4845
    %v4849 = vmul.f32 %v4848, 1.442695
    %v4850 = vpow.pop %v4849
    %v4851 = vadd.f32 %v4850, 1.0
    %v4852 = vrcp.pop %v4851
    %v4853 = vmul.f32 1.0, %v4852
    %vm4854 = vcmask 58368
    %4855 = vst.msk [vmem:[#allocation7] sm:$0x3] %vm4854, %v4853
    // Predicated region
    $region18: #{transformer_model_forward.1} parent=1 // pred_check
      _
    $region19: #{transformer_model_forward.1} parent=1 // pred_check_branch
      %4857 = sbr.rel (0) target = $region21
    $region20: #{transformer_model_forward.1} parent=1 // pred_region
      %s4859 = ssub.s32 32, 32
      %4860 = vsyncadd [#allocation4], %s4859
      %s4862 = sshll.u32 [#allocation7], 4
      %s4863 = int_to_ptr.vmem [resolvable:$true] %s4862
      %4865 = dma.vmem_to_hbm [thread:$0]  %s4863, 32, %s2, [#allocation4]
    $region21: #{transformer_model_forward.1} parent=1 // pred_fallthru
      _
    // Predicated region
    $region22: #{transformer_model_forward.1} parent=1 // pred_check
      _
    $region23: #{transformer_model_forward.1} parent=1 // pred_check_branch
      %4867 = sbr.rel (0) target = $region25
    $region24: #{transformer_model_forward.1} parent=1 // pred_region
      %4868 = dma.done [#allocation4], 32
    $region25: #{transformer_model_forward.1} parent=1 // pred_fallthru
      _
    %4869 = vsyncpa [#allocation3], 1
    %4870 = vsyncpa [#allocation6], 1
    %4871 = vsyncpa [#allocation4], 1

</llo_original>
